<compile_context>
chip_gen: v7x
topology: tpu7x:2x2x1
jax: 0.10.0
libtpu: 0.0.40
codegen_flags: <defaults>
</compile_context>

<pallas_src>
import math
from functools import partial

import numpy as np
import jax
import jax.numpy as jnp
from jax.experimental import pallas as pl
from jax.experimental.pallas import tpu as pltpu

F32 = jnp.float32
BF16 = jnp.bfloat16

_VMEM_LIMIT = 48 * 1024 * 1024  # <= v7x 64 MiB/TC with headroom


def _cparams(grid_rank):
    return pltpu.CompilerParams(
        dimension_semantics=("parallel",) * grid_rank,
        vmem_limit_bytes=_VMEM_LIMIT,
    )


# ----------------------------------------------------------------------------
# tile pickers
# ----------------------------------------------------------------------------
def _pick_tm_conv(M, min_rows, cap=512):
    """Largest multiple-of-16 divisor of M in [min_rows, cap]; None -> single block."""
    best = None
    t = 16
    while t <= min(M, cap):
        if M % t == 0 and t >= min_rows:
            best = t
        t += 16
    return best


def _pick_tm_mm(M, cap=1024):
    """Largest multiple-of-16 divisor of M (<= cap), else the full M."""
    best = None
    t = 16
    while t <= min(M, cap):
        if M % t == 0:
            best = t
        t += 16
    return best if best is not None else M


# ----------------------------------------------------------------------------
# Pallas kernels
# ----------------------------------------------------------------------------
def _conv3x3_kernel(*refs, Wr):
    """Fused 3x3 conv + folded BN + ReLU over a flattened, width-padded image.

    refs = (x_view_0[, x_view_1], w9, scale, bias, out)
      x views : (1, bs, C) bf16 tiles of the flat padded image (view 1 = next tile)
      w9      : (9, C, Co) bf16   scale/bias: (1, Co) f32   out: (1, tm, Co) bf16
    """
    nv = len(refs) - 4
    x_refs = refs[:nv]
    w_ref, s_ref, b_ref, o_ref = refs[nv:]
    tm = o_ref.shape[1]
    co = o_ref.shape[-1]

    if nv == 1:
        v = x_refs[0][0]                                   # (L, C)
    else:
        v = jnp.concatenate([x_refs[0][0], x_refs[1][0]], axis=0)  # (2*tm, C)

    acc = jnp.zeros((tm, co), jnp.float32)
    for dy in range(3):
        for dx in range(3):
            off = dy * Wr + dx
            acc = acc + jnp.dot(v[off:off + tm], w_ref[dy * 3 + dx],
                                preferred_element_type=jnp.float32)
    z = acc * s_ref[...] + b_ref[...]
    o_ref[0] = jnp.maximum(z, 0.0).astype(o_ref.dtype)


def _conv1x1_cat_kernel(x1_ref, x2_ref, w1_ref, w2_ref, s_ref, b_ref, o_ref):
    # 1x1 conv over the (virtual) channel concat [x1, x2]; BN + ReLU fused.
    acc = jnp.dot(x1_ref[0], w1_ref[...], preferred_element_type=jnp.float32)
    acc = acc + jnp.dot(x2_ref[0], w2_ref[...], preferred_element_type=jnp.float32)
    z = acc * s_ref[...] + b_ref[...]
    o_ref[0] = jnp.maximum(z, 0.0).astype(o_ref.dtype)


def _maxpool_kernel(x_ref, o_ref):
    # x block: (1, 2*tho, Wo, 2*C) with column pairs packed into the lane dim.
    v = x_ref[0]
    r2, wo, c2 = v.shape
    v = v.reshape(r2 // 2, 2, wo, c2)       # split leading (row) dim only
    v = jnp.max(v, axis=1)                  # row pooling
    c = c2 // 2
    o_ref[0] = jnp.maximum(v[..., :c], v[..., c:])   # column pooling


def _leftmm_kernel(a_ref, x_ref, o_ref):
    # o[g] = A @ x[g]  (separable bilinear interpolation step)
    o_ref[0] = jnp.dot(a_ref[...], x_ref[0],
                       preferred_element_type=jnp.float32).astype(o_ref.dtype)


def _head_kernel(x_ref, w_ref, b_ref, pm_ref, pb_ref, o_ref):
    # Fused output head: sigmoid(x @ w + b) * post_mul + post_add  (lane-padded Co)
    z = jnp.dot(x_ref[0], w_ref[...], preferred_element_type=jnp.float32)
    z = z + b_ref[...]
    s = 1.0 / (1.0 + jnp.exp(-z))
    o_ref[0] = s * pm_ref[...] + pb_ref[...]


# ----------------------------------------------------------------------------
# wrappers
# ----------------------------------------------------------------------------
def conv3x3_bn_relu(x, p):
    """x: (N, H, W, C) bf16 NHWC -> (N, H, W, Co) bf16."""
    N, H, W, C = x.shape
    Co = p["w"].shape[-1]
    Hp, Wr = H + 2, W + 2
    M = H * Wr                                   # flat output length (junk cols kept)
    tm = _pick_tm_conv(M, 2 * Wr + 2)
    if tm is None:                               # tiny map: single full block
        tm, nT, nv = M, 1, 1
        L = Hp * Wr + 8
        bs = L
    else:
        nT, nv = M // tm, 2
        L = (nT + 1) * tm
        bs = tm

    xp = jnp.pad(x, ((0, 0), (1, 1), (1, 1), (0, 0)))          # (N, Hp, Wr, C)
    xf = jnp.pad(xp.reshape(N, Hp * Wr, C),
                 ((0, 0), (0, L - Hp * Wr), (0, 0)))            # (N, L, C)

    in_specs = [pl.BlockSpec((1, bs, C), (lambda n, i, d=d: (n, i + d, 0)))
                for d in range(nv)]
    in_specs += [
        pl.BlockSpec((9, C, Co), lambda n, i: (0, 0, 0)),
        pl.BlockSpec((1, Co), lambda n, i: (0, 0)),
        pl.BlockSpec((1, Co), lambda n, i: (0, 0)),
    ]
    out = pl.pallas_call(
        partial(_conv3x3_kernel, Wr=Wr),
        out_shape=jax.ShapeDtypeStruct((N, M, Co), BF16),
        grid=(N, nT),
        in_specs=in_specs,
        out_specs=pl.BlockSpec((1, tm, Co), lambda n, i: (n, i, 0)),
        compiler_params=_cparams(2),
    )(*([xf] * nv), p["w"], p["scale"], p["bias"])
    return out.reshape(N, H, Wr, Co)[:, :, :W, :]


def conv1x1_cat_bn_relu(x1, x2, p):
    """1x1 conv + BN + ReLU over channel-concat [x1, x2] without materializing it."""
    N, H, W, C1 = x1.shape
    C2 = x2.shape[-1]
    Co = p["w1"].shape[-1]
    M = H * W
    tm = _pick_tm_mm(M)
    nT = M // tm
    out = pl.pallas_call(
        _conv1x1_cat_kernel,
        out_shape=jax.ShapeDtypeStruct((N, M, Co), BF16),
        grid=(N, nT),
        in_specs=[
            pl.BlockSpec((1, tm, C1), lambda n, i: (n, i, 0)),
            pl.BlockSpec((1, tm, C2), lambda n, i: (n, i, 0)),
            pl.BlockSpec((C1, Co), lambda n, i: (0, 0)),
            pl.BlockSpec((C2, Co), lambda n, i: (0, 0)),
            pl.BlockSpec((1, Co), lambda n, i: (0, 0)),
            pl.BlockSpec((1, Co), lambda n, i: (0, 0)),
        ],
        out_specs=pl.BlockSpec((1, tm, Co), lambda n, i: (n, i, 0)),
        compiler_params=_cparams(2),
    )(x1.reshape(N, M, C1), x2.reshape(N, M, C2),
      p["w1"], p["w2"], p["scale"], p["bias"])
    return out.reshape(N, H, W, Co)


def maxpool2x2(x):
    """2x2 stride-2 max pool; input read exactly once."""
    N, H, W, C = x.shape
    Ho, Wo = H // 2, W // 2
    xr = x.reshape(N, H, Wo, 2 * C)              # free reshape: packs column pairs
    tho = Ho if Ho <= 8 else 8
    assert Ho % tho == 0
    return pl.pallas_call(
        _maxpool_kernel,
        out_shape=jax.ShapeDtypeStruct((N, Ho, Wo, C), x.dtype),
        grid=(N, Ho // tho),
        in_specs=[pl.BlockSpec((1, 2 * tho, Wo, 2 * C), lambda n, i: (n, i, 0, 0))],
        out_specs=pl.BlockSpec((1, tho, Wo, C), lambda n, i: (n, i, 0, 0)),
        compiler_params=_cparams(2),
    )(xr)


def _interp_matrix(s):
    """1-D bilinear align_corners=True matrix mapping length s -> 2s."""
    out = 2 * s
    A = np.zeros((out, s), dtype=np.float32)
    if s == 1:
        A[:, 0] = 1.0
        return A
    scale = (s - 1) / (out - 1)
    for j in range(out):
        src = j * scale
        i0 = min(int(np.floor(src)), s - 1)
        t = src - i0
        A[j, i0] += 1.0 - t
        if t > 0.0:
            A[j, min(i0 + 1, s - 1)] += t
    return A


def _leftmm(a, x):
    """out[g] = a @ x[g].  a: (Mo, Mi) resident, x: (G, Mi, K)."""
    G, Mi, K = x.shape
    Mo = a.shape[0]
    return pl.pallas_call(
        _leftmm_kernel,
        out_shape=jax.ShapeDtypeStruct((G, Mo, K), BF16),
        grid=(G,),
        in_specs=[
            pl.BlockSpec((Mo, Mi), lambda g: (0, 0)),
            pl.BlockSpec((1, Mi, K), lambda g: (g, 0, 0)),
        ],
        out_specs=pl.BlockSpec((1, Mo, K), lambda g: (g, 0, 0)),
        compiler_params=_cparams(1),
    )(a, x)


def upsample2x_bilinear(x):
    """align_corners=True bilinear 2x upsample as two separable matmuls."""
    N, H, W, C = x.shape
    Ar = jnp.asarray(_interp_matrix(H), dtype=BF16)     # (2H, H)
    Ac = jnp.asarray(_interp_matrix(W), dtype=BF16)     # (2W, W)
    y = _leftmm(Ar, x.reshape(N, H, W * C))             # rows   -> (N, 2H, W*C)
    y = _leftmm(Ac, y.reshape(N * 2 * H, W, C))         # cols   -> (N*2H, 2W, C)
    return y.reshape(N, 2 * H, 2 * W, C)


def head_call(x, hp):
    """Fused output head; output channels are lane-padded to 128 and sliced."""
    N, H, W, C = x.shape
    M = H * W
    Cp = hp["w"].shape[1]
    tm = _pick_tm_mm(M)
    nT = M // tm
    out = pl.pallas_call(
        _head_kernel,
        out_shape=jax.ShapeDtypeStruct((N, M, Cp), F32),
        grid=(N, nT),
        in_specs=[
            pl.BlockSpec((1, tm, C), lambda n, i: (n, i, 0)),
            pl.BlockSpec((C, Cp), lambda n, i: (0, 0)),
            pl.BlockSpec((1, Cp), lambda n, i: (0, 0)),
            pl.BlockSpec((1, Cp), lambda n, i: (0, 0)),
            pl.BlockSpec((1, Cp), lambda n, i: (0, 0)),
        ],
        out_specs=pl.BlockSpec((1, tm, Cp), lambda n, i: (n, i, 0)),
        compiler_params=_cparams(2),
    )(x.reshape(N, M, C), hp["w"], hp["b"], hp["pm"], hp["pb"])
    return out[:, :, :6].reshape(N, H, W, 6)


# ----------------------------------------------------------------------------
# parameters
# ----------------------------------------------------------------------------
class ParamGen:
    def __init__(self, seed=0):
        self.key = jax.random.PRNGKey(seed)

    def next(self):
        self.key, sub = jax.random.split(self.key)
        return sub


_BN_EPS = 1e-5


def conv3x3_params(pg, cin, cout):
    std = math.sqrt(2.0 / (cout * 9))            # kaiming normal, fan_out, relu
    w = (jax.random.normal(pg.next(), (9, cin, cout), dtype=F32) * std).astype(BF16)
    scale = jnp.full((1, cout), 1.0 / math.sqrt(1.0 + _BN_EPS), dtype=F32)
    bias = jnp.zeros((1, cout), dtype=F32)
    return {"w": w, "scale": scale, "bias": bias}


def conv1x1_cat_params(pg, c1, c2, cout):
    std = math.sqrt(2.0 / cout)
    w = jax.random.normal(pg.next(), (c1 + c2, cout), dtype=F32) * std
    scale = jnp.full((1, cout), 1.0 / math.sqrt(1.0 + _BN_EPS), dtype=F32)
    bias = jnp.zeros((1, cout), dtype=F32)
    return {"w1": w[:c1].astype(BF16), "w2": w[c1:].astype(BF16),
            "scale": scale, "bias": bias}


def head_params(pg):
    ws = []
    for co in (1, 4, 1):                         # score(1), loc(4), angle(1)
        std = math.sqrt(2.0 / co)
        ws.append(jax.random.normal(pg.next(), (32, co), dtype=F32) * std)
    w = jnp.concatenate(ws, axis=1)              # (32, 6)
    w = jnp.pad(w, ((0, 0), (0, 122))).astype(BF16)   # lane-dense (32, 128)
    b = jnp.zeros((1, 128), dtype=F32)
    pm = jnp.zeros((1, 128), F32).at[0, :6].set(
        jnp.array([1.0, 512.0, 512.0, 512.0, 512.0, math.pi], dtype=F32))
    pb = jnp.zeros((1, 128), F32).at[0, 5].set(-math.pi / 2.0)
    return {"w": w, "b": b, "pm": pm, "pb": pb}


CFG = [64, 64, "M", 128, 128, "M", 256, 256, 256, "M",
       512, 512, 512, "M", 512, 512, 512, "M"]


def build_params(seed=0):
    pg = ParamGen(seed)
    params = {}
    vgg = []
    cin = 3
    for v in CFG:
        if v == "M":
            vgg.append("M")
        else:
            vgg.append(conv3x3_params(pg, cin, v))
            cin = v
    params["vgg"] = vgg
    params["merge"] = [
        conv1x1_cat_params(pg, 512, 512, 128),   # conv1 (1024 -> 128, 1x1)
        conv3x3_params(pg, 128, 128),            # conv2
        conv1x1_cat_params(pg, 128, 256, 64),    # conv3 (384 -> 64, 1x1)
        conv3x3_params(pg, 64, 64),              # conv4
        conv1x1_cat_params(pg, 64, 128, 32),     # conv5 (192 -> 32, 1x1)
        conv3x3_params(pg, 32, 32),              # conv6
        conv3x3_params(pg, 32, 32),              # conv7
    ]
    params["head"] = head_params(pg)
    return params


# ----------------------------------------------------------------------------
# full EAST forward
# ----------------------------------------------------------------------------
def east_forward(params, x_nchw):
    x = jnp.transpose(x_nchw, (0, 2, 3, 1)).astype(BF16)   # NCHW -> NHWC bf16

    # extractor: VGG16-bn features, collect post-maxpool maps, keep out[1:]
    feats = []
    for m in params["vgg"]:
        if isinstance(m, str) and m == "M":
            x = maxpool2x2(x)
            feats.append(x)
        else:
            x = conv3x3_bn_relu(x, m)
    f = feats[1:]     # strides 4 (128ch), 8 (256ch), 16 (512ch), 32 (512ch)

    # merge
    mp = params["merge"]
    y = f[3]
    for i in range(3):
        y = upsample2x_bilinear(y)
        y = conv1x1_cat_bn_relu(y, f[2 - i], mp[2 * i])   # concat folded in-kernel
        y = conv3x3_bn_relu(y, mp[2 * i + 1])
    y = conv3x3_bn_relu(y, mp[6])

    # output heads
    out = head_call(y, params["head"])            # (N, H/4, W/4, 6) f32
    out = jnp.transpose(out, (0, 3, 1, 2))        # back to NCHW
    score = out[:, 0:1]
    geo = out[:, 1:6]
    return score, geo


if __name__ == "__main__":
    key = jax.random.PRNGKey(0)
    x = jax.random.normal(key, (2, 3, 32, 32), dtype=F32)   # NCHW like PyTorch

    params = build_params(seed=0)
    score, geo = east_forward(params, x)
    jax.block_until_ready((score, geo))

    assert score.shape == (2, 1, 8, 8), score.shape
    assert geo.shape == (2, 5, 8, 8), geo.shape
    assert bool(jnp.all(jnp.isfinite(score))) and bool(jnp.all(jnp.isfinite(geo)))
    print("KERNEL_OK")
</pallas_src>

<mosaic_0001>
module attributes {stable_mosaic.version = 11 : i64} {
  func.func @_conv3x3_kernel(%arg0: i32, %arg1: i32, %arg2: memref<1x272x3xbf16, #tpu.memory_space<vmem>>, %arg3: memref<1x272x3xbf16, #tpu.memory_space<vmem>>, %arg4: memref<9x3x64xbf16, #tpu.memory_space<vmem>>, %arg5: memref<1x64xf32, #tpu.memory_space<vmem>>, %arg6: memref<1x64xf32, #tpu.memory_space<vmem>>, %arg7: memref<1x272x64xbf16, #tpu.memory_space<vmem>>) attributes {dimension_semantics = [#tpu.dimension_semantics<parallel>, #tpu.dimension_semantics<parallel>], iteration_bounds = array<i64: 2, 4>, scalar_prefetch = 0 : i64, scratch_operands = 0 : i64, tpu.core_type = #tpu.core_type<tc>, window_params = [{transform_indices = @transform_0, window_bounds = array<i64: 1, 272, 3>}, {transform_indices = @transform_1, window_bounds = array<i64: 1, 272, 3>}, {pipeline_mode = #tpu.pipeline_mode<synchronous>, transform_indices = @transform_2, window_bounds = array<i64: 9, 3, 64>}, {pipeline_mode = #tpu.pipeline_mode<synchronous>, transform_indices = @transform_3, window_bounds = array<i64: 1, 64>}, {pipeline_mode = #tpu.pipeline_mode<synchronous>, transform_indices = @transform_4, window_bounds = array<i64: 1, 64>}, {transform_indices = @transform_5, window_bounds = array<i64: 1, 272, 64>}]} {
    %c0 = arith.constant 0 : index
    %c0_0 = arith.constant 0 : index
    %c0_1 = arith.constant 0 : index
    %0 = vector.load %arg2[%c0, %c0_0, %c0_1] : memref<1x272x3xbf16, #tpu.memory_space<vmem>>, vector<1x272x3xbf16>
    %1 = vector.shape_cast %0 : vector<1x272x3xbf16> to vector<272x3xbf16>
    %c0_2 = arith.constant 0 : index
    %c0_3 = arith.constant 0 : index
    %c0_4 = arith.constant 0 : index
    %2 = vector.load %arg3[%c0_2, %c0_3, %c0_4] : memref<1x272x3xbf16, #tpu.memory_space<vmem>>, vector<1x272x3xbf16>
    %3 = vector.shape_cast %2 : vector<1x272x3xbf16> to vector<272x3xbf16>
    %4 = tpu.concatenate %1, %3 in 0 : vector<272x3xbf16>, vector<272x3xbf16> -> vector<544x3xbf16>
    %cst = arith.constant 0.000000e+00 : f32
    %5 = vector.broadcast %cst : f32 to vector<272x64xf32>
    %6 = vector.extract_strided_slice %4 {offsets = [0, 0], sizes = [272, 3], strides = [1, 1]} : vector<544x3xbf16> to vector<272x3xbf16>
    %c0_5 = arith.constant 0 : index
    %c0_6 = arith.constant 0 : index
    %c0_7 = arith.constant 0 : index
    %7 = vector.load %arg4[%c0_5, %c0_6, %c0_7] : memref<9x3x64xbf16, #tpu.memory_space<vmem>>, vector<1x3x64xbf16>
    %8 = vector.shape_cast %7 : vector<1x3x64xbf16> to vector<3x64xbf16>
    %cst_8 = arith.constant dense<0.000000e+00> : vector<272x64xf32>
    %9 = tpu.matmul %6, %8, %cst_8 {dimension_numbers = #tpu.dot_dimension_numbers<[1], [0], [0], [1], [0, 0, 1, 1], [], []>} : vector<272x3xbf16>, vector<3x64xbf16>, vector<272x64xf32> -> vector<272x64xf32>
    %10 = arith.addf %5, %9 : vector<272x64xf32>
    %11 = vector.extract_strided_slice %4 {offsets = [1, 0], sizes = [272, 3], strides = [1, 1]} : vector<544x3xbf16> to vector<272x3xbf16>
    %c1 = arith.constant 1 : index
    %c0_9 = arith.constant 0 : index
    %c0_10 = arith.constant 0 : index
    %12 = vector.load %arg4[%c1, %c0_9, %c0_10] : memref<9x3x64xbf16, #tpu.memory_space<vmem>>, vector<1x3x64xbf16>
    %13 = vector.shape_cast %12 : vector<1x3x64xbf16> to vector<3x64xbf16>
    %cst_11 = arith.constant dense<0.000000e+00> : vector<272x64xf32>
    %14 = tpu.matmul %11, %13, %cst_11 {dimension_numbers = #tpu.dot_dimension_numbers<[1], [0], [0], [1], [0, 0, 1, 1], [], []>} : vector<272x3xbf16>, vector<3x64xbf16>, vector<272x64xf32> -> vector<272x64xf32>
    %15 = arith.addf %10, %14 : vector<272x64xf32>
    %16 = vector.extract_strided_slice %4 {offsets = [2, 0], sizes = [272, 3], strides = [1, 1]} : vector<544x3xbf16> to vector<272x3xbf16>
    %c2 = arith.constant 2 : index
    %c0_12 = arith.constant 0 : index
    %c0_13 = arith.constant 0 : index
    %17 = vector.load %arg4[%c2, %c0_12, %c0_13] : memref<9x3x64xbf16, #tpu.memory_space<vmem>>, vector<1x3x64xbf16>
    %18 = vector.shape_cast %17 : vector<1x3x64xbf16> to vector<3x64xbf16>
    %cst_14 = arith.constant dense<0.000000e+00> : vector<272x64xf32>
    %19 = tpu.matmul %16, %18, %cst_14 {dimension_numbers = #tpu.dot_dimension_numbers<[1], [0], [0], [1], [0, 0, 1, 1], [], []>} : vector<272x3xbf16>, vector<3x64xbf16>, vector<272x64xf32> -> vector<272x64xf32>
    %20 = arith.addf %15, %19 : vector<272x64xf32>
    %21 = vector.extract_strided_slice %4 {offsets = [34, 0], sizes = [272, 3], strides = [1, 1]} : vector<544x3xbf16> to vector<272x3xbf16>
    %c3 = arith.constant 3 : index
    %c0_15 = arith.constant 0 : index
    %c0_16 = arith.constant 0 : index
    %22 = vector.load %arg4[%c3, %c0_15, %c0_16] : memref<9x3x64xbf16, #tpu.memory_space<vmem>>, vector<1x3x64xbf16>
    %23 = vector.shape_cast %22 : vector<1x3x64xbf16> to vector<3x64xbf16>
    %cst_17 = arith.constant dense<0.000000e+00> : vector<272x64xf32>
    %24 = tpu.matmul %21, %23, %cst_17 {dimension_numbers = #tpu.dot_dimension_numbers<[1], [0], [0], [1], [0, 0, 1, 1], [], []>} : vector<272x3xbf16>, vector<3x64xbf16>, vector<272x64xf32> -> vector<272x64xf32>
    %25 = arith.addf %20, %24 : vector<272x64xf32>
    %26 = vector.extract_strided_slice %4 {offsets = [35, 0], sizes = [272, 3], strides = [1, 1]} : vector<544x3xbf16> to vector<272x3xbf16>
    %c4 = arith.constant 4 : index
    %c0_18 = arith.constant 0 : index
    %c0_19 = arith.constant 0 : index
    %27 = vector.load %arg4[%c4, %c0_18, %c0_19] : memref<9x3x64xbf16, #tpu.memory_space<vmem>>, vector<1x3x64xbf16>
    %28 = vector.shape_cast %27 : vector<1x3x64xbf16> to vector<3x64xbf16>
    %cst_20 = arith.constant dense<0.000000e+00> : vector<272x64xf32>
    %29 = tpu.matmul %26, %28, %cst_20 {dimension_numbers = #tpu.dot_dimension_numbers<[1], [0], [0], [1], [0, 0, 1, 1], [], []>} : vector<272x3xbf16>, vector<3x64xbf16>, vector<272x64xf32> -> vector<272x64xf32>
    %30 = arith.addf %25, %29 : vector<272x64xf32>
    %31 = vector.extract_strided_slice %4 {offsets = [36, 0], sizes = [272, 3], strides = [1, 1]} : vector<544x3xbf16> to vector<272x3xbf16>
    %c5 = arith.constant 5 : index
    %c0_21 = arith.constant 0 : index
    %c0_22 = arith.constant 0 : index
    %32 = vector.load %arg4[%c5, %c0_21, %c0_22] : memref<9x3x64xbf16, #tpu.memory_space<vmem>>, vector<1x3x64xbf16>
    %33 = vector.shape_cast %32 : vector<1x3x64xbf16> to vector<3x64xbf16>
    %cst_23 = arith.constant dense<0.000000e+00> : vector<272x64xf32>
    %34 = tpu.matmul %31, %33, %cst_23 {dimension_numbers = #tpu.dot_dimension_numbers<[1], [0], [0], [1], [0, 0, 1, 1], [], []>} : vector<272x3xbf16>, vector<3x64xbf16>, vector<272x64xf32> -> vector<272x64xf32>
    %35 = arith.addf %30, %34 : vector<272x64xf32>
    %36 = vector.extract_strided_slice %4 {offsets = [68, 0], sizes = [272, 3], strides = [1, 1]} : vector<544x3xbf16> to vector<272x3xbf16>
    %c6 = arith.constant 6 : index
    %c0_24 = arith.constant 0 : index
    %c0_25 = arith.constant 0 : index
    %37 = vector.load %arg4[%c6, %c0_24, %c0_25] : memref<9x3x64xbf16, #tpu.memory_space<vmem>>, vector<1x3x64xbf16>
    %38 = vector.shape_cast %37 : vector<1x3x64xbf16> to vector<3x64xbf16>
    %cst_26 = arith.constant dense<0.000000e+00> : vector<272x64xf32>
    %39 = tpu.matmul %36, %38, %cst_26 {dimension_numbers = #tpu.dot_dimension_numbers<[1], [0], [0], [1], [0, 0, 1, 1], [], []>} : vector<272x3xbf16>, vector<3x64xbf16>, vector<272x64xf32> -> vector<272x64xf32>
    %40 = arith.addf %35, %39 : vector<272x64xf32>
    %41 = vector.extract_strided_slice %4 {offsets = [69, 0], sizes = [272, 3], strides = [1, 1]} : vector<544x3xbf16> to vector<272x3xbf16>
    %c7 = arith.constant 7 : index
    %c0_27 = arith.constant 0 : index
    %c0_28 = arith.constant 0 : index
    %42 = vector.load %arg4[%c7, %c0_27, %c0_28] : memref<9x3x64xbf16, #tpu.memory_space<vmem>>, vector<1x3x64xbf16>
    %43 = vector.shape_cast %42 : vector<1x3x64xbf16> to vector<3x64xbf16>
    %cst_29 = arith.constant dense<0.000000e+00> : vector<272x64xf32>
    %44 = tpu.matmul %41, %43, %cst_29 {dimension_numbers = #tpu.dot_dimension_numbers<[1], [0], [0], [1], [0, 0, 1, 1], [], []>} : vector<272x3xbf16>, vector<3x64xbf16>, vector<272x64xf32> -> vector<272x64xf32>
    %45 = arith.addf %40, %44 : vector<272x64xf32>
    %46 = vector.extract_strided_slice %4 {offsets = [70, 0], sizes = [272, 3], strides = [1, 1]} : vector<544x3xbf16> to vector<272x3xbf16>
    %c8 = arith.constant 8 : index
    %c0_30 = arith.constant 0 : index
    %c0_31 = arith.constant 0 : index
    %47 = vector.load %arg4[%c8, %c0_30, %c0_31] : memref<9x3x64xbf16, #tpu.memory_space<vmem>>, vector<1x3x64xbf16>
    %48 = vector.shape_cast %47 : vector<1x3x64xbf16> to vector<3x64xbf16>
    %cst_32 = arith.constant dense<0.000000e+00> : vector<272x64xf32>
    %49 = tpu.matmul %46, %48, %cst_32 {dimension_numbers = #tpu.dot_dimension_numbers<[1], [0], [0], [1], [0, 0, 1, 1], [], []>} : vector<272x3xbf16>, vector<3x64xbf16>, vector<272x64xf32> -> vector<272x64xf32>
    %50 = arith.addf %45, %49 : vector<272x64xf32>
    %c0_33 = arith.constant 0 : index
    %c0_34 = arith.constant 0 : index
    %51 = vector.load %arg5[%c0_33, %c0_34] : memref<1x64xf32, #tpu.memory_space<vmem>>, vector<1x64xf32>
    %52 = vector.broadcast %51 : vector<1x64xf32> to vector<272x64xf32>
    %53 = arith.mulf %50, %52 : vector<272x64xf32>
    %c0_35 = arith.constant 0 : index
    %c0_36 = arith.constant 0 : index
    %54 = vector.load %arg6[%c0_35, %c0_36] : memref<1x64xf32, #tpu.memory_space<vmem>>, vector<1x64xf32>
    %55 = vector.broadcast %54 : vector<1x64xf32> to vector<272x64xf32>
    %56 = arith.addf %53, %55 : vector<272x64xf32>
    %cst_37 = arith.constant 0.000000e+00 : f32
    %57 = vector.broadcast %cst_37 : f32 to vector<272x64xf32>
    %58 = arith.maximumf %56, %57 : vector<272x64xf32>
    %59 = arith.truncf %58 : vector<272x64xf32> to vector<272x64xbf16>
    %c0_38 = arith.constant 0 : index
    %c0_39 = arith.constant 0 : index
    %c0_40 = arith.constant 0 : index
    %60 = vector.load %arg7[%c0_38, %c0_39, %c0_40] : memref<1x272x64xbf16, #tpu.memory_space<vmem>>, vector<1x272x64xbf16>
    %61 = vector.shape_cast %60 : vector<1x272x64xbf16> to vector<272x64xbf16>
    %62 = vector.shape_cast %59 : vector<272x64xbf16> to vector<1x272x64xbf16>
    tpu.vector_store %arg7[%c0_38, %c0_39, %c0_40], %62 {strides = array<i32>} : memref<1x272x64xbf16, #tpu.memory_space<vmem>>, vector<1x272x64xbf16>,
    return
  }
  func.func @transform_0(%arg0: i32, %arg1: i32) -> (i32, i32, i32) {
    %c0_i32 = arith.constant 0 : i32
    %0 = arith.addi %arg1, %c0_i32 : i32
    %c0_i32_0 = arith.constant 0 : i32
    %c0_i32_1 = arith.constant 0 : i32
    return %arg0, %0, %c0_i32_0 : i32, i32, i32
  }
  func.func @transform_1(%arg0: i32, %arg1: i32) -> (i32, i32, i32) {
    %c1_i32 = arith.constant 1 : i32
    %0 = arith.addi %arg1, %c1_i32 : i32
    %c0_i32 = arith.constant 0 : i32
    %c0_i32_0 = arith.constant 0 : i32
    return %arg0, %0, %c0_i32 : i32, i32, i32
  }
  func.func @transform_2(%arg0: i32, %arg1: i32) -> (i32, i32, i32) {
    %c0_i32 = arith.constant 0 : i32
    %c0_i32_0 = arith.constant 0 : i32
    %c0_i32_1 = arith.constant 0 : i32
    %c0_i32_2 = arith.constant 0 : i32
    return %c0_i32, %c0_i32_0, %c0_i32_1 : i32, i32, i32
  }
  func.func @transform_3(%arg0: i32, %arg1: i32) -> (i32, i32) {
    %c0_i32 = arith.constant 0 : i32
    %c0_i32_0 = arith.constant 0 : i32
    %c0_i32_1 = arith.constant 0 : i32
    return %c0_i32, %c0_i32_0 : i32, i32
  }
  func.func @transform_4(%arg0: i32, %arg1: i32) -> (i32, i32) {
    %c0_i32 = arith.constant 0 : i32
    %c0_i32_0 = arith.constant 0 : i32
    %c0_i32_1 = arith.constant 0 : i32
    return %c0_i32, %c0_i32_0 : i32, i32
  }
  func.func @transform_5(%arg0: i32, %arg1: i32) -> (i32, i32, i32) {
    %c0_i32 = arith.constant 0 : i32
    %c0_i32_0 = arith.constant 0 : i32
    return %arg0, %arg1, %c0_i32 : i32, i32, i32
  }
}

</mosaic_0001>

<llo_original>
// kernel: tpu_custom_call.1
$region0: #{tpu_custom_call.1}
  #allocation0 [shape = 'u32[]', space=smem, size = 0x4, offset = 0x4, fixed_abs, tag = 'smem constant byte address 0x4 - core index']
  #allocation1 [shape = 'u32[144,128]{1,0:T(1,128)}', space=vmem, size = 0x12000, scoped, tag = 'internal scratch']
  %s0 = inlined_call_operand.vmem [shape: bf16[2,1360,3], index: 0, kind: input, shape index: {}]
  %s1 = inlined_call_operand.vmem [shape: bf16[2,1360,3], index: 1, kind: input, shape index: {}]
  %s2 = inlined_call_operand.vmem [shape: bf16[9,3,64], index: 2, kind: input, shape index: {}]
  %s3 = inlined_call_operand.vmem [shape: f32[1,64], index: 3, kind: input, shape index: {}]
  %s4 = inlined_call_operand.vmem [shape: f32[1,64], index: 4, kind: input, shape index: {}]
  %s5 = inlined_call_operand.vmem [shape: bf16[2,1088,64], index: 5, kind: output, shape index: {}]
  %s6 = sld [smem:[#allocation0]]
  $region53: #{tpu_custom_call.1} parent=0
    _
  %s8 = ssub.s32 1, %s6
  %s9 = scalar_select 0, %s8, %s6
  loop: start=0, step=1, limit=10
  $region2: #{tpu_custom_call.1} parent=0 // loop_pre_header
    _
  $region3: #{tpu_custom_call.1} parent=0 // loop_header
    %s11 = sphi 0, %s15
    %p12 = scmp.ge.s32.totalorder %s11, 10
    %s18 = sphi 0, %s30
    %s19 = sphi 0, %s26
    %s20 = sphi 0, %s18
    %s21 = sphi 0, %s19
    %s22 = sphi 0, %s20
    %s23 = sphi 0, %s21
    %s35 = sphi 0, %s37
    %s38 = sphi 0, %s35
    %s39 = sphi 0, %s38
    %s55 = sphi 0, %s39
    %s65 = sphi 0, %s67
    %s68 = sphi 0, %s65
    %s69 = sphi 0, %s68
    %s85 = sphi 0, %s69
    %s89 = sphi 0, %s89
    %s91 = sphi 0, %s89
    %s92 = sphi 0, %s91
    %s106 = sphi 0, %s92
    %s110 = sphi 0, %s110
    %s112 = sphi 0, %s110
    %s113 = sphi 0, %s112
    %s127 = sphi 0, %s113
    %s131 = sphi 0, %s131
    %s133 = sphi 0, %s131
    %s134 = sphi 0, %s133
    %s148 = sphi 0, %s134
    %s156 = sphi 0, %s158
    %s159 = sphi 0, %s156
    %s160 = sphi 0, %s159
    %s176 = sphi 0, %s160
  $region4: #{tpu_custom_call.1} parent=0 // loop_header_branch
    %14 = sbr.rel (%p12) target = $region8
  $region5: #{tpu_custom_call.1} parent=0 // loop_body
    %s16 = ssub.s32 %s11, 1
    %s17 = ssub.s32 %s11, 2
    %s24 = sadd.s32 1, %s19
    %p25 = scmp.ge.s32.totalorder %s24, 4
    %s26 = scalar_select %p25, 0, %s24
    %s27 = sadd.s32 1, %s18
    %s28 = scalar_select %p25, %s27, %s18
    %p29 = scmp.ge.s32.totalorder %s28, 2
    %s30 = scalar_select %p29, 0, %s28
    %s31 = ssub.s32 %s18, %s30
    %s32 = ssub.s32 %s19, %s26
    %s33 = sor.u32 %s31, %s32
    %p34 = scmp.eq.s32.totalorder %s33, 0
    %s36 = sadd.s32 %s35, 1
    %s37 = scalar_select %p34, %s35, %s36
    %p40 = pneg %p34
    %p41 = scmp.eq.s32.totalorder %s11, 7
    %p42 = por %p40, %p41
    %p43 = scmp.ne.s32.totalorder %s35, %s38
    %p44 = scmp.eq.s32.totalorder %s11, 0
    %p45 = por %p43, %p44
    %p46 = scmp.ne.s32.totalorder %s35, %s38
    %p47 = scmp.eq.s32.totalorder %s16, 7
    %p48 = por %p46, %p47
    %p49 = scmp.ne.s32.totalorder %s38, %s39
    %p50 = scmp.eq.s32.totalorder %s16, 0
    %p51 = por %p49, %p50
    %p52 = scmp.ne.s32.totalorder %s38, %s39
    %p53 = scmp.eq.s32.totalorder %s17, 7
    %p54 = por %p52, %p53
    %p56 = scmp.ne.s32.totalorder %s39, %s55
    %p57 = scmp.eq.s32.totalorder %s17, 0
    %p58 = por %p56, %p57
    %s59 = sadd.s32 %s19, 1
    %s60 = sadd.s32 %s26, 1
    %s61 = ssub.s32 %s18, %s30
    %s62 = ssub.s32 %s59, %s60
    %s63 = sor.u32 %s61, %s62
    %p64 = scmp.eq.s32.totalorder %s63, 0
    %s66 = sadd.s32 %s65, 1
    %s67 = scalar_select %p64, %s65, %s66
    %p70 = pneg %p64
    %p71 = scmp.eq.s32.totalorder %s11, 7
    %p72 = por %p70, %p71
    %p73 = scmp.ne.s32.totalorder %s65, %s68
    %p74 = scmp.eq.s32.totalorder %s11, 0
    %p75 = por %p73, %p74
    %p76 = scmp.ne.s32.totalorder %s65, %s68
    %p77 = scmp.eq.s32.totalorder %s16, 7
    %p78 = por %p76, %p77
    %p79 = scmp.ne.s32.totalorder %s68, %s69
    %p80 = scmp.eq.s32.totalorder %s16, 0
    %p81 = por %p79, %p80
    %p82 = scmp.ne.s32.totalorder %s68, %s69
    %p83 = scmp.eq.s32.totalorder %s17, 7
    %p84 = por %p82, %p83
    %p86 = scmp.ne.s32.totalorder %s69, %s85
    %p87 = scmp.eq.s32.totalorder %s17, 0
    %p88 = por %p86, %p87
    %s90 = sadd.s32 %s89, 1
    %p93 = scmp.eq.s32.totalorder %s11, 7
    %p94 = scmp.ne.s32.totalorder %s89, %s91
    %p95 = scmp.eq.s32.totalorder %s11, 0
    %p96 = por %p94, %p95
    %p97 = scmp.ne.s32.totalorder %s89, %s91
    %p98 = scmp.eq.s32.totalorder %s16, 7
    %p99 = por %p97, %p98
    %p100 = scmp.ne.s32.totalorder %s91, %s92
    %p101 = scmp.eq.s32.totalorder %s16, 0
    %p102 = por %p100, %p101
    %p103 = scmp.ne.s32.totalorder %s91, %s92
    %p104 = scmp.eq.s32.totalorder %s17, 7
    %p105 = por %p103, %p104
    %p107 = scmp.ne.s32.totalorder %s92, %s106
    %p108 = scmp.eq.s32.totalorder %s17, 0
    %p109 = por %p107, %p108
    %s111 = sadd.s32 %s110, 1
    %p114 = scmp.eq.s32.totalorder %s11, 7
    %p115 = scmp.ne.s32.totalorder %s110, %s112
    %p116 = scmp.eq.s32.totalorder %s11, 0
    %p117 = por %p115, %p116
    %p118 = scmp.ne.s32.totalorder %s110, %s112
    %p119 = scmp.eq.s32.totalorder %s16, 7
    %p120 = por %p118, %p119
    %p121 = scmp.ne.s32.totalorder %s112, %s113
    %p122 = scmp.eq.s32.totalorder %s16, 0
    %p123 = por %p121, %p122
    %p124 = scmp.ne.s32.totalorder %s112, %s113
    %p125 = scmp.eq.s32.totalorder %s17, 7
    %p126 = por %p124, %p125
    %p128 = scmp.ne.s32.totalorder %s113, %s127
    %p129 = scmp.eq.s32.totalorder %s17, 0
    %p130 = por %p128, %p129
    %s132 = sadd.s32 %s131, 1
    %p135 = scmp.eq.s32.totalorder %s11, 7
    %p136 = scmp.ne.s32.totalorder %s131, %s133
    %p137 = scmp.eq.s32.totalorder %s11, 0
    %p138 = por %p136, %p137
    %p139 = scmp.ne.s32.totalorder %s131, %s133
    %p140 = scmp.eq.s32.totalorder %s16, 7
    %p141 = por %p139, %p140
    %p142 = scmp.ne.s32.totalorder %s133, %s134
    %p143 = scmp.eq.s32.totalorder %s16, 0
    %p144 = por %p142, %p143
    %p145 = scmp.ne.s32.totalorder %s133, %s134
    %p146 = scmp.eq.s32.totalorder %s17, 7
    %p147 = por %p145, %p146
    %p149 = scmp.ne.s32.totalorder %s134, %s148
    %p150 = scmp.eq.s32.totalorder %s17, 0
    %p151 = por %p149, %p150
    %s152 = ssub.s32 %s18, %s30
    %s153 = ssub.s32 %s19, %s26
    %s154 = sor.u32 %s152, %s153
    %p155 = scmp.eq.s32.totalorder %s154, 0
    %s157 = sadd.s32 %s156, 1
    %s158 = scalar_select %p155, %s156, %s157
    %p161 = pneg %p155
    %p162 = scmp.eq.s32.totalorder %s11, 7
    %p163 = por %p161, %p162
    %p164 = scmp.ne.s32.totalorder %s156, %s159
    %p165 = scmp.eq.s32.totalorder %s11, 0
    %p166 = por %p164, %p165
    %p167 = scmp.ne.s32.totalorder %s156, %s159
    %p168 = scmp.eq.s32.totalorder %s16, 7
    %p169 = por %p167, %p168
    %p170 = scmp.ne.s32.totalorder %s159, %s160
    %p171 = scmp.eq.s32.totalorder %s16, 0
    %p172 = por %p170, %p171
    %p173 = scmp.ne.s32.totalorder %s159, %s160
    %p174 = scmp.eq.s32.totalorder %s17, 7
    %p175 = por %p173, %p174
    %p177 = scmp.ne.s32.totalorder %s160, %s176
    %p178 = scmp.eq.s32.totalorder %s17, 0
    %p179 = por %p177, %p178
    %p180 = scmp.le.s32.totalorder 1, %s11
    %p181 = scmp.lt.s32.totalorder %s11, 9
    %p182 = pnand %p180, %p181
    %p183 = pneg %p182
    // Predicated region
    $region9: #{tpu_custom_call.1} parent=5 // pred_check
      _
    $region10: #{tpu_custom_call.1} parent=5 // pred_check_branch
      %185 = sbr.rel (%p182) target = $region12
    $region11: #{tpu_custom_call.1} parent=5 // pred_region
      %s186 = ssub.s32 %s11, 1
      // Predicated region
      $region13: #{tpu_custom_call.1} parent=11 // pred_check
        %p187 = pneg %p102
      $region14: #{tpu_custom_call.1} parent=11 // pred_check_branch
        %189 = sbr.rel (%p187) target = $region16
      $region15: #{tpu_custom_call.1} parent=11 // pred_region
        _
      $region16: #{tpu_custom_call.1} parent=11 // pred_fallthru
        _
      // Predicated region
      $region17: #{tpu_custom_call.1} parent=11 // pred_check
        %p190 = pneg %p123
      $region18: #{tpu_custom_call.1} parent=11 // pred_check_branch
        %192 = sbr.rel (%p190) target = $region20
      $region19: #{tpu_custom_call.1} parent=11 // pred_region
        _
      $region20: #{tpu_custom_call.1} parent=11 // pred_fallthru
        _
      // Predicated region
      $region21: #{tpu_custom_call.1} parent=11 // pred_check
        %p193 = pneg %p144
      $region22: #{tpu_custom_call.1} parent=11 // pred_check_branch
        %195 = sbr.rel (%p193) target = $region24
      $region23: #{tpu_custom_call.1} parent=11 // pred_region
        _
      $region24: #{tpu_custom_call.1} parent=11 // pred_fallthru
        _
    $region12: #{tpu_custom_call.1} parent=5 // pred_fallthru
      _
    %p196 = scmp.lt.s32.totalorder %s11, 8
    // Predicated region
    $region25: #{tpu_custom_call.1} parent=5 // pred_check
      %p197 = pneg %p196
    $region26: #{tpu_custom_call.1} parent=5 // pred_check_branch
      %199 = sbr.rel (%p197) target = $region28
    $region27: #{tpu_custom_call.1} parent=5 // pred_region
      // Predicated region
      $region29: #{tpu_custom_call.1} parent=27 // pred_check
        %p200 = pneg %p45
      $region30: #{tpu_custom_call.1} parent=27 // pred_check_branch
        %202 = sbr.rel (%p200) target = $region32
      $region31: #{tpu_custom_call.1} parent=27 // pred_region
        %s203 = smul.u32 34, %s19
        %p204 = scmp.lt.s32.totalorder %s18, 1
        %s205 = scalar_select %p204, %s18, 1
        %p206 = scmp.lt.s32.totalorder %s203, 169
        %s207 = scalar_select %p206, %s203, 169
        %s208 = smul.addr %s205, 170
        %s209 = sadd.s32 %s207, %s208
        %s210 = smul.addr %s209, 4
        %s211 = scalar_lea.vmem %s0, %s210
        %s212 = smul.u32 34, %s19
      $region32: #{tpu_custom_call.1} parent=27 // pred_fallthru
        _
      // Predicated region
      $region33: #{tpu_custom_call.1} parent=27 // pred_check
        %p213 = pneg %p75
      $region34: #{tpu_custom_call.1} parent=27 // pred_check_branch
        %215 = sbr.rel (%p213) target = $region36
      $region35: #{tpu_custom_call.1} parent=27 // pred_region
        %s216 = sadd.s32 %s19, 1
        %s217 = smul.u32 34, %s216
        %p218 = scmp.lt.s32.totalorder %s18, 1
        %s219 = scalar_select %p218, %s18, 1
        %p220 = scmp.lt.s32.totalorder %s217, 169
        %s221 = scalar_select %p220, %s217, 169
        %s222 = smul.addr %s219, 170
        %s223 = sadd.s32 %s221, %s222
        %s224 = smul.addr %s223, 4
        %s225 = scalar_lea.vmem %s1, %s224
        %s226 = sadd.s32 %s19, 1
        %s227 = smul.u32 34, %s226
      $region36: #{tpu_custom_call.1} parent=27 // pred_fallthru
        _
    $region28: #{tpu_custom_call.1} parent=5 // pred_fallthru
      _
    %p228 = scmp.le.s32.totalorder 1, %s11
    %p229 = scmp.lt.s32.totalorder %s11, 9
    %p230 = pnand %p228, %p229
    %p231 = pneg %p230
    // Predicated region
    $region37: #{tpu_custom_call.1} parent=5 // pred_check
      _
    $region38: #{tpu_custom_call.1} parent=5 // pred_check_branch
      %233 = sbr.rel (%p230) target = $region40
    $region39: #{tpu_custom_call.1} parent=5 // pred_region
      %s234 = ssub.s32 %s11, 1
      %s235 = smul.u32 34, %s21
      %p236 = scmp.lt.s32.totalorder %s20, 1
      %s237 = scalar_select %p236, %s20, 1
      %p238 = scmp.lt.s32.totalorder %s235, 169
      %s239 = scalar_select %p238, %s235, 169
      %s240 = smul.addr %s237, 170
      %s241 = sadd.s32 %s239, %s240
      %s242 = smul.addr %s241, 4
      %s243 = scalar_lea.vmem %s0, %s242
      %p244 = pneg %p51
      %p245 = pneg %p48
      %s246 = sadd.s32 %s21, 1
      %s247 = smul.u32 34, %s246
      %p248 = scmp.lt.s32.totalorder %s20, 1
      %s249 = scalar_select %p248, %s20, 1
      %p250 = scmp.lt.s32.totalorder %s247, 169
      %s251 = scalar_select %p250, %s247, 169
      %s252 = smul.addr %s249, 170
      %s253 = sadd.s32 %s251, %s252
      %s254 = smul.addr %s253, 4
      %s255 = scalar_lea.vmem %s1, %s254
      %p256 = pneg %p81
      %p257 = pneg %p78
      %p258 = pneg %p102
      %p259 = pneg %p99
      %p260 = pneg %p123
      %p261 = pneg %p120
      %p262 = pneg %p144
      %p263 = pneg %p141
      %p264 = pneg %p172
      %p265 = pneg %p169
      %s266 = smul.u32 34, %s21
      %p267 = scmp.lt.s32.totalorder %s20, 1
      %s268 = scalar_select %p267, %s20, 1
      %p269 = scmp.lt.s32.totalorder %s266, 135
      %s270 = scalar_select %p269, %s266, 135
      %s271 = smul.addr %s268, 136
      %s272 = sadd.s32 %s270, %s271
      %s273 = smul.addr %s272, 4
      %s274 = scalar_lea.vmem %s5, %s273
      %s275 = smul.u32 34, %s21
      %p276 = scmp.lt.s32.totalorder %s20, 1
      %s277 = scalar_select %p276, %s20, 1
      %p278 = scmp.lt.s32.totalorder %s275, 169
      %s279 = scalar_select %p278, %s275, 169
      %s280 = smul.addr %s277, 170
      %s281 = sadd.s32 %s279, %s280
      %s282 = smul.addr %s281, 4
      %s283 = scalar_lea.vmem %s0, %s282
      %s284 = smul.u32 34, %s21
      %s285 = sadd.s32 %s21, 1
      %s286 = smul.u32 34, %s285
      %p287 = scmp.lt.s32.totalorder %s20, 1
      %s288 = scalar_select %p287, %s20, 1
      %p289 = scmp.lt.s32.totalorder %s286, 169
      %s290 = scalar_select %p289, %s286, 169
      %s291 = smul.addr %s288, 170
      %s292 = sadd.s32 %s290, %s291
      %s293 = smul.addr %s292, 4
      %s294 = scalar_lea.vmem %s1, %s293
      %s295 = sadd.s32 %s21, 1
      %s296 = smul.u32 34, %s295
      %s297 = smul.u32 34, %s21
      %p298 = scmp.lt.s32.totalorder %s20, 1
      %s299 = scalar_select %p298, %s20, 1
      %p300 = scmp.lt.s32.totalorder %s297, 135
      %s301 = scalar_select %p300, %s297, 135
      %s302 = smul.addr %s299, 136
      %s303 = sadd.s32 %s301, %s302
      %s304 = smul.addr %s303, 4
      %s305 = scalar_lea.vmem %s5, %s304
      %s306 = smul.u32 34, %s21
      %v308 = vld [vmem:[%s283] sm:$0xf]
      %v309 = vld [vmem:[%s283 + $0x4] sm:$0xf]
      %v310 = vld [vmem:[%s283 + $0x8] sm:$0xf]
      %v311 = vld [vmem:[%s283 + $0xc] sm:$0xf]
      %v312 = vld [vmem:[%s283 + $0x10] sm:$0xf]
      %v313 = vld [vmem:[%s283 + $0x14] sm:$0xf]
      %v314 = vld [vmem:[%s283 + $0x18] sm:$0xf]
      %v315 = vld [vmem:[%s283 + $0x1c] sm:$0xf]
      %v316 = vld [vmem:[%s283 + $0x20] sm:$0xf]
      %v317 = vld [vmem:[%s283 + $0x24] sm:$0xf]
      %v318 = vld [vmem:[%s283 + $0x28] sm:$0xf]
      %v319 = vld [vmem:[%s283 + $0x2c] sm:$0xf]
      %v320 = vld [vmem:[%s283 + $0x30] sm:$0xf]
      %v321 = vld [vmem:[%s283 + $0x34] sm:$0xf]
      %v322 = vld [vmem:[%s283 + $0x38] sm:$0xf]
      %v323 = vld [vmem:[%s283 + $0x3c] sm:$0xf]
      %v324 = vld [vmem:[%s283 + $0x40] sm:$0xf]
      %v325 = vld [vmem:[%s283 + $0x44] sm:$0xf]
      %v326 = vld [vmem:[%s283 + $0x48] sm:$0xf]
      %v327 = vld [vmem:[%s283 + $0x4c] sm:$0xf]
      %v328 = vld [vmem:[%s283 + $0x50] sm:$0xf]
      %v329 = vld [vmem:[%s283 + $0x54] sm:$0xf]
      %v330 = vld [vmem:[%s283 + $0x58] sm:$0xf]
      %v331 = vld [vmem:[%s283 + $0x5c] sm:$0xf]
      %v332 = vld [vmem:[%s283 + $0x60] sm:$0xf]
      %v333 = vld [vmem:[%s283 + $0x64] sm:$0xf]
      %v334 = vld [vmem:[%s283 + $0x68] sm:$0xf]
      %v335 = vld [vmem:[%s283 + $0x6c] sm:$0xf]
      %v336 = vld [vmem:[%s283 + $0x70] sm:$0xf]
      %v337 = vld [vmem:[%s283 + $0x74] sm:$0xf]
      %v338 = vld [vmem:[%s283 + $0x78] sm:$0xf]
      %v339 = vld [vmem:[%s283 + $0x7c] sm:$0xf]
      %v340 = vld [vmem:[%s283 + $0x80] sm:$0xf]
      %v341 = vld [vmem:[%s283 + $0x84] sm:$0xf]
      %v342 = vld [vmem:[%s294] sm:$0xf]
      %v343 = vld [vmem:[%s294 + $0x4] sm:$0xf]
      %v344 = vld [vmem:[%s294 + $0x8] sm:$0xf]
      %v345 = vld [vmem:[%s294 + $0xc] sm:$0xf]
      %v346 = vld [vmem:[%s294 + $0x10] sm:$0xf]
      %v347 = vld [vmem:[%s294 + $0x14] sm:$0xf]
      %v348 = vld [vmem:[%s294 + $0x18] sm:$0xf]
      %v349 = vld [vmem:[%s294 + $0x1c] sm:$0xf]
      %v350 = vld [vmem:[%s294 + $0x20] sm:$0xf]
      %v351 = vld [vmem:[%s294 + $0x24] sm:$0xf]
      %v386 = vunpack.c.l.b16 %v308
      %v387 = vunpack.c.l.b16 %v309
      %v388 = vunpack.c.l.b16 %v310
      %v389 = vunpack.c.l.b16 %v311
      %v390 = vunpack.c.l.b16 %v312
      %v391 = vunpack.c.l.b16 %v313
      %v392 = vunpack.c.l.b16 %v314
      %v393 = vunpack.c.l.b16 %v315
      %v394 = vunpack.c.l.b16 %v316
      %v395 = vunpack.c.l.b16 %v317
      %v396 = vunpack.c.l.b16 %v318
      %v397 = vunpack.c.l.b16 %v319
      %v398 = vunpack.c.l.b16 %v320
      %v399 = vunpack.c.l.b16 %v321
      %v400 = vunpack.c.l.b16 %v322
      %v401 = vunpack.c.l.b16 %v323
      %v402 = vunpack.c.l.b16 %v324
      %v403 = vunpack.c.l.b16 %v325
      %v404 = vunpack.c.l.b16 %v326
      %v405 = vunpack.c.l.b16 %v327
      %v406 = vunpack.c.l.b16 %v328
      %v407 = vunpack.c.l.b16 %v329
      %v408 = vunpack.c.l.b16 %v330
      %v409 = vunpack.c.l.b16 %v331
      %v410 = vunpack.c.l.b16 %v332
      %v411 = vunpack.c.l.b16 %v333
      %v412 = vunpack.c.l.b16 %v334
      %v413 = vunpack.c.l.b16 %v335
      %v414 = vunpack.c.l.b16 %v336
      %v415 = vunpack.c.l.b16 %v337
      %v416 = vunpack.c.l.b16 %v338
      %v417 = vunpack.c.l.b16 %v339
      %v418 = vunpack.c.l.b16 %v340
      %v419 = vunpack.c.l.b16 %v341
      %v420 = vpack.c.b16 %v387, %v386
      %v421 = vpack.c.b16 %v389, %v388
      %v422 = vpack.c.b16 %v391, %v390
      %v423 = vpack.c.b16 %v393, %v392
      %v424 = vpack.c.b16 %v395, %v394
      %v425 = vpack.c.b16 %v397, %v396
      %v426 = vpack.c.b16 %v399, %v398
      %v427 = vpack.c.b16 %v401, %v400
      %v428 = vpack.c.b16 %v403, %v402
      %v429 = vpack.c.b16 %v405, %v404
      %v430 = vpack.c.b16 %v407, %v406
      %v431 = vpack.c.b16 %v409, %v408
      %v432 = vpack.c.b16 %v411, %v410
      %v433 = vpack.c.b16 %v413, %v412
      %v434 = vpack.c.b16 %v415, %v414
      %v435 = vpack.c.b16 %v417, %v416
      %v436 = vpack.c.b16 %v419, %v418
      %v447 = vunpack.c.l.b16 %v342
      %v448 = vunpack.c.l.b16 %v343
      %v449 = vunpack.c.l.b16 %v344
      %v450 = vunpack.c.l.b16 %v345
      %v451 = vunpack.c.l.b16 %v346
      %v452 = vunpack.c.l.b16 %v347
      %v453 = vunpack.c.l.b16 %v348
      %v454 = vunpack.c.l.b16 %v349
      %v455 = vunpack.c.l.b16 %v350
      %v456 = vunpack.c.l.b16 %v351
      %v457 = vpack.c.b16 %v448, %v447
      %v458 = vpack.c.b16 %v450, %v449
      %v459 = vpack.c.b16 %v452, %v451
      %v460 = vpack.c.b16 %v454, %v453
      %v461 = vpack.c.b16 %v456, %v455
      %v462 = vld [vmem:[%s2] sm:$0x3]
      %s463 = scalar_lea.vmem %s2, 2
      %v464 = vld [vmem:[%s463] sm:$0x3]
      %vm465 = vsmask.f32 7424
      %v467 = vshrl.u32 %v420, 16
      %v469 = vshll.u32 %v420, 16
      %v471 = vrot.slane %v469, 1
      %v472 = vor.u32 %v467, %v471
      %v474 = vshll.u32 %v421, 16
      %v476 = vrot.slane %v474, 1
      %v477 = vsel %vm465, %v472, %v476
      %v478 = vshrl.u32 %v421, 16
      %v480 = vor.u32 %v478, %v476
      %v482 = vshll.u32 %v422, 16
      %v484 = vrot.slane %v482, 1
      %v485 = vsel %vm465, %v480, %v484
      %v486 = vshrl.u32 %v422, 16
      %v488 = vor.u32 %v486, %v484
      %v490 = vshll.u32 %v423, 16
      %v492 = vrot.slane %v490, 1
      %v493 = vsel %vm465, %v488, %v492
      %v494 = vshrl.u32 %v423, 16
      %v496 = vor.u32 %v494, %v492
      %v498 = vshll.u32 %v424, 16
      %v500 = vrot.slane %v498, 1
      %v501 = vsel %vm465, %v496, %v500
      %v502 = vshrl.u32 %v424, 16
      %v504 = vor.u32 %v502, %v500
      %v506 = vshll.u32 %v425, 16
      %v508 = vrot.slane %v506, 1
      %v509 = vsel %vm465, %v504, %v508
      %v510 = vshrl.u32 %v425, 16
      %v512 = vor.u32 %v510, %v508
      %v514 = vshll.u32 %v426, 16
      %v516 = vrot.slane %v514, 1
      %v517 = vsel %vm465, %v512, %v516
      %v518 = vshrl.u32 %v426, 16
      %v520 = vor.u32 %v518, %v516
      %v522 = vshll.u32 %v427, 16
      %v524 = vrot.slane %v522, 1
      %v525 = vsel %vm465, %v520, %v524
      %v526 = vshrl.u32 %v427, 16
      %v528 = vor.u32 %v526, %v524
      %v530 = vshll.u32 %v428, 16
      %v532 = vrot.slane %v530, 1
      %v533 = vsel %vm465, %v528, %v532
      %v534 = vshrl.u32 %v428, 16
      %v536 = vor.u32 %v534, %v532
      %v538 = vshll.u32 %v429, 16
      %v540 = vrot.slane %v538, 1
      %v541 = vsel %vm465, %v536, %v540
      %v542 = vshrl.u32 %v429, 16
      %v544 = vor.u32 %v542, %v540
      %v546 = vshll.u32 %v430, 16
      %v548 = vrot.slane %v546, 1
      %v549 = vsel %vm465, %v544, %v548
      %v550 = vshrl.u32 %v430, 16
      %v552 = vor.u32 %v550, %v548
      %v554 = vshll.u32 %v431, 16
      %v556 = vrot.slane %v554, 1
      %v557 = vsel %vm465, %v552, %v556
      %v558 = vshrl.u32 %v431, 16
      %v560 = vor.u32 %v558, %v556
      %v562 = vshll.u32 %v432, 16
      %v564 = vrot.slane %v562, 1
      %v565 = vsel %vm465, %v560, %v564
      %v566 = vshrl.u32 %v432, 16
      %v568 = vor.u32 %v566, %v564
      %v570 = vshll.u32 %v433, 16
      %v572 = vrot.slane %v570, 1
      %v573 = vsel %vm465, %v568, %v572
      %v574 = vshrl.u32 %v433, 16
      %v576 = vor.u32 %v574, %v572
      %v578 = vshll.u32 %v434, 16
      %v580 = vrot.slane %v578, 1
      %v581 = vsel %vm465, %v576, %v580
      %v582 = vshrl.u32 %v434, 16
      %v584 = vor.u32 %v582, %v580
      %v586 = vshll.u32 %v435, 16
      %v588 = vrot.slane %v586, 1
      %v589 = vsel %vm465, %v584, %v588
      %v590 = vshrl.u32 %v435, 16
      %v592 = vor.u32 %v590, %v588
      %v594 = vshll.u32 %v436, 16
      %v596 = vrot.slane %v594, 1
      %v597 = vsel %vm465, %v592, %v596
      %v598 = vshrl.u32 %v436, 16
      %v600 = vor.u32 %v598, %v596
      %v602 = vshll.u32 %v457, 16
      %v604 = vrot.slane %v602, 1
      %v605 = vsel %vm465, %v600, %v604
      %vm606 = vcmask 23552
      %v608 = vsel %vm606, %v477, 0
      %v611 = vsel %vm606, %v485, 0
      %v614 = vsel %vm606, %v493, 0
      %v617 = vsel %vm606, %v501, 0
      %v620 = vsel %vm606, %v509, 0
      %v623 = vsel %vm606, %v517, 0
      %v626 = vsel %vm606, %v525, 0
      %v629 = vsel %vm606, %v533, 0
      %v632 = vsel %vm606, %v541, 0
      %v635 = vsel %vm606, %v549, 0
      %v638 = vsel %vm606, %v557, 0
      %v641 = vsel %vm606, %v565, 0
      %v644 = vsel %vm606, %v573, 0
      %v647 = vsel %vm606, %v581, 0
      %v650 = vsel %vm606, %v589, 0
      %v653 = vsel %vm606, %v597, 0
      %v656 = vsel %vm606, %v605, 0
      %vm658 = vcmask 1040384
      %vm659 = vcmask 1041408
      %v660 = vsel %vm658, 4294967295, 65535
      %v661 = vsel %vm659, %v660, 0
      %v663 = vand.u32 %v464, %v661
      %665 = vmatprep.subr.bf16.mxu0 0
      %666 = vmatpush1.bf16.msra.mxu0 %v663
      %667 = vmatprep.subr.bf16.mxu0 0
      %668 = vmatpush1.bf16.msra.mxu0 0
      %669 = vmatprep.subr.bf16.mxu0 0
      %670 = vmatpush1.bf16.msra.mxu0 0
      %671 = vmatprep.subr.bf16.mxu0 0
      %672 = vmatpush1.bf16.msra.mxu0 0
      %673 = vmatprep.subr.bf16.mxu0 0
      %674 = vmatpush1.bf16.msra.mxu0 0
      %675 = vmatprep.subr.bf16.mxu0 0
      %676 = vmatpush1.bf16.msra.mxu0 0
      %677 = vmatprep.subr.bf16.mxu0 0
      %678 = vmatpush1.bf16.msra.mxu0 0
      %679 = vmatprep.subr.bf16.mxu0 0
      %680 = vmatpush1.bf16.msra.mxu0 0
      %681 = vmatprep.subr.bf16.mxu0 0
      %682 = vmatpush1.bf16.msra.mxu0 0
      %683 = vmatprep.subr.bf16.mxu0 0
      %684 = vmatpush1.bf16.msra.mxu0 0
      %685 = vmatprep.subr.bf16.mxu0 0
      %686 = vmatpush1.bf16.msra.mxu0 0
      %687 = vmatprep.subr.bf16.mxu0 0
      %688 = vmatpush1.bf16.msra.mxu0 0
      %689 = vmatprep.subr.bf16.mxu0 0
      %690 = vmatpush1.bf16.msra.mxu0 0
      %691 = vmatprep.subr.bf16.mxu0 0
      %692 = vmatpush1.bf16.msra.mxu0 0
      %693 = vmatprep.subr.bf16.mxu0 0
      %694 = vmatpush1.bf16.msra.mxu0 0
      %695 = vmatprep.subr.bf16.mxu0 0
      %696 = vmatpush1.bf16.msra.mxu0 0
      %697 = vmatprep.mubr.bf16.mxu0 0
      %698 = vmatmul.mubr.bf16.gmra.mrb[0].mxu0 %v608
      %v699 = vpop.f32.mrb[0].mxu0
      %v700 = vadd.f32 0.0, %v699
      %v701 = vpop.f32.mrb[0].mxu0
      %v702 = vpop.f32.mrb[0].mxu0
      %v703 = vadd.f32 0.0, %v702
      %v704 = vpop.f32.mrb[0].mxu0
      %705 = vmatprep.mubr.bf16.mxu0 0
      %706 = vmatmul.mubr.bf16.gmra.mrb[0].mxu0 %v611
      %v707 = vpop.f32.mrb[0].mxu0
      %v708 = vadd.f32 0.0, %v707
      %v709 = vpop.f32.mrb[0].mxu0
      %v710 = vpop.f32.mrb[0].mxu0
      %v711 = vadd.f32 0.0, %v710
      %v712 = vpop.f32.mrb[0].mxu0
      %713 = vmatprep.mubr.bf16.mxu0 0
      %714 = vmatmul.mubr.bf16.gmra.mrb[0].mxu0 %v614
      %v715 = vpop.f32.mrb[0].mxu0
      %v716 = vadd.f32 0.0, %v715
      %v717 = vpop.f32.mrb[0].mxu0
      %v718 = vpop.f32.mrb[0].mxu0
      %v719 = vadd.f32 0.0, %v718
      %v720 = vpop.f32.mrb[0].mxu0
      %721 = vmatprep.mubr.bf16.mxu0 0
      %722 = vmatmul.mubr.bf16.gmra.mrb[0].mxu0 %v617
      %v723 = vpop.f32.mrb[0].mxu0
      %v724 = vadd.f32 0.0, %v723
      %v725 = vpop.f32.mrb[0].mxu0
      %v726 = vpop.f32.mrb[0].mxu0
      %v727 = vadd.f32 0.0, %v726
      %v728 = vpop.f32.mrb[0].mxu0
      %729 = vmatprep.mubr.bf16.mxu0 0
      %730 = vmatmul.mubr.bf16.gmra.mrb[0].mxu0 %v620
      %v731 = vpop.f32.mrb[0].mxu0
      %v732 = vadd.f32 0.0, %v731
      %v733 = vpop.f32.mrb[0].mxu0
      %v734 = vpop.f32.mrb[0].mxu0
      %v735 = vadd.f32 0.0, %v734
      %v736 = vpop.f32.mrb[0].mxu0
      %737 = vmatprep.mubr.bf16.mxu0 0
      %738 = vmatmul.mubr.bf16.gmra.mrb[0].mxu0 %v623
      %v739 = vpop.f32.mrb[0].mxu0
      %v740 = vadd.f32 0.0, %v739
      %v741 = vpop.f32.mrb[0].mxu0
      %v742 = vpop.f32.mrb[0].mxu0
      %v743 = vadd.f32 0.0, %v742
      %v744 = vpop.f32.mrb[0].mxu0
      %745 = vmatprep.mubr.bf16.mxu0 0
      %746 = vmatmul.mubr.bf16.gmra.mrb[0].mxu0 %v626
      %v747 = vpop.f32.mrb[0].mxu0
      %v748 = vadd.f32 0.0, %v747
      %v749 = vpop.f32.mrb[0].mxu0
      %v750 = vpop.f32.mrb[0].mxu0
      %v751 = vadd.f32 0.0, %v750
      %v752 = vpop.f32.mrb[0].mxu0
      %753 = vmatprep.mubr.bf16.mxu0 0
      %754 = vmatmul.mubr.bf16.gmra.mrb[0].mxu0 %v629
      %v755 = vpop.f32.mrb[0].mxu0
      %v756 = vadd.f32 0.0, %v755
      %v757 = vpop.f32.mrb[0].mxu0
      %v758 = vpop.f32.mrb[0].mxu0
      %v759 = vadd.f32 0.0, %v758
      %v760 = vpop.f32.mrb[0].mxu0
      %761 = vmatprep.mubr.bf16.mxu0 0
      %762 = vmatmul.mubr.bf16.gmra.mrb[0].mxu0 %v632
      %v763 = vpop.f32.mrb[0].mxu0
      %v764 = vadd.f32 0.0, %v763
      %v765 = vpop.f32.mrb[0].mxu0
      %v766 = vpop.f32.mrb[0].mxu0
      %v767 = vadd.f32 0.0, %v766
      %v768 = vpop.f32.mrb[0].mxu0
      %769 = vmatprep.mubr.bf16.mxu0 0
      %770 = vmatmul.mubr.bf16.gmra.mrb[0].mxu0 %v635
      %v771 = vpop.f32.mrb[0].mxu0
      %v772 = vadd.f32 0.0, %v771
      %v773 = vpop.f32.mrb[0].mxu0
      %v774 = vpop.f32.mrb[0].mxu0
      %v775 = vadd.f32 0.0, %v774
      %v776 = vpop.f32.mrb[0].mxu0
      %777 = vmatprep.mubr.bf16.mxu0 0
      %778 = vmatmul.mubr.bf16.gmra.mrb[0].mxu0 %v638
      %v779 = vpop.f32.mrb[0].mxu0
      %v780 = vadd.f32 0.0, %v779
      %v781 = vpop.f32.mrb[0].mxu0
      %v782 = vpop.f32.mrb[0].mxu0
      %v783 = vadd.f32 0.0, %v782
      %v784 = vpop.f32.mrb[0].mxu0
      %785 = vmatprep.mubr.bf16.mxu0 0
      %786 = vmatmul.mubr.bf16.gmra.mrb[0].mxu0 %v641
      %v787 = vpop.f32.mrb[0].mxu0
      %v788 = vadd.f32 0.0, %v787
      %v789 = vpop.f32.mrb[0].mxu0
      %v790 = vpop.f32.mrb[0].mxu0
      %v791 = vadd.f32 0.0, %v790
      %v792 = vpop.f32.mrb[0].mxu0
      %793 = vmatprep.mubr.bf16.mxu0 0
      %794 = vmatmul.mubr.bf16.gmra.mrb[0].mxu0 %v644
      %v795 = vpop.f32.mrb[0].mxu0
      %v796 = vadd.f32 0.0, %v795
      %v797 = vpop.f32.mrb[0].mxu0
      %v798 = vpop.f32.mrb[0].mxu0
      %v799 = vadd.f32 0.0, %v798
      %v800 = vpop.f32.mrb[0].mxu0
      %801 = vmatprep.mubr.bf16.mxu0 0
      %802 = vmatmul.mubr.bf16.gmra.mrb[0].mxu0 %v647
      %v803 = vpop.f32.mrb[0].mxu0
      %v804 = vadd.f32 0.0, %v803
      %v805 = vpop.f32.mrb[0].mxu0
      %v806 = vpop.f32.mrb[0].mxu0
      %v807 = vadd.f32 0.0, %v806
      %v808 = vpop.f32.mrb[0].mxu0
      %809 = vmatprep.mubr.bf16.mxu0 0
      %810 = vmatmul.mubr.bf16.gmra.mrb[0].mxu0 %v650
      %v811 = vpop.f32.mrb[0].mxu0
      %v812 = vadd.f32 0.0, %v811
      %v813 = vpop.f32.mrb[0].mxu0
      %v814 = vpop.f32.mrb[0].mxu0
      %v815 = vadd.f32 0.0, %v814
      %v816 = vpop.f32.mrb[0].mxu0
      %817 = vmatprep.mubr.bf16.mxu0 0
      %818 = vmatmul.mubr.bf16.gmra.mrb[0].mxu0 %v653
      %v819 = vpop.f32.mrb[0].mxu0
      %v820 = vadd.f32 0.0, %v819
      %v821 = vpop.f32.mrb[0].mxu0
      %v822 = vpop.f32.mrb[0].mxu0
      %v823 = vadd.f32 0.0, %v822
      %v824 = vpop.f32.mrb[0].mxu0
      %825 = vmatprep.mubr.bf16.mxu0 0
      %826 = vmatmul.mubr.bf16.gmra.mrb[0].mxu0 %v656
      %v827 = vpop.f32.mrb[0].mxu0
      %v828 = vadd.f32 0.0, %v827
      %v829 = vpop.f32.mrb[0].mxu0
      %v830 = vpop.f32.mrb[0].mxu0
      %v831 = vadd.f32 0.0, %v830
      %v832 = vpop.f32.mrb[0].mxu0
      %833 = vdwg.mxu0
      %v834 = vsel %vm606, %v420, 0
      %v836 = vsel %vm606, %v421, 0
      %v838 = vsel %vm606, %v422, 0
      %v840 = vsel %vm606, %v423, 0
      %v842 = vsel %vm606, %v424, 0
      %v844 = vsel %vm606, %v425, 0
      %v846 = vsel %vm606, %v426, 0
      %v848 = vsel %vm606, %v427, 0
      %v850 = vsel %vm606, %v428, 0
      %v852 = vsel %vm606, %v429, 0
      %v854 = vsel %vm606, %v430, 0
      %v856 = vsel %vm606, %v431, 0
      %v858 = vsel %vm606, %v432, 0
      %v860 = vsel %vm606, %v433, 0
      %v862 = vsel %vm606, %v434, 0
      %v864 = vsel %vm606, %v435, 0
      %v866 = vsel %vm606, %v436, 0
      %v869 = vand.u32 %v462, %v661
      %871 = vmatprep.subr.bf16.mxu0 0
      %872 = vmatpush1.bf16.msra.mxu0 %v869
      %873 = vmatprep.subr.bf16.mxu0 0
      %874 = vmatpush1.bf16.msra.mxu0 0
      %875 = vmatprep.subr.bf16.mxu0 0
      %876 = vmatpush1.bf16.msra.mxu0 0
      %877 = vmatprep.subr.bf16.mxu0 0
      %878 = vmatpush1.bf16.msra.mxu0 0
      %879 = vmatprep.subr.bf16.mxu0 0
      %880 = vmatpush1.bf16.msra.mxu0 0
      %881 = vmatprep.subr.bf16.mxu0 0
      %882 = vmatpush1.bf16.msra.mxu0 0
      %883 = vmatprep.subr.bf16.mxu0 0
      %884 = vmatpush1.bf16.msra.mxu0 0
      %885 = vmatprep.subr.bf16.mxu0 0
      %886 = vmatpush1.bf16.msra.mxu0 0
      %887 = vmatprep.subr.bf16.mxu0 0
      %888 = vmatpush1.bf16.msra.mxu0 0
      %889 = vmatprep.subr.bf16.mxu0 0
      %890 = vmatpush1.bf16.msra.mxu0 0
      %891 = vmatprep.subr.bf16.mxu0 0
      %892 = vmatpush1.bf16.msra.mxu0 0
      %893 = vmatprep.subr.bf16.mxu0 0
      %894 = vmatpush1.bf16.msra.mxu0 0
      %895 = vmatprep.subr.bf16.mxu0 0
      %896 = vmatpush1.bf16.msra.mxu0 0
      %897 = vmatprep.subr.bf16.mxu0 0
      %898 = vmatpush1.bf16.msra.mxu0 0
      %899 = vmatprep.subr.bf16.mxu0 0
      %900 = vmatpush1.bf16.msra.mxu0 0
      %901 = vmatprep.subr.bf16.mxu0 0
      %902 = vmatpush1.bf16.msra.mxu0 0
      %903 = vmatprep.mubr.bf16.mxu0 0
      %904 = vmatmul.mubr.bf16.gmra.mrb[0].mxu0 %v834
      %v905 = vpop.f32.mrb[0].mxu0
      %v906 = vadd.f32 %v700, %v905
      %v907 = vpop.f32.mrb[0].mxu0
      %v908 = vpop.f32.mrb[0].mxu0
      %v909 = vadd.f32 %v703, %v908
      %v910 = vpop.f32.mrb[0].mxu0
      %911 = vmatprep.mubr.bf16.mxu0 0
      %912 = vmatmul.mubr.bf16.gmra.mrb[0].mxu0 %v836
      %v913 = vpop.f32.mrb[0].mxu0
      %v914 = vadd.f32 %v708, %v913
      %v915 = vpop.f32.mrb[0].mxu0
      %v916 = vpop.f32.mrb[0].mxu0
      %v917 = vadd.f32 %v711, %v916
      %v918 = vpop.f32.mrb[0].mxu0
      %919 = vmatprep.mubr.bf16.mxu0 0
      %920 = vmatmul.mubr.bf16.gmra.mrb[0].mxu0 %v838
      %v921 = vpop.f32.mrb[0].mxu0
      %v922 = vadd.f32 %v716, %v921
      %v923 = vpop.f32.mrb[0].mxu0
      %v924 = vpop.f32.mrb[0].mxu0
      %v925 = vadd.f32 %v719, %v924
      %v926 = vpop.f32.mrb[0].mxu0
      %927 = vmatprep.mubr.bf16.mxu0 0
      %928 = vmatmul.mubr.bf16.gmra.mrb[0].mxu0 %v840
      %v929 = vpop.f32.mrb[0].mxu0
      %v930 = vadd.f32 %v724, %v929
      %v931 = vpop.f32.mrb[0].mxu0
      %v932 = vpop.f32.mrb[0].mxu0
      %v933 = vadd.f32 %v727, %v932
      %v934 = vpop.f32.mrb[0].mxu0
      %935 = vmatprep.mubr.bf16.mxu0 0
      %936 = vmatmul.mubr.bf16.gmra.mrb[0].mxu0 %v842
      %v937 = vpop.f32.mrb[0].mxu0
      %v938 = vadd.f32 %v732, %v937
      %v939 = vpop.f32.mrb[0].mxu0
      %v940 = vpop.f32.mrb[0].mxu0
      %v941 = vadd.f32 %v735, %v940
      %v942 = vpop.f32.mrb[0].mxu0
      %943 = vmatprep.mubr.bf16.mxu0 0
      %944 = vmatmul.mubr.bf16.gmra.mrb[0].mxu0 %v844
      %v945 = vpop.f32.mrb[0].mxu0
      %v946 = vadd.f32 %v740, %v945
      %v947 = vpop.f32.mrb[0].mxu0
      %v948 = vpop.f32.mrb[0].mxu0
      %v949 = vadd.f32 %v743, %v948
      %v950 = vpop.f32.mrb[0].mxu0
      %951 = vmatprep.mubr.bf16.mxu0 0
      %952 = vmatmul.mubr.bf16.gmra.mrb[0].mxu0 %v846
      %v953 = vpop.f32.mrb[0].mxu0
      %v954 = vadd.f32 %v748, %v953
      %v955 = vpop.f32.mrb[0].mxu0
      %v956 = vpop.f32.mrb[0].mxu0
      %v957 = vadd.f32 %v751, %v956
      %v958 = vpop.f32.mrb[0].mxu0
      %959 = vmatprep.mubr.bf16.mxu0 0
      %960 = vmatmul.mubr.bf16.gmra.mrb[0].mxu0 %v848
      %v961 = vpop.f32.mrb[0].mxu0
      %v962 = vadd.f32 %v756, %v961
      %v963 = vpop.f32.mrb[0].mxu0
      %v964 = vpop.f32.mrb[0].mxu0
      %v965 = vadd.f32 %v759, %v964
      %v966 = vpop.f32.mrb[0].mxu0
      %967 = vmatprep.mubr.bf16.mxu0 0
      %968 = vmatmul.mubr.bf16.gmra.mrb[0].mxu0 %v850
      %v969 = vpop.f32.mrb[0].mxu0
      %v970 = vadd.f32 %v764, %v969
      %v971 = vpop.f32.mrb[0].mxu0
      %v972 = vpop.f32.mrb[0].mxu0
      %v973 = vadd.f32 %v767, %v972
      %v974 = vpop.f32.mrb[0].mxu0
      %975 = vmatprep.mubr.bf16.mxu0 0
      %976 = vmatmul.mubr.bf16.gmra.mrb[0].mxu0 %v852
      %v977 = vpop.f32.mrb[0].mxu0
      %v978 = vadd.f32 %v772, %v977
      %v979 = vpop.f32.mrb[0].mxu0
      %v980 = vpop.f32.mrb[0].mxu0
      %v981 = vadd.f32 %v775, %v980
      %v982 = vpop.f32.mrb[0].mxu0
      %983 = vmatprep.mubr.bf16.mxu0 0
      %984 = vmatmul.mubr.bf16.gmra.mrb[0].mxu0 %v854
      %v985 = vpop.f32.mrb[0].mxu0
      %v986 = vadd.f32 %v780, %v985
      %v987 = vpop.f32.mrb[0].mxu0
      %v988 = vpop.f32.mrb[0].mxu0
      %v989 = vadd.f32 %v783, %v988
      %v990 = vpop.f32.mrb[0].mxu0
      %991 = vmatprep.mubr.bf16.mxu0 0
      %992 = vmatmul.mubr.bf16.gmra.mrb[0].mxu0 %v856
      %v993 = vpop.f32.mrb[0].mxu0
      %v994 = vadd.f32 %v788, %v993
      %v995 = vpop.f32.mrb[0].mxu0
      %v996 = vpop.f32.mrb[0].mxu0
      %v997 = vadd.f32 %v791, %v996
      %v998 = vpop.f32.mrb[0].mxu0
      %999 = vmatprep.mubr.bf16.mxu0 0
      %1000 = vmatmul.mubr.bf16.gmra.mrb[0].mxu0 %v858
      %v1001 = vpop.f32.mrb[0].mxu0
      %v1002 = vadd.f32 %v796, %v1001
      %v1003 = vpop.f32.mrb[0].mxu0
      %v1004 = vpop.f32.mrb[0].mxu0
      %v1005 = vadd.f32 %v799, %v1004
      %v1006 = vpop.f32.mrb[0].mxu0
      %1007 = vmatprep.mubr.bf16.mxu0 0
      %1008 = vmatmul.mubr.bf16.gmra.mrb[0].mxu0 %v860
      %v1009 = vpop.f32.mrb[0].mxu0
      %v1010 = vadd.f32 %v804, %v1009
      %v1011 = vpop.f32.mrb[0].mxu0
      %v1012 = vpop.f32.mrb[0].mxu0
      %v1013 = vadd.f32 %v807, %v1012
      %v1014 = vpop.f32.mrb[0].mxu0
      %1015 = vmatprep.mubr.bf16.mxu0 0
      %1016 = vmatmul.mubr.bf16.gmra.mrb[0].mxu0 %v862
      %v1017 = vpop.f32.mrb[0].mxu0
      %v1018 = vadd.f32 %v812, %v1017
      %v1019 = vpop.f32.mrb[0].mxu0
      %v1020 = vpop.f32.mrb[0].mxu0
      %v1021 = vadd.f32 %v815, %v1020
      %v1022 = vpop.f32.mrb[0].mxu0
      %1023 = vmatprep.mubr.bf16.mxu0 0
      %1024 = vmatmul.mubr.bf16.gmra.mrb[0].mxu0 %v864
      %v1025 = vpop.f32.mrb[0].mxu0
      %v1026 = vadd.f32 %v820, %v1025
      %v1027 = vpop.f32.mrb[0].mxu0
      %v1028 = vpop.f32.mrb[0].mxu0
      %v1029 = vadd.f32 %v823, %v1028
      %v1030 = vpop.f32.mrb[0].mxu0
      %1031 = vmatprep.mubr.bf16.mxu0 0
      %1032 = vmatmul.mubr.bf16.gmra.mrb[0].mxu0 %v866
      %v1033 = vpop.f32.mrb[0].mxu0
      %v1034 = vadd.f32 %v828, %v1033
      %v1035 = vpop.f32.mrb[0].mxu0
      %v1036 = vpop.f32.mrb[0].mxu0
      %v1037 = vadd.f32 %v831, %v1036
      %v1038 = vpop.f32.mrb[0].mxu0
      %1039 = vdwg.mxu0
      %s1040 = scalar_lea.vmem %s2, 4
      %v1041 = vld [vmem:[%s1040] sm:$0x3]
      %vm1042 = vcmask 1046528
      %v1043 = vrot.slane %v420, 1
      %v1044 = vrot.slane %v421, 1
      %v1045 = vsel %vm1042, %v1043, %v1044
      %v1046 = vrot.slane %v422, 1
      %v1047 = vsel %vm1042, %v1044, %v1046
      %v1048 = vrot.slane %v423, 1
      %v1049 = vsel %vm1042, %v1046, %v1048
      %v1050 = vrot.slane %v424, 1
      %v1051 = vsel %vm1042, %v1048, %v1050
      %v1052 = vrot.slane %v425, 1
      %v1053 = vsel %vm1042, %v1050, %v1052
      %v1054 = vrot.slane %v426, 1
      %v1055 = vsel %vm1042, %v1052, %v1054
      %v1056 = vrot.slane %v427, 1
      %v1057 = vsel %vm1042, %v1054, %v1056
      %v1058 = vrot.slane %v428, 1
      %v1059 = vsel %vm1042, %v1056, %v1058
      %v1060 = vrot.slane %v429, 1
      %v1061 = vsel %vm1042, %v1058, %v1060
      %v1062 = vrot.slane %v430, 1
      %v1063 = vsel %vm1042, %v1060, %v1062
      %v1064 = vrot.slane %v431, 1
      %v1065 = vsel %vm1042, %v1062, %v1064
      %v1066 = vrot.slane %v432, 1
      %v1067 = vsel %vm1042, %v1064, %v1066
      %v1068 = vrot.slane %v433, 1
      %v1069 = vsel %vm1042, %v1066, %v1068
      %v1070 = vrot.slane %v434, 1
      %v1071 = vsel %vm1042, %v1068, %v1070
      %v1072 = vrot.slane %v435, 1
      %v1073 = vsel %vm1042, %v1070, %v1072
      %v1074 = vrot.slane %v436, 1
      %v1075 = vsel %vm1042, %v1072, %v1074
      %v1076 = vrot.slane %v457, 1
      %v1077 = vsel %vm1042, %v1074, %v1076
      %v1079 = vsel %vm606, %v1045, 0
      %v1082 = vsel %vm606, %v1047, 0
      %v1085 = vsel %vm606, %v1049, 0
      %v1088 = vsel %vm606, %v1051, 0
      %v1091 = vsel %vm606, %v1053, 0
      %v1094 = vsel %vm606, %v1055, 0
      %v1097 = vsel %vm606, %v1057, 0
      %v1100 = vsel %vm606, %v1059, 0
      %v1103 = vsel %vm606, %v1061, 0
      %v1106 = vsel %vm606, %v1063, 0
      %v1109 = vsel %vm606, %v1065, 0
      %v1112 = vsel %vm606, %v1067, 0
      %v1115 = vsel %vm606, %v1069, 0
      %v1118 = vsel %vm606, %v1071, 0
      %v1121 = vsel %vm606, %v1073, 0
      %v1124 = vsel %vm606, %v1075, 0
      %v1127 = vsel %vm606, %v1077, 0
      %v1130 = vand.u32 %v1041, %v661
      %1132 = vmatprep.subr.bf16.mxu0 0
      %1133 = vmatpush1.bf16.msra.mxu0 %v1130
      %1134 = vmatprep.subr.bf16.mxu0 0
      %1135 = vmatpush1.bf16.msra.mxu0 0
      %1136 = vmatprep.subr.bf16.mxu0 0
      %1137 = vmatpush1.bf16.msra.mxu0 0
      %1138 = vmatprep.subr.bf16.mxu0 0
      %1139 = vmatpush1.bf16.msra.mxu0 0
      %1140 = vmatprep.subr.bf16.mxu0 0
      %1141 = vmatpush1.bf16.msra.mxu0 0
      %1142 = vmatprep.subr.bf16.mxu0 0
      %1143 = vmatpush1.bf16.msra.mxu0 0
      %1144 = vmatprep.subr.bf16.mxu0 0
      %1145 = vmatpush1.bf16.msra.mxu0 0
      %1146 = vmatprep.subr.bf16.mxu0 0
      %1147 = vmatpush1.bf16.msra.mxu0 0
      %1148 = vmatprep.subr.bf16.mxu0 0
      %1149 = vmatpush1.bf16.msra.mxu0 0
      %1150 = vmatprep.subr.bf16.mxu0 0
      %1151 = vmatpush1.bf16.msra.mxu0 0
      %1152 = vmatprep.subr.bf16.mxu0 0
      %1153 = vmatpush1.bf16.msra.mxu0 0
      %1154 = vmatprep.subr.bf16.mxu0 0
      %1155 = vmatpush1.bf16.msra.mxu0 0
      %1156 = vmatprep.subr.bf16.mxu0 0
      %1157 = vmatpush1.bf16.msra.mxu0 0
      %1158 = vmatprep.subr.bf16.mxu0 0
      %1159 = vmatpush1.bf16.msra.mxu0 0
      %1160 = vmatprep.subr.bf16.mxu0 0
      %1161 = vmatpush1.bf16.msra.mxu0 0
      %1162 = vmatprep.subr.bf16.mxu0 0
      %1163 = vmatpush1.bf16.msra.mxu0 0
      %1164 = vmatprep.mubr.bf16.mxu0 0
      %1165 = vmatmul.mubr.bf16.gmra.mrb[0].mxu0 %v1079
      %v1166 = vpop.f32.mrb[0].mxu0
      %v1167 = vadd.f32 0.0, %v1166
      %v1168 = vpop.f32.mrb[0].mxu0
      %v1169 = vpop.f32.mrb[0].mxu0
      %v1170 = vadd.f32 0.0, %v1169
      %v1171 = vpop.f32.mrb[0].mxu0
      %1172 = vmatprep.mubr.bf16.mxu0 0
      %1173 = vmatmul.mubr.bf16.gmra.mrb[0].mxu0 %v1082
      %v1174 = vpop.f32.mrb[0].mxu0
      %v1175 = vadd.f32 0.0, %v1174
      %v1176 = vpop.f32.mrb[0].mxu0
      %v1177 = vpop.f32.mrb[0].mxu0
      %v1178 = vadd.f32 0.0, %v1177
      %v1179 = vpop.f32.mrb[0].mxu0
      %1180 = vmatprep.mubr.bf16.mxu0 0
      %1181 = vmatmul.mubr.bf16.gmra.mrb[0].mxu0 %v1085
      %v1182 = vpop.f32.mrb[0].mxu0
      %v1183 = vadd.f32 0.0, %v1182
      %v1184 = vpop.f32.mrb[0].mxu0
      %v1185 = vpop.f32.mrb[0].mxu0
      %v1186 = vadd.f32 0.0, %v1185
      %v1187 = vpop.f32.mrb[0].mxu0
      %1188 = vmatprep.mubr.bf16.mxu0 0
      %1189 = vmatmul.mubr.bf16.gmra.mrb[0].mxu0 %v1088
      %v1190 = vpop.f32.mrb[0].mxu0
      %v1191 = vadd.f32 0.0, %v1190
      %v1192 = vpop.f32.mrb[0].mxu0
      %v1193 = vpop.f32.mrb[0].mxu0
      %v1194 = vadd.f32 0.0, %v1193
      %v1195 = vpop.f32.mrb[0].mxu0
      %1196 = vmatprep.mubr.bf16.mxu0 0
      %1197 = vmatmul.mubr.bf16.gmra.mrb[0].mxu0 %v1091
      %v1198 = vpop.f32.mrb[0].mxu0
      %v1199 = vadd.f32 0.0, %v1198
      %v1200 = vpop.f32.mrb[0].mxu0
      %v1201 = vpop.f32.mrb[0].mxu0
      %v1202 = vadd.f32 0.0, %v1201
      %v1203 = vpop.f32.mrb[0].mxu0
      %1204 = vmatprep.mubr.bf16.mxu0 0
      %1205 = vmatmul.mubr.bf16.gmra.mrb[0].mxu0 %v1094
      %v1206 = vpop.f32.mrb[0].mxu0
      %v1207 = vadd.f32 0.0, %v1206
      %v1208 = vpop.f32.mrb[0].mxu0
      %v1209 = vpop.f32.mrb[0].mxu0
      %v1210 = vadd.f32 0.0, %v1209
      %v1211 = vpop.f32.mrb[0].mxu0
      %1212 = vmatprep.mubr.bf16.mxu0 0
      %1213 = vmatmul.mubr.bf16.gmra.mrb[0].mxu0 %v1097
      %v1214 = vpop.f32.mrb[0].mxu0
      %v1215 = vadd.f32 0.0, %v1214
      %v1216 = vpop.f32.mrb[0].mxu0
      %v1217 = vpop.f32.mrb[0].mxu0
      %v1218 = vadd.f32 0.0, %v1217
      %v1219 = vpop.f32.mrb[0].mxu0
      %1220 = vmatprep.mubr.bf16.mxu0 0
      %1221 = vmatmul.mubr.bf16.gmra.mrb[0].mxu0 %v1100
      %v1222 = vpop.f32.mrb[0].mxu0
      %v1223 = vadd.f32 0.0, %v1222
      %v1224 = vpop.f32.mrb[0].mxu0
      %v1225 = vpop.f32.mrb[0].mxu0
      %v1226 = vadd.f32 0.0, %v1225
      %v1227 = vpop.f32.mrb[0].mxu0
      %1228 = vmatprep.mubr.bf16.mxu0 0
      %1229 = vmatmul.mubr.bf16.gmra.mrb[0].mxu0 %v1103
      %v1230 = vpop.f32.mrb[0].mxu0
      %v1231 = vadd.f32 0.0, %v1230
      %v1232 = vpop.f32.mrb[0].mxu0
      %v1233 = vpop.f32.mrb[0].mxu0
      %v1234 = vadd.f32 0.0, %v1233
      %v1235 = vpop.f32.mrb[0].mxu0
      %1236 = vmatprep.mubr.bf16.mxu0 0
      %1237 = vmatmul.mubr.bf16.gmra.mrb[0].mxu0 %v1106
      %v1238 = vpop.f32.mrb[0].mxu0
      %v1239 = vadd.f32 0.0, %v1238
      %v1240 = vpop.f32.mrb[0].mxu0
      %v1241 = vpop.f32.mrb[0].mxu0
      %v1242 = vadd.f32 0.0, %v1241
      %v1243 = vpop.f32.mrb[0].mxu0
      %1244 = vmatprep.mubr.bf16.mxu0 0
      %1245 = vmatmul.mubr.bf16.gmra.mrb[0].mxu0 %v1109
      %v1246 = vpop.f32.mrb[0].mxu0
      %v1247 = vadd.f32 0.0, %v1246
      %v1248 = vpop.f32.mrb[0].mxu0
      %v1249 = vpop.f32.mrb[0].mxu0
      %v1250 = vadd.f32 0.0, %v1249
      %v1251 = vpop.f32.mrb[0].mxu0
      %1252 = vmatprep.mubr.bf16.mxu0 0
      %1253 = vmatmul.mubr.bf16.gmra.mrb[0].mxu0 %v1112
      %v1254 = vpop.f32.mrb[0].mxu0
      %v1255 = vadd.f32 0.0, %v1254
      %v1256 = vpop.f32.mrb[0].mxu0
      %v1257 = vpop.f32.mrb[0].mxu0
      %v1258 = vadd.f32 0.0, %v1257
      %v1259 = vpop.f32.mrb[0].mxu0
      %1260 = vmatprep.mubr.bf16.mxu0 0
      %1261 = vmatmul.mubr.bf16.gmra.mrb[0].mxu0 %v1115
      %v1262 = vpop.f32.mrb[0].mxu0
      %v1263 = vadd.f32 0.0, %v1262
      %v1264 = vpop.f32.mrb[0].mxu0
      %v1265 = vpop.f32.mrb[0].mxu0
      %v1266 = vadd.f32 0.0, %v1265
      %v1267 = vpop.f32.mrb[0].mxu0
      %1268 = vmatprep.mubr.bf16.mxu0 0
      %1269 = vmatmul.mubr.bf16.gmra.mrb[0].mxu0 %v1118
      %v1270 = vpop.f32.mrb[0].mxu0
      %v1271 = vadd.f32 0.0, %v1270
      %v1272 = vpop.f32.mrb[0].mxu0
      %v1273 = vpop.f32.mrb[0].mxu0
      %v1274 = vadd.f32 0.0, %v1273
      %v1275 = vpop.f32.mrb[0].mxu0
      %1276 = vmatprep.mubr.bf16.mxu0 0
      %1277 = vmatmul.mubr.bf16.gmra.mrb[0].mxu0 %v1121
      %v1278 = vpop.f32.mrb[0].mxu0
      %v1279 = vadd.f32 0.0, %v1278
      %v1280 = vpop.f32.mrb[0].mxu0
      %v1281 = vpop.f32.mrb[0].mxu0
      %v1282 = vadd.f32 0.0, %v1281
      %v1283 = vpop.f32.mrb[0].mxu0
      %1284 = vmatprep.mubr.bf16.mxu0 0
      %1285 = vmatmul.mubr.bf16.gmra.mrb[0].mxu0 %v1124
      %v1286 = vpop.f32.mrb[0].mxu0
      %v1287 = vadd.f32 0.0, %v1286
      %v1288 = vpop.f32.mrb[0].mxu0
      %v1289 = vpop.f32.mrb[0].mxu0
      %v1290 = vadd.f32 0.0, %v1289
      %v1291 = vpop.f32.mrb[0].mxu0
      %1292 = vmatprep.mubr.bf16.mxu0 0
      %1293 = vmatmul.mubr.bf16.gmra.mrb[0].mxu0 %v1127
      %v1294 = vpop.f32.mrb[0].mxu0
      %v1295 = vadd.f32 0.0, %v1294
      %v1296 = vpop.f32.mrb[0].mxu0
      %v1297 = vpop.f32.mrb[0].mxu0
      %v1298 = vadd.f32 0.0, %v1297
      %v1299 = vpop.f32.mrb[0].mxu0
      %1300 = vdwg.mxu0
      %v1301 = vadd.f32 %v906, %v1167
      %v1302 = vadd.f32 %v909, %v1170
      %v1303 = vadd.f32 %v914, %v1175
      %v1304 = vadd.f32 %v917, %v1178
      %v1305 = vadd.f32 %v922, %v1183
      %v1306 = vadd.f32 %v925, %v1186
      %v1307 = vadd.f32 %v930, %v1191
      %v1308 = vadd.f32 %v933, %v1194
      %v1309 = vadd.f32 %v938, %v1199
      %v1310 = vadd.f32 %v941, %v1202
      %v1311 = vadd.f32 %v946, %v1207
      %v1312 = vadd.f32 %v949, %v1210
      %v1313 = vadd.f32 %v954, %v1215
      %v1314 = vadd.f32 %v957, %v1218
      %v1315 = vadd.f32 %v962, %v1223
      %v1316 = vadd.f32 %v965, %v1226
      %v1317 = vadd.f32 %v970, %v1231
      %v1318 = vadd.f32 %v973, %v1234
      %v1319 = vadd.f32 %v978, %v1239
      %v1320 = vadd.f32 %v981, %v1242
      %v1321 = vadd.f32 %v986, %v1247
      %v1322 = vadd.f32 %v989, %v1250
      %v1323 = vadd.f32 %v994, %v1255
      %v1324 = vadd.f32 %v997, %v1258
      %v1325 = vadd.f32 %v1002, %v1263
      %v1326 = vadd.f32 %v1005, %v1266
      %v1327 = vadd.f32 %v1010, %v1271
      %v1328 = vadd.f32 %v1013, %v1274
      %v1329 = vadd.f32 %v1018, %v1279
      %v1330 = vadd.f32 %v1021, %v1282
      %v1331 = vadd.f32 %v1026, %v1287
      %v1332 = vadd.f32 %v1029, %v1290
      %v1333 = vadd.f32 %v1034, %v1295
      %v1334 = vadd.f32 %v1037, %v1298
      %s1335 = scalar_lea.vmem %s2, 6
      %v1336 = vld [vmem:[%s1335] sm:$0x3]
      %v1337 = vrot.slane %v458, 1
      %v1338 = vsel %vm1042, %v1076, %v1337
      %v1339 = vrot.slane %v459, 1
      %v1340 = vsel %vm1042, %v1337, %v1339
      %v1342 = vsel %vm606, %v1338, 0
      %v1345 = vsel %vm606, %v1340, 0
      %v1348 = vand.u32 %v1336, %v661
      %1350 = vmatprep.subr.bf16.mxu0 0
      %1351 = vmatpush1.bf16.msra.mxu0 %v1348
      %1352 = vmatprep.subr.bf16.mxu0 0
      %1353 = vmatpush1.bf16.msra.mxu0 0
      %1354 = vmatprep.subr.bf16.mxu0 0
      %1355 = vmatpush1.bf16.msra.mxu0 0
      %1356 = vmatprep.subr.bf16.mxu0 0
      %1357 = vmatpush1.bf16.msra.mxu0 0
      %1358 = vmatprep.subr.bf16.mxu0 0
      %1359 = vmatpush1.bf16.msra.mxu0 0
      %1360 = vmatprep.subr.bf16.mxu0 0
      %1361 = vmatpush1.bf16.msra.mxu0 0
      %1362 = vmatprep.subr.bf16.mxu0 0
      %1363 = vmatpush1.bf16.msra.mxu0 0
      %1364 = vmatprep.subr.bf16.mxu0 0
      %1365 = vmatpush1.bf16.msra.mxu0 0
      %1366 = vmatprep.subr.bf16.mxu0 0
      %1367 = vmatpush1.bf16.msra.mxu0 0
      %1368 = vmatprep.subr.bf16.mxu0 0
      %1369 = vmatpush1.bf16.msra.mxu0 0
      %1370 = vmatprep.subr.bf16.mxu0 0
      %1371 = vmatpush1.bf16.msra.mxu0 0
      %1372 = vmatprep.subr.bf16.mxu0 0
      %1373 = vmatpush1.bf16.msra.mxu0 0
      %1374 = vmatprep.subr.bf16.mxu0 0
      %1375 = vmatpush1.bf16.msra.mxu0 0
      %1376 = vmatprep.subr.bf16.mxu0 0
      %1377 = vmatpush1.bf16.msra.mxu0 0
      %1378 = vmatprep.subr.bf16.mxu0 0
      %1379 = vmatpush1.bf16.msra.mxu0 0
      %1380 = vmatprep.subr.bf16.mxu0 0
      %1381 = vmatpush1.bf16.msra.mxu0 0
      %1382 = vmatprep.mubr.bf16.mxu0 0
      %1383 = vmatmul.mubr.bf16.gmra.mrb[0].mxu0 %v1085
      %v1384 = vpop.f32.mrb[0].mxu0
      %v1385 = vadd.f32 0.0, %v1384
      %v1386 = vpop.f32.mrb[0].mxu0
      %v1387 = vpop.f32.mrb[0].mxu0
      %v1388 = vadd.f32 0.0, %v1387
      %v1389 = vpop.f32.mrb[0].mxu0
      %1390 = vmatprep.mubr.bf16.mxu0 0
      %1391 = vmatmul.mubr.bf16.gmra.mrb[0].mxu0 %v1088
      %v1392 = vpop.f32.mrb[0].mxu0
      %v1393 = vadd.f32 0.0, %v1392
      %v1394 = vpop.f32.mrb[0].mxu0
      %v1395 = vpop.f32.mrb[0].mxu0
      %v1396 = vadd.f32 0.0, %v1395
      %v1397 = vpop.f32.mrb[0].mxu0
      %1398 = vmatprep.mubr.bf16.mxu0 0
      %1399 = vmatmul.mubr.bf16.gmra.mrb[0].mxu0 %v1091
      %v1400 = vpop.f32.mrb[0].mxu0
      %v1401 = vadd.f32 0.0, %v1400
      %v1402 = vpop.f32.mrb[0].mxu0
      %v1403 = vpop.f32.mrb[0].mxu0
      %v1404 = vadd.f32 0.0, %v1403
      %v1405 = vpop.f32.mrb[0].mxu0
      %1406 = vmatprep.mubr.bf16.mxu0 0
      %1407 = vmatmul.mubr.bf16.gmra.mrb[0].mxu0 %v1094
      %v1408 = vpop.f32.mrb[0].mxu0
      %v1409 = vadd.f32 0.0, %v1408
      %v1410 = vpop.f32.mrb[0].mxu0
      %v1411 = vpop.f32.mrb[0].mxu0
      %v1412 = vadd.f32 0.0, %v1411
      %v1413 = vpop.f32.mrb[0].mxu0
      %1414 = vmatprep.mubr.bf16.mxu0 0
      %1415 = vmatmul.mubr.bf16.gmra.mrb[0].mxu0 %v1097
      %v1416 = vpop.f32.mrb[0].mxu0
      %v1417 = vadd.f32 0.0, %v1416
      %v1418 = vpop.f32.mrb[0].mxu0
      %v1419 = vpop.f32.mrb[0].mxu0
      %v1420 = vadd.f32 0.0, %v1419
      %v1421 = vpop.f32.mrb[0].mxu0
      %1422 = vmatprep.mubr.bf16.mxu0 0
      %1423 = vmatmul.mubr.bf16.gmra.mrb[0].mxu0 %v1100
      %v1424 = vpop.f32.mrb[0].mxu0
      %v1425 = vadd.f32 0.0, %v1424
      %v1426 = vpop.f32.mrb[0].mxu0
      %v1427 = vpop.f32.mrb[0].mxu0
      %v1428 = vadd.f32 0.0, %v1427
      %v1429 = vpop.f32.mrb[0].mxu0
      %1430 = vmatprep.mubr.bf16.mxu0 0
      %1431 = vmatmul.mubr.bf16.gmra.mrb[0].mxu0 %v1103
      %v1432 = vpop.f32.mrb[0].mxu0
      %v1433 = vadd.f32 0.0, %v1432
      %v1434 = vpop.f32.mrb[0].mxu0
      %v1435 = vpop.f32.mrb[0].mxu0
      %v1436 = vadd.f32 0.0, %v1435
      %v1437 = vpop.f32.mrb[0].mxu0
      %1438 = vmatprep.mubr.bf16.mxu0 0
      %1439 = vmatmul.mubr.bf16.gmra.mrb[0].mxu0 %v1106
      %v1440 = vpop.f32.mrb[0].mxu0
      %v1441 = vadd.f32 0.0, %v1440
      %v1442 = vpop.f32.mrb[0].mxu0
      %v1443 = vpop.f32.mrb[0].mxu0
      %v1444 = vadd.f32 0.0, %v1443
      %v1445 = vpop.f32.mrb[0].mxu0
      %1446 = vmatprep.mubr.bf16.mxu0 0
      %1447 = vmatmul.mubr.bf16.gmra.mrb[0].mxu0 %v1109
      %v1448 = vpop.f32.mrb[0].mxu0
      %v1449 = vadd.f32 0.0, %v1448
      %v1450 = vpop.f32.mrb[0].mxu0
      %v1451 = vpop.f32.mrb[0].mxu0
      %v1452 = vadd.f32 0.0, %v1451
      %v1453 = vpop.f32.mrb[0].mxu0
      %1454 = vmatprep.mubr.bf16.mxu0 0
      %1455 = vmatmul.mubr.bf16.gmra.mrb[0].mxu0 %v1112
      %v1456 = vpop.f32.mrb[0].mxu0
      %v1457 = vadd.f32 0.0, %v1456
      %v1458 = vpop.f32.mrb[0].mxu0
      %v1459 = vpop.f32.mrb[0].mxu0
      %v1460 = vadd.f32 0.0, %v1459
      %v1461 = vpop.f32.mrb[0].mxu0
      %1462 = vmatprep.mubr.bf16.mxu0 0
      %1463 = vmatmul.mubr.bf16.gmra.mrb[0].mxu0 %v1115
      %v1464 = vpop.f32.mrb[0].mxu0
      %v1465 = vadd.f32 0.0, %v1464
      %v1466 = vpop.f32.mrb[0].mxu0
      %v1467 = vpop.f32.mrb[0].mxu0
      %v1468 = vadd.f32 0.0, %v1467
      %v1469 = vpop.f32.mrb[0].mxu0
      %1470 = vmatprep.mubr.bf16.mxu0 0
      %1471 = vmatmul.mubr.bf16.gmra.mrb[0].mxu0 %v1118
      %v1472 = vpop.f32.mrb[0].mxu0
      %v1473 = vadd.f32 0.0, %v1472
      %v1474 = vpop.f32.mrb[0].mxu0
      %v1475 = vpop.f32.mrb[0].mxu0
      %v1476 = vadd.f32 0.0, %v1475
      %v1477 = vpop.f32.mrb[0].mxu0
      %1478 = vmatprep.mubr.bf16.mxu0 0
      %1479 = vmatmul.mubr.bf16.gmra.mrb[0].mxu0 %v1121
      %v1480 = vpop.f32.mrb[0].mxu0
      %v1481 = vadd.f32 0.0, %v1480
      %v1482 = vpop.f32.mrb[0].mxu0
      %v1483 = vpop.f32.mrb[0].mxu0
      %v1484 = vadd.f32 0.0, %v1483
      %v1485 = vpop.f32.mrb[0].mxu0
      %1486 = vmatprep.mubr.bf16.mxu0 0
      %1487 = vmatmul.mubr.bf16.gmra.mrb[0].mxu0 %v1124
      %v1488 = vpop.f32.mrb[0].mxu0
      %v1489 = vadd.f32 0.0, %v1488
      %v1490 = vpop.f32.mrb[0].mxu0
      %v1491 = vpop.f32.mrb[0].mxu0
      %v1492 = vadd.f32 0.0, %v1491
      %v1493 = vpop.f32.mrb[0].mxu0
      %1494 = vmatprep.mubr.bf16.mxu0 0
      %1495 = vmatmul.mubr.bf16.gmra.mrb[0].mxu0 %v1127
      %v1496 = vpop.f32.mrb[0].mxu0
      %v1497 = vadd.f32 0.0, %v1496
      %v1498 = vpop.f32.mrb[0].mxu0
      %v1499 = vpop.f32.mrb[0].mxu0
      %v1500 = vadd.f32 0.0, %v1499
      %v1501 = vpop.f32.mrb[0].mxu0
      %1502 = vmatprep.mubr.bf16.mxu0 0
      %1503 = vmatmul.mubr.bf16.gmra.mrb[0].mxu0 %v1342
      %v1504 = vpop.f32.mrb[0].mxu0
      %v1505 = vadd.f32 0.0, %v1504
      %v1506 = vpop.f32.mrb[0].mxu0
      %v1507 = vpop.f32.mrb[0].mxu0
      %v1508 = vadd.f32 0.0, %v1507
      %v1509 = vpop.f32.mrb[0].mxu0
      %1510 = vmatprep.mubr.bf16.mxu0 0
      %1511 = vmatmul.mubr.bf16.gmra.mrb[0].mxu0 %v1345
      %v1512 = vpop.f32.mrb[0].mxu0
      %v1513 = vadd.f32 0.0, %v1512
      %v1514 = vpop.f32.mrb[0].mxu0
      %v1515 = vpop.f32.mrb[0].mxu0
      %v1516 = vadd.f32 0.0, %v1515
      %v1517 = vpop.f32.mrb[0].mxu0
      %1518 = vdwg.mxu0
      %v1519 = vadd.f32 %v1301, %v1385
      %v1520 = vadd.f32 %v1302, %v1388
      %v1521 = vadd.f32 %v1303, %v1393
      %v1522 = vadd.f32 %v1304, %v1396
      %v1523 = vadd.f32 %v1305, %v1401
      %v1524 = vadd.f32 %v1306, %v1404
      %v1525 = vadd.f32 %v1307, %v1409
      %v1526 = vadd.f32 %v1308, %v1412
      %v1527 = vadd.f32 %v1309, %v1417
      %v1528 = vadd.f32 %v1310, %v1420
      %v1529 = vadd.f32 %v1311, %v1425
      %v1530 = vadd.f32 %v1312, %v1428
      %v1531 = vadd.f32 %v1313, %v1433
      %v1532 = vadd.f32 %v1314, %v1436
      %v1533 = vadd.f32 %v1315, %v1441
      %v1534 = vadd.f32 %v1316, %v1444
      %v1535 = vadd.f32 %v1317, %v1449
      %v1536 = vadd.f32 %v1318, %v1452
      %v1537 = vadd.f32 %v1319, %v1457
      %v1538 = vadd.f32 %v1320, %v1460
      %v1539 = vadd.f32 %v1321, %v1465
      %v1540 = vadd.f32 %v1322, %v1468
      %v1541 = vadd.f32 %v1323, %v1473
      %v1542 = vadd.f32 %v1324, %v1476
      %v1543 = vadd.f32 %v1325, %v1481
      %v1544 = vadd.f32 %v1326, %v1484
      %v1545 = vadd.f32 %v1327, %v1489
      %v1546 = vadd.f32 %v1328, %v1492
      %v1547 = vadd.f32 %v1329, %v1497
      %v1548 = vadd.f32 %v1330, %v1500
      %v1549 = vadd.f32 %v1331, %v1505
      %v1550 = vadd.f32 %v1332, %v1508
      %v1551 = vadd.f32 %v1333, %v1513
      %v1552 = vadd.f32 %v1334, %v1516
      %s1553 = scalar_lea.vmem %s2, 8
      %v1554 = vld [vmem:[%s1553] sm:$0x3]
      %vm1555 = vsmask.f32 6400
      %v1556 = vrot.slane %v486, 1
      %v1557 = vrot.slane %v482, 2
      %v1558 = vor.u32 %v1556, %v1557
      %v1559 = vrot.slane %v494, 1
      %v1560 = vrot.slane %v490, 2
      %v1561 = vor.u32 %v1559, %v1560
      %v1562 = vsel %vm1555, %v1558, %v1561
      %v1563 = vrot.slane %v502, 1
      %v1564 = vrot.slane %v498, 2
      %v1565 = vor.u32 %v1563, %v1564
      %v1566 = vsel %vm1555, %v1561, %v1565
      %v1567 = vrot.slane %v510, 1
      %v1568 = vrot.slane %v506, 2
      %v1569 = vor.u32 %v1567, %v1568
      %v1570 = vsel %vm1555, %v1565, %v1569
      %v1571 = vrot.slane %v518, 1
      %v1572 = vrot.slane %v514, 2
      %v1573 = vor.u32 %v1571, %v1572
      %v1574 = vsel %vm1555, %v1569, %v1573
      %v1575 = vrot.slane %v526, 1
      %v1576 = vrot.slane %v522, 2
      %v1577 = vor.u32 %v1575, %v1576
      %v1578 = vsel %vm1555, %v1573, %v1577
      %v1579 = vrot.slane %v534, 1
      %v1580 = vrot.slane %v530, 2
      %v1581 = vor.u32 %v1579, %v1580
      %v1582 = vsel %vm1555, %v1577, %v1581
      %v1583 = vrot.slane %v542, 1
      %v1584 = vrot.slane %v538, 2
      %v1585 = vor.u32 %v1583, %v1584
      %v1586 = vsel %vm1555, %v1581, %v1585
      %v1587 = vrot.slane %v550, 1
      %v1588 = vrot.slane %v546, 2
      %v1589 = vor.u32 %v1587, %v1588
      %v1590 = vsel %vm1555, %v1585, %v1589
      %v1591 = vrot.slane %v558, 1
      %v1592 = vrot.slane %v554, 2
      %v1593 = vor.u32 %v1591, %v1592
      %v1594 = vsel %vm1555, %v1589, %v1593
      %v1595 = vrot.slane %v566, 1
      %v1596 = vrot.slane %v562, 2
      %v1597 = vor.u32 %v1595, %v1596
      %v1598 = vsel %vm1555, %v1593, %v1597
      %v1599 = vrot.slane %v574, 1
      %v1600 = vrot.slane %v570, 2
      %v1601 = vor.u32 %v1599, %v1600
      %v1602 = vsel %vm1555, %v1597, %v1601
      %v1603 = vrot.slane %v582, 1
      %v1604 = vrot.slane %v578, 2
      %v1605 = vor.u32 %v1603, %v1604
      %v1606 = vsel %vm1555, %v1601, %v1605
      %v1607 = vrot.slane %v590, 1
      %v1608 = vrot.slane %v586, 2
      %v1609 = vor.u32 %v1607, %v1608
      %v1610 = vsel %vm1555, %v1605, %v1609
      %v1611 = vrot.slane %v598, 1
      %v1612 = vrot.slane %v594, 2
      %v1613 = vor.u32 %v1611, %v1612
      %v1614 = vsel %vm1555, %v1609, %v1613
      %v1615 = vshrl.u32 %v457, 16
      %v1617 = vrot.slane %v1615, 1
      %v1618 = vrot.slane %v602, 2
      %v1619 = vor.u32 %v1617, %v1618
      %v1620 = vsel %vm1555, %v1613, %v1619
      %v1622 = vshrl.u32 %v458, 16
      %v1624 = vrot.slane %v1622, 1
      %v1625 = vshll.u32 %v458, 16
      %v1627 = vrot.slane %v1625, 2
      %v1628 = vor.u32 %v1624, %v1627
      %v1629 = vsel %vm1555, %v1619, %v1628
      %v1631 = vshrl.u32 %v459, 16
      %v1633 = vrot.slane %v1631, 1
      %v1634 = vshll.u32 %v459, 16
      %v1636 = vrot.slane %v1634, 2
      %v1637 = vor.u32 %v1633, %v1636
      %v1638 = vsel %vm1555, %v1628, %v1637
      %v1640 = vsel %vm606, %v1562, 0
      %v1643 = vsel %vm606, %v1566, 0
      %v1646 = vsel %vm606, %v1570, 0
      %v1649 = vsel %vm606, %v1574, 0
      %v1652 = vsel %vm606, %v1578, 0
      %v1655 = vsel %vm606, %v1582, 0
      %v1658 = vsel %vm606, %v1586, 0
      %v1661 = vsel %vm606, %v1590, 0
      %v1664 = vsel %vm606, %v1594, 0
      %v1667 = vsel %vm606, %v1598, 0
      %v1670 = vsel %vm606, %v1602, 0
      %v1673 = vsel %vm606, %v1606, 0
      %v1676 = vsel %vm606, %v1610, 0
      %v1679 = vsel %vm606, %v1614, 0
      %v1682 = vsel %vm606, %v1620, 0
      %v1685 = vsel %vm606, %v1629, 0
      %v1688 = vsel %vm606, %v1638, 0
      %v1691 = vand.u32 %v1554, %v661
      %1693 = vmatprep.subr.bf16.mxu0 0
      %1694 = vmatpush1.bf16.msra.mxu0 %v1691
      %1695 = vmatprep.subr.bf16.mxu0 0
      %1696 = vmatpush1.bf16.msra.mxu0 0
      %1697 = vmatprep.subr.bf16.mxu0 0
      %1698 = vmatpush1.bf16.msra.mxu0 0
      %1699 = vmatprep.subr.bf16.mxu0 0
      %1700 = vmatpush1.bf16.msra.mxu0 0
      %1701 = vmatprep.subr.bf16.mxu0 0
      %1702 = vmatpush1.bf16.msra.mxu0 0
      %1703 = vmatprep.subr.bf16.mxu0 0
      %1704 = vmatpush1.bf16.msra.mxu0 0
      %1705 = vmatprep.subr.bf16.mxu0 0
      %1706 = vmatpush1.bf16.msra.mxu0 0
      %1707 = vmatprep.subr.bf16.mxu0 0
      %1708 = vmatpush1.bf16.msra.mxu0 0
      %1709 = vmatprep.subr.bf16.mxu0 0
      %1710 = vmatpush1.bf16.msra.mxu0 0
      %1711 = vmatprep.subr.bf16.mxu0 0
      %1712 = vmatpush1.bf16.msra.mxu0 0
      %1713 = vmatprep.subr.bf16.mxu0 0
      %1714 = vmatpush1.bf16.msra.mxu0 0
      %1715 = vmatprep.subr.bf16.mxu0 0
      %1716 = vmatpush1.bf16.msra.mxu0 0
      %1717 = vmatprep.subr.bf16.mxu0 0
      %1718 = vmatpush1.bf16.msra.mxu0 0
      %1719 = vmatprep.subr.bf16.mxu0 0
      %1720 = vmatpush1.bf16.msra.mxu0 0
      %1721 = vmatprep.subr.bf16.mxu0 0
      %1722 = vmatpush1.bf16.msra.mxu0 0
      %1723 = vmatprep.subr.bf16.mxu0 0
      %1724 = vmatpush1.bf16.msra.mxu0 0
      %1725 = vmatprep.mubr.bf16.mxu0 0
      %1726 = vmatmul.mubr.bf16.gmra.mrb[0].mxu0 %v1640
      %v1727 = vpop.f32.mrb[0].mxu0
      %v1728 = vadd.f32 0.0, %v1727
      %v1729 = vpop.f32.mrb[0].mxu0
      %v1730 = vpop.f32.mrb[0].mxu0
      %v1731 = vadd.f32 0.0, %v1730
      %v1732 = vpop.f32.mrb[0].mxu0
      %1733 = vmatprep.mubr.bf16.mxu0 0
      %1734 = vmatmul.mubr.bf16.gmra.mrb[0].mxu0 %v1643
      %v1735 = vpop.f32.mrb[0].mxu0
      %v1736 = vadd.f32 0.0, %v1735
      %v1737 = vpop.f32.mrb[0].mxu0
      %v1738 = vpop.f32.mrb[0].mxu0
      %v1739 = vadd.f32 0.0, %v1738
      %v1740 = vpop.f32.mrb[0].mxu0
      %1741 = vmatprep.mubr.bf16.mxu0 0
      %1742 = vmatmul.mubr.bf16.gmra.mrb[0].mxu0 %v1646
      %v1743 = vpop.f32.mrb[0].mxu0
      %v1744 = vadd.f32 0.0, %v1743
      %v1745 = vpop.f32.mrb[0].mxu0
      %v1746 = vpop.f32.mrb[0].mxu0
      %v1747 = vadd.f32 0.0, %v1746
      %v1748 = vpop.f32.mrb[0].mxu0
      %1749 = vmatprep.mubr.bf16.mxu0 0
      %1750 = vmatmul.mubr.bf16.gmra.mrb[0].mxu0 %v1649
      %v1751 = vpop.f32.mrb[0].mxu0
      %v1752 = vadd.f32 0.0, %v1751
      %v1753 = vpop.f32.mrb[0].mxu0
      %v1754 = vpop.f32.mrb[0].mxu0
      %v1755 = vadd.f32 0.0, %v1754
      %v1756 = vpop.f32.mrb[0].mxu0
      %1757 = vmatprep.mubr.bf16.mxu0 0
      %1758 = vmatmul.mubr.bf16.gmra.mrb[0].mxu0 %v1652
      %v1759 = vpop.f32.mrb[0].mxu0
      %v1760 = vadd.f32 0.0, %v1759
      %v1761 = vpop.f32.mrb[0].mxu0
      %v1762 = vpop.f32.mrb[0].mxu0
      %v1763 = vadd.f32 0.0, %v1762
      %v1764 = vpop.f32.mrb[0].mxu0
      %1765 = vmatprep.mubr.bf16.mxu0 0
      %1766 = vmatmul.mubr.bf16.gmra.mrb[0].mxu0 %v1655
      %v1767 = vpop.f32.mrb[0].mxu0
      %v1768 = vadd.f32 0.0, %v1767
      %v1769 = vpop.f32.mrb[0].mxu0
      %v1770 = vpop.f32.mrb[0].mxu0
      %v1771 = vadd.f32 0.0, %v1770
      %v1772 = vpop.f32.mrb[0].mxu0
      %1773 = vmatprep.mubr.bf16.mxu0 0
      %1774 = vmatmul.mubr.bf16.gmra.mrb[0].mxu0 %v1658
      %v1775 = vpop.f32.mrb[0].mxu0
      %v1776 = vadd.f32 0.0, %v1775
      %v1777 = vpop.f32.mrb[0].mxu0
      %v1778 = vpop.f32.mrb[0].mxu0
      %v1779 = vadd.f32 0.0, %v1778
      %v1780 = vpop.f32.mrb[0].mxu0
      %1781 = vmatprep.mubr.bf16.mxu0 0
      %1782 = vmatmul.mubr.bf16.gmra.mrb[0].mxu0 %v1661
      %v1783 = vpop.f32.mrb[0].mxu0
      %v1784 = vadd.f32 0.0, %v1783
      %v1785 = vpop.f32.mrb[0].mxu0
      %v1786 = vpop.f32.mrb[0].mxu0
      %v1787 = vadd.f32 0.0, %v1786
      %v1788 = vpop.f32.mrb[0].mxu0
      %1789 = vmatprep.mubr.bf16.mxu0 0
      %1790 = vmatmul.mubr.bf16.gmra.mrb[0].mxu0 %v1664
      %v1791 = vpop.f32.mrb[0].mxu0
      %v1792 = vadd.f32 0.0, %v1791
      %v1793 = vpop.f32.mrb[0].mxu0
      %v1794 = vpop.f32.mrb[0].mxu0
      %v1795 = vadd.f32 0.0, %v1794
      %v1796 = vpop.f32.mrb[0].mxu0
      %1797 = vmatprep.mubr.bf16.mxu0 0
      %1798 = vmatmul.mubr.bf16.gmra.mrb[0].mxu0 %v1667
      %v1799 = vpop.f32.mrb[0].mxu0
      %v1800 = vadd.f32 0.0, %v1799
      %v1801 = vpop.f32.mrb[0].mxu0
      %v1802 = vpop.f32.mrb[0].mxu0
      %v1803 = vadd.f32 0.0, %v1802
      %v1804 = vpop.f32.mrb[0].mxu0
      %1805 = vmatprep.mubr.bf16.mxu0 0
      %1806 = vmatmul.mubr.bf16.gmra.mrb[0].mxu0 %v1670
      %v1807 = vpop.f32.mrb[0].mxu0
      %v1808 = vadd.f32 0.0, %v1807
      %v1809 = vpop.f32.mrb[0].mxu0
      %v1810 = vpop.f32.mrb[0].mxu0
      %v1811 = vadd.f32 0.0, %v1810
      %v1812 = vpop.f32.mrb[0].mxu0
      %1813 = vmatprep.mubr.bf16.mxu0 0
      %1814 = vmatmul.mubr.bf16.gmra.mrb[0].mxu0 %v1673
      %v1815 = vpop.f32.mrb[0].mxu0
      %v1816 = vadd.f32 0.0, %v1815
      %v1817 = vpop.f32.mrb[0].mxu0
      %v1818 = vpop.f32.mrb[0].mxu0
      %v1819 = vadd.f32 0.0, %v1818
      %v1820 = vpop.f32.mrb[0].mxu0
      %1821 = vmatprep.mubr.bf16.mxu0 0
      %1822 = vmatmul.mubr.bf16.gmra.mrb[0].mxu0 %v1676
      %v1823 = vpop.f32.mrb[0].mxu0
      %v1824 = vadd.f32 0.0, %v1823
      %v1825 = vpop.f32.mrb[0].mxu0
      %v1826 = vpop.f32.mrb[0].mxu0
      %v1827 = vadd.f32 0.0, %v1826
      %v1828 = vpop.f32.mrb[0].mxu0
      %1829 = vmatprep.mubr.bf16.mxu0 0
      %1830 = vmatmul.mubr.bf16.gmra.mrb[0].mxu0 %v1679
      %v1831 = vpop.f32.mrb[0].mxu0
      %v1832 = vadd.f32 0.0, %v1831
      %v1833 = vpop.f32.mrb[0].mxu0
      %v1834 = vpop.f32.mrb[0].mxu0
      %v1835 = vadd.f32 0.0, %v1834
      %v1836 = vpop.f32.mrb[0].mxu0
      %1837 = vmatprep.mubr.bf16.mxu0 0
      %1838 = vmatmul.mubr.bf16.gmra.mrb[0].mxu0 %v1682
      %v1839 = vpop.f32.mrb[0].mxu0
      %v1840 = vadd.f32 0.0, %v1839
      %v1841 = vpop.f32.mrb[0].mxu0
      %v1842 = vpop.f32.mrb[0].mxu0
      %v1843 = vadd.f32 0.0, %v1842
      %v1844 = vpop.f32.mrb[0].mxu0
      %1845 = vmatprep.mubr.bf16.mxu0 0
      %1846 = vmatmul.mubr.bf16.gmra.mrb[0].mxu0 %v1685
      %v1847 = vpop.f32.mrb[0].mxu0
      %v1848 = vadd.f32 0.0, %v1847
      %v1849 = vpop.f32.mrb[0].mxu0
      %v1850 = vpop.f32.mrb[0].mxu0
      %v1851 = vadd.f32 0.0, %v1850
      %v1852 = vpop.f32.mrb[0].mxu0
      %1853 = vmatprep.mubr.bf16.mxu0 0
      %1854 = vmatmul.mubr.bf16.gmra.mrb[0].mxu0 %v1688
      %v1855 = vpop.f32.mrb[0].mxu0
      %v1856 = vadd.f32 0.0, %v1855
      %v1857 = vpop.f32.mrb[0].mxu0
      %v1858 = vpop.f32.mrb[0].mxu0
      %v1859 = vadd.f32 0.0, %v1858
      %v1860 = vpop.f32.mrb[0].mxu0
      %1861 = vdwg.mxu0
      %v1862 = vadd.f32 %v1519, %v1728
      %v1863 = vadd.f32 %v1520, %v1731
      %v1864 = vadd.f32 %v1521, %v1736
      %v1865 = vadd.f32 %v1522, %v1739
      %v1866 = vadd.f32 %v1523, %v1744
      %v1867 = vadd.f32 %v1524, %v1747
      %v1868 = vadd.f32 %v1525, %v1752
      %v1869 = vadd.f32 %v1526, %v1755
      %v1870 = vadd.f32 %v1527, %v1760
      %v1871 = vadd.f32 %v1528, %v1763
      %v1872 = vadd.f32 %v1529, %v1768
      %v1873 = vadd.f32 %v1530, %v1771
      %v1874 = vadd.f32 %v1531, %v1776
      %v1875 = vadd.f32 %v1532, %v1779
      %v1876 = vadd.f32 %v1533, %v1784
      %v1877 = vadd.f32 %v1534, %v1787
      %v1878 = vadd.f32 %v1535, %v1792
      %v1879 = vadd.f32 %v1536, %v1795
      %v1880 = vadd.f32 %v1537, %v1800
      %v1881 = vadd.f32 %v1538, %v1803
      %v1882 = vadd.f32 %v1539, %v1808
      %v1883 = vadd.f32 %v1540, %v1811
      %v1884 = vadd.f32 %v1541, %v1816
      %v1885 = vadd.f32 %v1542, %v1819
      %v1886 = vadd.f32 %v1543, %v1824
      %v1887 = vadd.f32 %v1544, %v1827
      %v1888 = vadd.f32 %v1545, %v1832
      %v1889 = vadd.f32 %v1546, %v1835
      %v1890 = vadd.f32 %v1547, %v1840
      %v1891 = vadd.f32 %v1548, %v1843
      %v1892 = vadd.f32 %v1549, %v1848
      %v1893 = vadd.f32 %v1550, %v1851
      %v1894 = vadd.f32 %v1551, %v1856
      %v1895 = vadd.f32 %v1552, %v1859
      %s1896 = scalar_lea.vmem %s2, 10
      %v1897 = vld [vmem:[%s1896] sm:$0x3]
      %vm1898 = vcmask 1045504
      %v1899 = vrot.slane %v422, 2
      %v1900 = vrot.slane %v423, 2
      %v1901 = vsel %vm1898, %v1899, %v1900
      %v1902 = vrot.slane %v424, 2
      %v1903 = vsel %vm1898, %v1900, %v1902
      %v1904 = vrot.slane %v425, 2
      %v1905 = vsel %vm1898, %v1902, %v1904
      %v1906 = vrot.slane %v426, 2
      %v1907 = vsel %vm1898, %v1904, %v1906
      %v1908 = vrot.slane %v427, 2
      %v1909 = vsel %vm1898, %v1906, %v1908
      %v1910 = vrot.slane %v428, 2
      %v1911 = vsel %vm1898, %v1908, %v1910
      %v1912 = vrot.slane %v429, 2
      %v1913 = vsel %vm1898, %v1910, %v1912
      %v1914 = vrot.slane %v430, 2
      %v1915 = vsel %vm1898, %v1912, %v1914
      %v1916 = vrot.slane %v431, 2
      %v1917 = vsel %vm1898, %v1914, %v1916
      %v1918 = vrot.slane %v432, 2
      %v1919 = vsel %vm1898, %v1916, %v1918
      %v1920 = vrot.slane %v433, 2
      %v1921 = vsel %vm1898, %v1918, %v1920
      %v1922 = vrot.slane %v434, 2
      %v1923 = vsel %vm1898, %v1920, %v1922
      %v1924 = vrot.slane %v435, 2
      %v1925 = vsel %vm1898, %v1922, %v1924
      %v1926 = vrot.slane %v436, 2
      %v1927 = vsel %vm1898, %v1924, %v1926
      %v1928 = vrot.slane %v457, 2
      %v1929 = vsel %vm1898, %v1926, %v1928
      %v1930 = vrot.slane %v458, 2
      %v1931 = vsel %vm1898, %v1928, %v1930
      %v1932 = vrot.slane %v459, 2
      %v1933 = vsel %vm1898, %v1930, %v1932
      %v1935 = vsel %vm606, %v1901, 0
      %v1938 = vsel %vm606, %v1903, 0
      %v1941 = vsel %vm606, %v1905, 0
      %v1944 = vsel %vm606, %v1907, 0
      %v1947 = vsel %vm606, %v1909, 0
      %v1950 = vsel %vm606, %v1911, 0
      %v1953 = vsel %vm606, %v1913, 0
      %v1956 = vsel %vm606, %v1915, 0
      %v1959 = vsel %vm606, %v1917, 0
      %v1962 = vsel %vm606, %v1919, 0
      %v1965 = vsel %vm606, %v1921, 0
      %v1968 = vsel %vm606, %v1923, 0
      %v1971 = vsel %vm606, %v1925, 0
      %v1974 = vsel %vm606, %v1927, 0
      %v1977 = vsel %vm606, %v1929, 0
      %v1980 = vsel %vm606, %v1931, 0
      %v1983 = vsel %vm606, %v1933, 0
      %v1986 = vand.u32 %v1897, %v661
      %1988 = vmatprep.subr.bf16.mxu0 0
      %1989 = vmatpush1.bf16.msra.mxu0 %v1986
      %1990 = vmatprep.subr.bf16.mxu0 0
      %1991 = vmatpush1.bf16.msra.mxu0 0
      %1992 = vmatprep.subr.bf16.mxu0 0
      %1993 = vmatpush1.bf16.msra.mxu0 0
      %1994 = vmatprep.subr.bf16.mxu0 0
      %1995 = vmatpush1.bf16.msra.mxu0 0
      %1996 = vmatprep.subr.bf16.mxu0 0
      %1997 = vmatpush1.bf16.msra.mxu0 0
      %1998 = vmatprep.subr.bf16.mxu0 0
      %1999 = vmatpush1.bf16.msra.mxu0 0
      %2000 = vmatprep.subr.bf16.mxu0 0
      %2001 = vmatpush1.bf16.msra.mxu0 0
      %2002 = vmatprep.subr.bf16.mxu0 0
      %2003 = vmatpush1.bf16.msra.mxu0 0
      %2004 = vmatprep.subr.bf16.mxu0 0
      %2005 = vmatpush1.bf16.msra.mxu0 0
      %2006 = vmatprep.subr.bf16.mxu0 0
      %2007 = vmatpush1.bf16.msra.mxu0 0
      %2008 = vmatprep.subr.bf16.mxu0 0
      %2009 = vmatpush1.bf16.msra.mxu0 0
      %2010 = vmatprep.subr.bf16.mxu0 0
      %2011 = vmatpush1.bf16.msra.mxu0 0
      %2012 = vmatprep.subr.bf16.mxu0 0
      %2013 = vmatpush1.bf16.msra.mxu0 0
      %2014 = vmatprep.subr.bf16.mxu0 0
      %2015 = vmatpush1.bf16.msra.mxu0 0
      %2016 = vmatprep.subr.bf16.mxu0 0
      %2017 = vmatpush1.bf16.msra.mxu0 0
      %2018 = vmatprep.subr.bf16.mxu0 0
      %2019 = vmatpush1.bf16.msra.mxu0 0
      %2020 = vmatprep.mubr.bf16.mxu0 0
      %2021 = vmatmul.mubr.bf16.gmra.mrb[0].mxu0 %v1935
      %v2022 = vpop.f32.mrb[0].mxu0
      %v2023 = vadd.f32 0.0, %v2022
      %v2024 = vpop.f32.mrb[0].mxu0
      %v2025 = vpop.f32.mrb[0].mxu0
      %v2026 = vadd.f32 0.0, %v2025
      %v2027 = vpop.f32.mrb[0].mxu0
      %2028 = vmatprep.mubr.bf16.mxu0 0
      %2029 = vmatmul.mubr.bf16.gmra.mrb[0].mxu0 %v1938
      %v2030 = vpop.f32.mrb[0].mxu0
      %v2031 = vadd.f32 0.0, %v2030
      %v2032 = vpop.f32.mrb[0].mxu0
      %v2033 = vpop.f32.mrb[0].mxu0
      %v2034 = vadd.f32 0.0, %v2033
      %v2035 = vpop.f32.mrb[0].mxu0
      %2036 = vmatprep.mubr.bf16.mxu0 0
      %2037 = vmatmul.mubr.bf16.gmra.mrb[0].mxu0 %v1941
      %v2038 = vpop.f32.mrb[0].mxu0
      %v2039 = vadd.f32 0.0, %v2038
      %v2040 = vpop.f32.mrb[0].mxu0
      %v2041 = vpop.f32.mrb[0].mxu0
      %v2042 = vadd.f32 0.0, %v2041
      %v2043 = vpop.f32.mrb[0].mxu0
      %2044 = vmatprep.mubr.bf16.mxu0 0
      %2045 = vmatmul.mubr.bf16.gmra.mrb[0].mxu0 %v1944
      %v2046 = vpop.f32.mrb[0].mxu0
      %v2047 = vadd.f32 0.0, %v2046
      %v2048 = vpop.f32.mrb[0].mxu0
      %v2049 = vpop.f32.mrb[0].mxu0
      %v2050 = vadd.f32 0.0, %v2049
      %v2051 = vpop.f32.mrb[0].mxu0
      %2052 = vmatprep.mubr.bf16.mxu0 0
      %2053 = vmatmul.mubr.bf16.gmra.mrb[0].mxu0 %v1947
      %v2054 = vpop.f32.mrb[0].mxu0
      %v2055 = vadd.f32 0.0, %v2054
      %v2056 = vpop.f32.mrb[0].mxu0
      %v2057 = vpop.f32.mrb[0].mxu0
      %v2058 = vadd.f32 0.0, %v2057
      %v2059 = vpop.f32.mrb[0].mxu0
      %2060 = vmatprep.mubr.bf16.mxu0 0
      %2061 = vmatmul.mubr.bf16.gmra.mrb[0].mxu0 %v1950
      %v2062 = vpop.f32.mrb[0].mxu0
      %v2063 = vadd.f32 0.0, %v2062
      %v2064 = vpop.f32.mrb[0].mxu0
      %v2065 = vpop.f32.mrb[0].mxu0
      %v2066 = vadd.f32 0.0, %v2065
      %v2067 = vpop.f32.mrb[0].mxu0
      %2068 = vmatprep.mubr.bf16.mxu0 0
      %2069 = vmatmul.mubr.bf16.gmra.mrb[0].mxu0 %v1953
      %v2070 = vpop.f32.mrb[0].mxu0
      %v2071 = vadd.f32 0.0, %v2070
      %v2072 = vpop.f32.mrb[0].mxu0
      %v2073 = vpop.f32.mrb[0].mxu0
      %v2074 = vadd.f32 0.0, %v2073
      %v2075 = vpop.f32.mrb[0].mxu0
      %2076 = vmatprep.mubr.bf16.mxu0 0
      %2077 = vmatmul.mubr.bf16.gmra.mrb[0].mxu0 %v1956
      %v2078 = vpop.f32.mrb[0].mxu0
      %v2079 = vadd.f32 0.0, %v2078
      %v2080 = vpop.f32.mrb[0].mxu0
      %v2081 = vpop.f32.mrb[0].mxu0
      %v2082 = vadd.f32 0.0, %v2081
      %v2083 = vpop.f32.mrb[0].mxu0
      %2084 = vmatprep.mubr.bf16.mxu0 0
      %2085 = vmatmul.mubr.bf16.gmra.mrb[0].mxu0 %v1959
      %v2086 = vpop.f32.mrb[0].mxu0
      %v2087 = vadd.f32 0.0, %v2086
      %v2088 = vpop.f32.mrb[0].mxu0
      %v2089 = vpop.f32.mrb[0].mxu0
      %v2090 = vadd.f32 0.0, %v2089
      %v2091 = vpop.f32.mrb[0].mxu0
      %2092 = vmatprep.mubr.bf16.mxu0 0
      %2093 = vmatmul.mubr.bf16.gmra.mrb[0].mxu0 %v1962
      %v2094 = vpop.f32.mrb[0].mxu0
      %v2095 = vadd.f32 0.0, %v2094
      %v2096 = vpop.f32.mrb[0].mxu0
      %v2097 = vpop.f32.mrb[0].mxu0
      %v2098 = vadd.f32 0.0, %v2097
      %v2099 = vpop.f32.mrb[0].mxu0
      %2100 = vmatprep.mubr.bf16.mxu0 0
      %2101 = vmatmul.mubr.bf16.gmra.mrb[0].mxu0 %v1965
      %v2102 = vpop.f32.mrb[0].mxu0
      %v2103 = vadd.f32 0.0, %v2102
      %v2104 = vpop.f32.mrb[0].mxu0
      %v2105 = vpop.f32.mrb[0].mxu0
      %v2106 = vadd.f32 0.0, %v2105
      %v2107 = vpop.f32.mrb[0].mxu0
      %2108 = vmatprep.mubr.bf16.mxu0 0
      %2109 = vmatmul.mubr.bf16.gmra.mrb[0].mxu0 %v1968
      %v2110 = vpop.f32.mrb[0].mxu0
      %v2111 = vadd.f32 0.0, %v2110
      %v2112 = vpop.f32.mrb[0].mxu0
      %v2113 = vpop.f32.mrb[0].mxu0
      %v2114 = vadd.f32 0.0, %v2113
      %v2115 = vpop.f32.mrb[0].mxu0
      %2116 = vmatprep.mubr.bf16.mxu0 0
      %2117 = vmatmul.mubr.bf16.gmra.mrb[0].mxu0 %v1971
      %v2118 = vpop.f32.mrb[0].mxu0
      %v2119 = vadd.f32 0.0, %v2118
      %v2120 = vpop.f32.mrb[0].mxu0
      %v2121 = vpop.f32.mrb[0].mxu0
      %v2122 = vadd.f32 0.0, %v2121
      %v2123 = vpop.f32.mrb[0].mxu0
      %2124 = vmatprep.mubr.bf16.mxu0 0
      %2125 = vmatmul.mubr.bf16.gmra.mrb[0].mxu0 %v1974
      %v2126 = vpop.f32.mrb[0].mxu0
      %v2127 = vadd.f32 0.0, %v2126
      %v2128 = vpop.f32.mrb[0].mxu0
      %v2129 = vpop.f32.mrb[0].mxu0
      %v2130 = vadd.f32 0.0, %v2129
      %v2131 = vpop.f32.mrb[0].mxu0
      %2132 = vmatprep.mubr.bf16.mxu0 0
      %2133 = vmatmul.mubr.bf16.gmra.mrb[0].mxu0 %v1977
      %v2134 = vpop.f32.mrb[0].mxu0
      %v2135 = vadd.f32 0.0, %v2134
      %v2136 = vpop.f32.mrb[0].mxu0
      %v2137 = vpop.f32.mrb[0].mxu0
      %v2138 = vadd.f32 0.0, %v2137
      %v2139 = vpop.f32.mrb[0].mxu0
      %2140 = vmatprep.mubr.bf16.mxu0 0
      %2141 = vmatmul.mubr.bf16.gmra.mrb[0].mxu0 %v1980
      %v2142 = vpop.f32.mrb[0].mxu0
      %v2143 = vadd.f32 0.0, %v2142
      %v2144 = vpop.f32.mrb[0].mxu0
      %v2145 = vpop.f32.mrb[0].mxu0
      %v2146 = vadd.f32 0.0, %v2145
      %v2147 = vpop.f32.mrb[0].mxu0
      %2148 = vmatprep.mubr.bf16.mxu0 0
      %2149 = vmatmul.mubr.bf16.gmra.mrb[0].mxu0 %v1983
      %v2150 = vpop.f32.mrb[0].mxu0
      %v2151 = vadd.f32 0.0, %v2150
      %v2152 = vpop.f32.mrb[0].mxu0
      %v2153 = vpop.f32.mrb[0].mxu0
      %v2154 = vadd.f32 0.0, %v2153
      %v2155 = vpop.f32.mrb[0].mxu0
      %2156 = vdwg.mxu0
      %v2157 = vadd.f32 %v1862, %v2023
      %v2158 = vadd.f32 %v1863, %v2026
      %v2159 = vadd.f32 %v1864, %v2031
      %v2160 = vadd.f32 %v1865, %v2034
      %v2161 = vadd.f32 %v1866, %v2039
      %v2162 = vadd.f32 %v1867, %v2042
      %v2163 = vadd.f32 %v1868, %v2047
      %v2164 = vadd.f32 %v1869, %v2050
      %v2165 = vadd.f32 %v1870, %v2055
      %v2166 = vadd.f32 %v1871, %v2058
      %v2167 = vadd.f32 %v1872, %v2063
      %v2168 = vadd.f32 %v1873, %v2066
      %v2169 = vadd.f32 %v1874, %v2071
      %v2170 = vadd.f32 %v1875, %v2074
      %v2171 = vadd.f32 %v1876, %v2079
      %v2172 = vadd.f32 %v1877, %v2082
      %v2173 = vadd.f32 %v1878, %v2087
      %v2174 = vadd.f32 %v1879, %v2090
      %v2175 = vadd.f32 %v1880, %v2095
      %v2176 = vadd.f32 %v1881, %v2098
      %v2177 = vadd.f32 %v1882, %v2103
      %v2178 = vadd.f32 %v1883, %v2106
      %v2179 = vadd.f32 %v1884, %v2111
      %v2180 = vadd.f32 %v1885, %v2114
      %v2181 = vadd.f32 %v1886, %v2119
      %v2182 = vadd.f32 %v1887, %v2122
      %v2183 = vadd.f32 %v1888, %v2127
      %v2184 = vadd.f32 %v1889, %v2130
      %v2185 = vadd.f32 %v1890, %v2135
      %v2186 = vadd.f32 %v1891, %v2138
      %v2187 = vadd.f32 %v1892, %v2143
      %v2188 = vadd.f32 %v1893, %v2146
      %v2189 = vadd.f32 %v1894, %v2151
      %v2190 = vadd.f32 %v1895, %v2154
      %s2191 = scalar_lea.vmem %s2, 12
      %v2192 = vld [vmem:[%s2191] sm:$0x3]
      %v2193 = vrot.slane %v460, 2
      %v2194 = vsel %vm1898, %v1932, %v2193
      %v2195 = vrot.slane %v461, 2
      %v2196 = vsel %vm1898, %v2193, %v2195
      %v2198 = vsel %vm606, %v2194, 0
      %v2201 = vsel %vm606, %v2196, 0
      %v2204 = vand.u32 %v2192, %v661
      %2206 = vmatprep.subr.bf16.mxu0 0
      %2207 = vmatpush1.bf16.msra.mxu0 %v2204
      %2208 = vmatprep.subr.bf16.mxu0 0
      %2209 = vmatpush1.bf16.msra.mxu0 0
      %2210 = vmatprep.subr.bf16.mxu0 0
      %2211 = vmatpush1.bf16.msra.mxu0 0
      %2212 = vmatprep.subr.bf16.mxu0 0
      %2213 = vmatpush1.bf16.msra.mxu0 0
      %2214 = vmatprep.subr.bf16.mxu0 0
      %2215 = vmatpush1.bf16.msra.mxu0 0
      %2216 = vmatprep.subr.bf16.mxu0 0
      %2217 = vmatpush1.bf16.msra.mxu0 0
      %2218 = vmatprep.subr.bf16.mxu0 0
      %2219 = vmatpush1.bf16.msra.mxu0 0
      %2220 = vmatprep.subr.bf16.mxu0 0
      %2221 = vmatpush1.bf16.msra.mxu0 0
      %2222 = vmatprep.subr.bf16.mxu0 0
      %2223 = vmatpush1.bf16.msra.mxu0 0
      %2224 = vmatprep.subr.bf16.mxu0 0
      %2225 = vmatpush1.bf16.msra.mxu0 0
      %2226 = vmatprep.subr.bf16.mxu0 0
      %2227 = vmatpush1.bf16.msra.mxu0 0
      %2228 = vmatprep.subr.bf16.mxu0 0
      %2229 = vmatpush1.bf16.msra.mxu0 0
      %2230 = vmatprep.subr.bf16.mxu0 0
      %2231 = vmatpush1.bf16.msra.mxu0 0
      %2232 = vmatprep.subr.bf16.mxu0 0
      %2233 = vmatpush1.bf16.msra.mxu0 0
      %2234 = vmatprep.subr.bf16.mxu0 0
      %2235 = vmatpush1.bf16.msra.mxu0 0
      %2236 = vmatprep.subr.bf16.mxu0 0
      %2237 = vmatpush1.bf16.msra.mxu0 0
      %2238 = vmatprep.mubr.bf16.mxu0 0
      %2239 = vmatmul.mubr.bf16.gmra.mrb[0].mxu0 %v1941
      %v2240 = vpop.f32.mrb[0].mxu0
      %v2241 = vadd.f32 0.0, %v2240
      %v2242 = vpop.f32.mrb[0].mxu0
      %v2243 = vpop.f32.mrb[0].mxu0
      %v2244 = vadd.f32 0.0, %v2243
      %v2245 = vpop.f32.mrb[0].mxu0
      %2246 = vmatprep.mubr.bf16.mxu0 0
      %2247 = vmatmul.mubr.bf16.gmra.mrb[0].mxu0 %v1944
      %v2248 = vpop.f32.mrb[0].mxu0
      %v2249 = vadd.f32 0.0, %v2248
      %v2250 = vpop.f32.mrb[0].mxu0
      %v2251 = vpop.f32.mrb[0].mxu0
      %v2252 = vadd.f32 0.0, %v2251
      %v2253 = vpop.f32.mrb[0].mxu0
      %2254 = vmatprep.mubr.bf16.mxu0 0
      %2255 = vmatmul.mubr.bf16.gmra.mrb[0].mxu0 %v1947
      %v2256 = vpop.f32.mrb[0].mxu0
      %v2257 = vadd.f32 0.0, %v2256
      %v2258 = vpop.f32.mrb[0].mxu0
      %v2259 = vpop.f32.mrb[0].mxu0
      %v2260 = vadd.f32 0.0, %v2259
      %v2261 = vpop.f32.mrb[0].mxu0
      %2262 = vmatprep.mubr.bf16.mxu0 0
      %2263 = vmatmul.mubr.bf16.gmra.mrb[0].mxu0 %v1950
      %v2264 = vpop.f32.mrb[0].mxu0
      %v2265 = vadd.f32 0.0, %v2264
      %v2266 = vpop.f32.mrb[0].mxu0
      %v2267 = vpop.f32.mrb[0].mxu0
      %v2268 = vadd.f32 0.0, %v2267
      %v2269 = vpop.f32.mrb[0].mxu0
      %2270 = vmatprep.mubr.bf16.mxu0 0
      %2271 = vmatmul.mubr.bf16.gmra.mrb[0].mxu0 %v1953
      %v2272 = vpop.f32.mrb[0].mxu0
      %v2273 = vadd.f32 0.0, %v2272
      %v2274 = vpop.f32.mrb[0].mxu0
      %v2275 = vpop.f32.mrb[0].mxu0
      %v2276 = vadd.f32 0.0, %v2275
      %v2277 = vpop.f32.mrb[0].mxu0
      %2278 = vmatprep.mubr.bf16.mxu0 0
      %2279 = vmatmul.mubr.bf16.gmra.mrb[0].mxu0 %v1956
      %v2280 = vpop.f32.mrb[0].mxu0
      %v2281 = vadd.f32 0.0, %v2280
      %v2282 = vpop.f32.mrb[0].mxu0
      %v2283 = vpop.f32.mrb[0].mxu0
      %v2284 = vadd.f32 0.0, %v2283
      %v2285 = vpop.f32.mrb[0].mxu0
      %2286 = vmatprep.mubr.bf16.mxu0 0
      %2287 = vmatmul.mubr.bf16.gmra.mrb[0].mxu0 %v1959
      %v2288 = vpop.f32.mrb[0].mxu0
      %v2289 = vadd.f32 0.0, %v2288
      %v2290 = vpop.f32.mrb[0].mxu0
      %v2291 = vpop.f32.mrb[0].mxu0
      %v2292 = vadd.f32 0.0, %v2291
      %v2293 = vpop.f32.mrb[0].mxu0
      %2294 = vmatprep.mubr.bf16.mxu0 0
      %2295 = vmatmul.mubr.bf16.gmra.mrb[0].mxu0 %v1962
      %v2296 = vpop.f32.mrb[0].mxu0
      %v2297 = vadd.f32 0.0, %v2296
      %v2298 = vpop.f32.mrb[0].mxu0
      %v2299 = vpop.f32.mrb[0].mxu0
      %v2300 = vadd.f32 0.0, %v2299
      %v2301 = vpop.f32.mrb[0].mxu0
      %2302 = vmatprep.mubr.bf16.mxu0 0
      %2303 = vmatmul.mubr.bf16.gmra.mrb[0].mxu0 %v1965
      %v2304 = vpop.f32.mrb[0].mxu0
      %v2305 = vadd.f32 0.0, %v2304
      %v2306 = vpop.f32.mrb[0].mxu0
      %v2307 = vpop.f32.mrb[0].mxu0
      %v2308 = vadd.f32 0.0, %v2307
      %v2309 = vpop.f32.mrb[0].mxu0
      %2310 = vmatprep.mubr.bf16.mxu0 0
      %2311 = vmatmul.mubr.bf16.gmra.mrb[0].mxu0 %v1968
      %v2312 = vpop.f32.mrb[0].mxu0
      %v2313 = vadd.f32 0.0, %v2312
      %v2314 = vpop.f32.mrb[0].mxu0
      %v2315 = vpop.f32.mrb[0].mxu0
      %v2316 = vadd.f32 0.0, %v2315
      %v2317 = vpop.f32.mrb[0].mxu0
      %2318 = vmatprep.mubr.bf16.mxu0 0
      %2319 = vmatmul.mubr.bf16.gmra.mrb[0].mxu0 %v1971
      %v2320 = vpop.f32.mrb[0].mxu0
      %v2321 = vadd.f32 0.0, %v2320
      %v2322 = vpop.f32.mrb[0].mxu0
      %v2323 = vpop.f32.mrb[0].mxu0
      %v2324 = vadd.f32 0.0, %v2323
      %v2325 = vpop.f32.mrb[0].mxu0
      %2326 = vmatprep.mubr.bf16.mxu0 0
      %2327 = vmatmul.mubr.bf16.gmra.mrb[0].mxu0 %v1974
      %v2328 = vpop.f32.mrb[0].mxu0
      %v2329 = vadd.f32 0.0, %v2328
      %v2330 = vpop.f32.mrb[0].mxu0
      %v2331 = vpop.f32.mrb[0].mxu0
      %v2332 = vadd.f32 0.0, %v2331
      %v2333 = vpop.f32.mrb[0].mxu0
      %2334 = vmatprep.mubr.bf16.mxu0 0
      %2335 = vmatmul.mubr.bf16.gmra.mrb[0].mxu0 %v1977
      %v2336 = vpop.f32.mrb[0].mxu0
      %v2337 = vadd.f32 0.0, %v2336
      %v2338 = vpop.f32.mrb[0].mxu0
      %v2339 = vpop.f32.mrb[0].mxu0
      %v2340 = vadd.f32 0.0, %v2339
      %v2341 = vpop.f32.mrb[0].mxu0
      %2342 = vmatprep.mubr.bf16.mxu0 0
      %2343 = vmatmul.mubr.bf16.gmra.mrb[0].mxu0 %v1980
      %v2344 = vpop.f32.mrb[0].mxu0
      %v2345 = vadd.f32 0.0, %v2344
      %v2346 = vpop.f32.mrb[0].mxu0
      %v2347 = vpop.f32.mrb[0].mxu0
      %v2348 = vadd.f32 0.0, %v2347
      %v2349 = vpop.f32.mrb[0].mxu0
      %2350 = vmatprep.mubr.bf16.mxu0 0
      %2351 = vmatmul.mubr.bf16.gmra.mrb[0].mxu0 %v1983
      %v2352 = vpop.f32.mrb[0].mxu0
      %v2353 = vadd.f32 0.0, %v2352
      %v2354 = vpop.f32.mrb[0].mxu0
      %v2355 = vpop.f32.mrb[0].mxu0
      %v2356 = vadd.f32 0.0, %v2355
      %v2357 = vpop.f32.mrb[0].mxu0
      %2358 = vmatprep.mubr.bf16.mxu0 0
      %2359 = vmatmul.mubr.bf16.gmra.mrb[0].mxu0 %v2198
      %v2360 = vpop.f32.mrb[0].mxu0
      %v2361 = vadd.f32 0.0, %v2360
      %v2362 = vpop.f32.mrb[0].mxu0
      %v2363 = vpop.f32.mrb[0].mxu0
      %v2364 = vadd.f32 0.0, %v2363
      %v2365 = vpop.f32.mrb[0].mxu0
      %2366 = vmatprep.mubr.bf16.mxu0 0
      %2367 = vmatmul.mubr.bf16.gmra.mrb[0].mxu0 %v2201
      %v2368 = vpop.f32.mrb[0].mxu0
      %v2369 = vadd.f32 0.0, %v2368
      %v2370 = vpop.f32.mrb[0].mxu0
      %v2371 = vpop.f32.mrb[0].mxu0
      %v2372 = vadd.f32 0.0, %v2371
      %v2373 = vpop.f32.mrb[0].mxu0
      %2374 = vdwg.mxu0
      %v2375 = vadd.f32 %v2157, %v2241
      %v2376 = vadd.f32 %v2158, %v2244
      %v2377 = vadd.f32 %v2159, %v2249
      %v2378 = vadd.f32 %v2160, %v2252
      %v2379 = vadd.f32 %v2161, %v2257
      %v2380 = vadd.f32 %v2162, %v2260
      %v2381 = vadd.f32 %v2163, %v2265
      %v2382 = vadd.f32 %v2164, %v2268
      %v2383 = vadd.f32 %v2165, %v2273
      %v2384 = vadd.f32 %v2166, %v2276
      %v2385 = vadd.f32 %v2167, %v2281
      %v2386 = vadd.f32 %v2168, %v2284
      %v2387 = vadd.f32 %v2169, %v2289
      %v2388 = vadd.f32 %v2170, %v2292
      %v2389 = vadd.f32 %v2171, %v2297
      %v2390 = vadd.f32 %v2172, %v2300
      %v2391 = vadd.f32 %v2173, %v2305
      %v2392 = vadd.f32 %v2174, %v2308
      %v2393 = vadd.f32 %v2175, %v2313
      %v2394 = vadd.f32 %v2176, %v2316
      %v2395 = vadd.f32 %v2177, %v2321
      %v2396 = vadd.f32 %v2178, %v2324
      %v2397 = vadd.f32 %v2179, %v2329
      %v2398 = vadd.f32 %v2180, %v2332
      %v2399 = vadd.f32 %v2181, %v2337
      %v2400 = vadd.f32 %v2182, %v2340
      %v2401 = vadd.f32 %v2183, %v2345
      %v2402 = vadd.f32 %v2184, %v2348
      %v2403 = vadd.f32 %v2185, %v2353
      %v2404 = vadd.f32 %v2186, %v2356
      %v2405 = vadd.f32 %v2187, %v2361
      %v2406 = vadd.f32 %v2188, %v2364
      %v2407 = vadd.f32 %v2189, %v2369
      %v2408 = vadd.f32 %v2190, %v2372
      %s2409 = scalar_lea.vmem %s2, 14
      %v2410 = vld [vmem:[%s2409] sm:$0x3]
      %vm2411 = vsmask.f32 5376
      %v2412 = vrot.slane %v502, 2
      %v2413 = vrot.slane %v498, 3
      %v2414 = vor.u32 %v2412, %v2413
      %v2415 = vrot.slane %v510, 2
      %v2416 = vrot.slane %v506, 3
      %v2417 = vor.u32 %v2415, %v2416
      %v2418 = vsel %vm2411, %v2414, %v2417
      %v2419 = vrot.slane %v518, 2
      %v2420 = vrot.slane %v514, 3
      %v2421 = vor.u32 %v2419, %v2420
      %v2422 = vsel %vm2411, %v2417, %v2421
      %v2423 = vrot.slane %v526, 2
      %v2424 = vrot.slane %v522, 3
      %v2425 = vor.u32 %v2423, %v2424
      %v2426 = vsel %vm2411, %v2421, %v2425
      %v2427 = vrot.slane %v534, 2
      %v2428 = vrot.slane %v530, 3
      %v2429 = vor.u32 %v2427, %v2428
      %v2430 = vsel %vm2411, %v2425, %v2429
      %v2431 = vrot.slane %v542, 2
      %v2432 = vrot.slane %v538, 3
      %v2433 = vor.u32 %v2431, %v2432
      %v2434 = vsel %vm2411, %v2429, %v2433
      %v2435 = vrot.slane %v550, 2
      %v2436 = vrot.slane %v546, 3
      %v2437 = vor.u32 %v2435, %v2436
      %v2438 = vsel %vm2411, %v2433, %v2437
      %v2439 = vrot.slane %v558, 2
      %v2440 = vrot.slane %v554, 3
      %v2441 = vor.u32 %v2439, %v2440
      %v2442 = vsel %vm2411, %v2437, %v2441
      %v2443 = vrot.slane %v566, 2
      %v2444 = vrot.slane %v562, 3
      %v2445 = vor.u32 %v2443, %v2444
      %v2446 = vsel %vm2411, %v2441, %v2445
      %v2447 = vrot.slane %v574, 2
      %v2448 = vrot.slane %v570, 3
      %v2449 = vor.u32 %v2447, %v2448
      %v2450 = vsel %vm2411, %v2445, %v2449
      %v2451 = vrot.slane %v582, 2
      %v2452 = vrot.slane %v578, 3
      %v2453 = vor.u32 %v2451, %v2452
      %v2454 = vsel %vm2411, %v2449, %v2453
      %v2455 = vrot.slane %v590, 2
      %v2456 = vrot.slane %v586, 3
      %v2457 = vor.u32 %v2455, %v2456
      %v2458 = vsel %vm2411, %v2453, %v2457
      %v2459 = vrot.slane %v598, 2
      %v2460 = vrot.slane %v594, 3
      %v2461 = vor.u32 %v2459, %v2460
      %v2462 = vsel %vm2411, %v2457, %v2461
      %v2463 = vrot.slane %v1615, 2
      %v2464 = vrot.slane %v602, 3
      %v2465 = vor.u32 %v2463, %v2464
      %v2466 = vsel %vm2411, %v2461, %v2465
      %v2467 = vrot.slane %v1622, 2
      %v2468 = vrot.slane %v1625, 3
      %v2469 = vor.u32 %v2467, %v2468
      %v2470 = vsel %vm2411, %v2465, %v2469
      %v2471 = vrot.slane %v1631, 2
      %v2472 = vrot.slane %v1634, 3
      %v2473 = vor.u32 %v2471, %v2472
      %v2474 = vsel %vm2411, %v2469, %v2473
      %v2476 = vshrl.u32 %v460, 16
      %v2478 = vrot.slane %v2476, 2
      %v2479 = vshll.u32 %v460, 16
      %v2481 = vrot.slane %v2479, 3
      %v2482 = vor.u32 %v2478, %v2481
      %v2483 = vsel %vm2411, %v2473, %v2482
      %v2485 = vshrl.u32 %v461, 16
      %v2487 = vrot.slane %v2485, 2
      %v2488 = vshll.u32 %v461, 16
      %v2490 = vrot.slane %v2488, 3
      %v2491 = vor.u32 %v2487, %v2490
      %v2492 = vsel %vm2411, %v2482, %v2491
      %v2494 = vsel %vm606, %v2418, 0
      %v2497 = vsel %vm606, %v2422, 0
      %v2500 = vsel %vm606, %v2426, 0
      %v2503 = vsel %vm606, %v2430, 0
      %v2506 = vsel %vm606, %v2434, 0
      %v2509 = vsel %vm606, %v2438, 0
      %v2512 = vsel %vm606, %v2442, 0
      %v2515 = vsel %vm606, %v2446, 0
      %v2518 = vsel %vm606, %v2450, 0
      %v2521 = vsel %vm606, %v2454, 0
      %v2524 = vsel %vm606, %v2458, 0
      %v2527 = vsel %vm606, %v2462, 0
      %v2530 = vsel %vm606, %v2466, 0
      %v2533 = vsel %vm606, %v2470, 0
      %v2536 = vsel %vm606, %v2474, 0
      %v2539 = vsel %vm606, %v2483, 0
      %v2542 = vsel %vm606, %v2492, 0
      %v2545 = vand.u32 %v2410, %v661
      %2547 = vmatprep.subr.bf16.mxu0 0
      %2548 = vmatpush1.bf16.msra.mxu0 %v2545
      %2549 = vmatprep.subr.bf16.mxu0 0
      %2550 = vmatpush1.bf16.msra.mxu0 0
      %2551 = vmatprep.subr.bf16.mxu0 0
      %2552 = vmatpush1.bf16.msra.mxu0 0
      %2553 = vmatprep.subr.bf16.mxu0 0
      %2554 = vmatpush1.bf16.msra.mxu0 0
      %2555 = vmatprep.subr.bf16.mxu0 0
      %2556 = vmatpush1.bf16.msra.mxu0 0
      %2557 = vmatprep.subr.bf16.mxu0 0
      %2558 = vmatpush1.bf16.msra.mxu0 0
      %2559 = vmatprep.subr.bf16.mxu0 0
      %2560 = vmatpush1.bf16.msra.mxu0 0
      %2561 = vmatprep.subr.bf16.mxu0 0
      %2562 = vmatpush1.bf16.msra.mxu0 0
      %2563 = vmatprep.subr.bf16.mxu0 0
      %2564 = vmatpush1.bf16.msra.mxu0 0
      %2565 = vmatprep.subr.bf16.mxu0 0
      %2566 = vmatpush1.bf16.msra.mxu0 0
      %2567 = vmatprep.subr.bf16.mxu0 0
      %2568 = vmatpush1.bf16.msra.mxu0 0
      %2569 = vmatprep.subr.bf16.mxu0 0
      %2570 = vmatpush1.bf16.msra.mxu0 0
      %2571 = vmatprep.subr.bf16.mxu0 0
      %2572 = vmatpush1.bf16.msra.mxu0 0
      %2573 = vmatprep.subr.bf16.mxu0 0
      %2574 = vmatpush1.bf16.msra.mxu0 0
      %2575 = vmatprep.subr.bf16.mxu0 0
      %2576 = vmatpush1.bf16.msra.mxu0 0
      %2577 = vmatprep.subr.bf16.mxu0 0
      %2578 = vmatpush1.bf16.msra.mxu0 0
      %2579 = vmatprep.mubr.bf16.mxu0 0
      %2580 = vmatmul.mubr.bf16.gmra.mrb[0].mxu0 %v2494
      %v2581 = vpop.f32.mrb[0].mxu0
      %v2582 = vadd.f32 0.0, %v2581
      %v2583 = vpop.f32.mrb[0].mxu0
      %v2584 = vpop.f32.mrb[0].mxu0
      %v2585 = vadd.f32 0.0, %v2584
      %v2586 = vpop.f32.mrb[0].mxu0
      %2587 = vmatprep.mubr.bf16.mxu0 0
      %2588 = vmatmul.mubr.bf16.gmra.mrb[0].mxu0 %v2497
      %v2589 = vpop.f32.mrb[0].mxu0
      %v2590 = vadd.f32 0.0, %v2589
      %v2591 = vpop.f32.mrb[0].mxu0
      %v2592 = vpop.f32.mrb[0].mxu0
      %v2593 = vadd.f32 0.0, %v2592
      %v2594 = vpop.f32.mrb[0].mxu0
      %2595 = vmatprep.mubr.bf16.mxu0 0
      %2596 = vmatmul.mubr.bf16.gmra.mrb[0].mxu0 %v2500
      %v2597 = vpop.f32.mrb[0].mxu0
      %v2598 = vadd.f32 0.0, %v2597
      %v2599 = vpop.f32.mrb[0].mxu0
      %v2600 = vpop.f32.mrb[0].mxu0
      %v2601 = vadd.f32 0.0, %v2600
      %v2602 = vpop.f32.mrb[0].mxu0
      %2603 = vmatprep.mubr.bf16.mxu0 0
      %2604 = vmatmul.mubr.bf16.gmra.mrb[0].mxu0 %v2503
      %v2605 = vpop.f32.mrb[0].mxu0
      %v2606 = vadd.f32 0.0, %v2605
      %v2607 = vpop.f32.mrb[0].mxu0
      %v2608 = vpop.f32.mrb[0].mxu0
      %v2609 = vadd.f32 0.0, %v2608
      %v2610 = vpop.f32.mrb[0].mxu0
      %2611 = vmatprep.mubr.bf16.mxu0 0
      %2612 = vmatmul.mubr.bf16.gmra.mrb[0].mxu0 %v2506
      %v2613 = vpop.f32.mrb[0].mxu0
      %v2614 = vadd.f32 0.0, %v2613
      %v2615 = vpop.f32.mrb[0].mxu0
      %v2616 = vpop.f32.mrb[0].mxu0
      %v2617 = vadd.f32 0.0, %v2616
      %v2618 = vpop.f32.mrb[0].mxu0
      %2619 = vmatprep.mubr.bf16.mxu0 0
      %2620 = vmatmul.mubr.bf16.gmra.mrb[0].mxu0 %v2509
      %v2621 = vpop.f32.mrb[0].mxu0
      %v2622 = vadd.f32 0.0, %v2621
      %v2623 = vpop.f32.mrb[0].mxu0
      %v2624 = vpop.f32.mrb[0].mxu0
      %v2625 = vadd.f32 0.0, %v2624
      %v2626 = vpop.f32.mrb[0].mxu0
      %2627 = vmatprep.mubr.bf16.mxu0 0
      %2628 = vmatmul.mubr.bf16.gmra.mrb[0].mxu0 %v2512
      %v2629 = vpop.f32.mrb[0].mxu0
      %v2630 = vadd.f32 0.0, %v2629
      %v2631 = vpop.f32.mrb[0].mxu0
      %v2632 = vpop.f32.mrb[0].mxu0
      %v2633 = vadd.f32 0.0, %v2632
      %v2634 = vpop.f32.mrb[0].mxu0
      %2635 = vmatprep.mubr.bf16.mxu0 0
      %2636 = vmatmul.mubr.bf16.gmra.mrb[0].mxu0 %v2515
      %v2637 = vpop.f32.mrb[0].mxu0
      %v2638 = vadd.f32 0.0, %v2637
      %v2639 = vpop.f32.mrb[0].mxu0
      %v2640 = vpop.f32.mrb[0].mxu0
      %v2641 = vadd.f32 0.0, %v2640
      %v2642 = vpop.f32.mrb[0].mxu0
      %2643 = vmatprep.mubr.bf16.mxu0 0
      %2644 = vmatmul.mubr.bf16.gmra.mrb[0].mxu0 %v2518
      %v2645 = vpop.f32.mrb[0].mxu0
      %v2646 = vadd.f32 0.0, %v2645
      %v2647 = vpop.f32.mrb[0].mxu0
      %v2648 = vpop.f32.mrb[0].mxu0
      %v2649 = vadd.f32 0.0, %v2648
      %v2650 = vpop.f32.mrb[0].mxu0
      %2651 = vmatprep.mubr.bf16.mxu0 0
      %2652 = vmatmul.mubr.bf16.gmra.mrb[0].mxu0 %v2521
      %v2653 = vpop.f32.mrb[0].mxu0
      %v2654 = vadd.f32 0.0, %v2653
      %v2655 = vpop.f32.mrb[0].mxu0
      %v2656 = vpop.f32.mrb[0].mxu0
      %v2657 = vadd.f32 0.0, %v2656
      %v2658 = vpop.f32.mrb[0].mxu0
      %2659 = vmatprep.mubr.bf16.mxu0 0
      %2660 = vmatmul.mubr.bf16.gmra.mrb[0].mxu0 %v2524
      %v2661 = vpop.f32.mrb[0].mxu0
      %v2662 = vadd.f32 0.0, %v2661
      %v2663 = vpop.f32.mrb[0].mxu0
      %v2664 = vpop.f32.mrb[0].mxu0
      %v2665 = vadd.f32 0.0, %v2664
      %v2666 = vpop.f32.mrb[0].mxu0
      %2667 = vmatprep.mubr.bf16.mxu0 0
      %2668 = vmatmul.mubr.bf16.gmra.mrb[0].mxu0 %v2527
      %v2669 = vpop.f32.mrb[0].mxu0
      %v2670 = vadd.f32 0.0, %v2669
      %v2671 = vpop.f32.mrb[0].mxu0
      %v2672 = vpop.f32.mrb[0].mxu0
      %v2673 = vadd.f32 0.0, %v2672
      %v2674 = vpop.f32.mrb[0].mxu0
      %2675 = vmatprep.mubr.bf16.mxu0 0
      %2676 = vmatmul.mubr.bf16.gmra.mrb[0].mxu0 %v2530
      %v2677 = vpop.f32.mrb[0].mxu0
      %v2678 = vadd.f32 0.0, %v2677
      %v2679 = vpop.f32.mrb[0].mxu0
      %v2680 = vpop.f32.mrb[0].mxu0
      %v2681 = vadd.f32 0.0, %v2680
      %v2682 = vpop.f32.mrb[0].mxu0
      %2683 = vmatprep.mubr.bf16.mxu0 0
      %2684 = vmatmul.mubr.bf16.gmra.mrb[0].mxu0 %v2533
      %v2685 = vpop.f32.mrb[0].mxu0
      %v2686 = vadd.f32 0.0, %v2685
      %v2687 = vpop.f32.mrb[0].mxu0
      %v2688 = vpop.f32.mrb[0].mxu0
      %v2689 = vadd.f32 0.0, %v2688
      %v2690 = vpop.f32.mrb[0].mxu0
      %2691 = vmatprep.mubr.bf16.mxu0 0
      %2692 = vmatmul.mubr.bf16.gmra.mrb[0].mxu0 %v2536
      %v2693 = vpop.f32.mrb[0].mxu0
      %v2694 = vadd.f32 0.0, %v2693
      %v2695 = vpop.f32.mrb[0].mxu0
      %v2696 = vpop.f32.mrb[0].mxu0
      %v2697 = vadd.f32 0.0, %v2696
      %v2698 = vpop.f32.mrb[0].mxu0
      %2699 = vmatprep.mubr.bf16.mxu0 0
      %2700 = vmatmul.mubr.bf16.gmra.mrb[0].mxu0 %v2539
      %v2701 = vpop.f32.mrb[0].mxu0
      %v2702 = vadd.f32 0.0, %v2701
      %v2703 = vpop.f32.mrb[0].mxu0
      %v2704 = vpop.f32.mrb[0].mxu0
      %v2705 = vadd.f32 0.0, %v2704
      %v2706 = vpop.f32.mrb[0].mxu0
      %2707 = vmatprep.mubr.bf16.mxu0 0
      %2708 = vmatmul.mubr.bf16.gmra.mrb[0].mxu0 %v2542
      %v2709 = vpop.f32.mrb[0].mxu0
      %v2710 = vadd.f32 0.0, %v2709
      %v2711 = vpop.f32.mrb[0].mxu0
      %v2712 = vpop.f32.mrb[0].mxu0
      %v2713 = vadd.f32 0.0, %v2712
      %v2714 = vpop.f32.mrb[0].mxu0
      %2715 = vdwg.mxu0
      %v2716 = vadd.f32 %v2375, %v2582
      %v2717 = vadd.f32 %v2376, %v2585
      %v2718 = vadd.f32 %v2377, %v2590
      %v2719 = vadd.f32 %v2378, %v2593
      %v2720 = vadd.f32 %v2379, %v2598
      %v2721 = vadd.f32 %v2380, %v2601
      %v2722 = vadd.f32 %v2381, %v2606
      %v2723 = vadd.f32 %v2382, %v2609
      %v2724 = vadd.f32 %v2383, %v2614
      %v2725 = vadd.f32 %v2384, %v2617
      %v2726 = vadd.f32 %v2385, %v2622
      %v2727 = vadd.f32 %v2386, %v2625
      %v2728 = vadd.f32 %v2387, %v2630
      %v2729 = vadd.f32 %v2388, %v2633
      %v2730 = vadd.f32 %v2389, %v2638
      %v2731 = vadd.f32 %v2390, %v2641
      %v2732 = vadd.f32 %v2391, %v2646
      %v2733 = vadd.f32 %v2392, %v2649
      %v2734 = vadd.f32 %v2393, %v2654
      %v2735 = vadd.f32 %v2394, %v2657
      %v2736 = vadd.f32 %v2395, %v2662
      %v2737 = vadd.f32 %v2396, %v2665
      %v2738 = vadd.f32 %v2397, %v2670
      %v2739 = vadd.f32 %v2398, %v2673
      %v2740 = vadd.f32 %v2399, %v2678
      %v2741 = vadd.f32 %v2400, %v2681
      %v2742 = vadd.f32 %v2401, %v2686
      %v2743 = vadd.f32 %v2402, %v2689
      %v2744 = vadd.f32 %v2403, %v2694
      %v2745 = vadd.f32 %v2404, %v2697
      %v2746 = vadd.f32 %v2405, %v2702
      %v2747 = vadd.f32 %v2406, %v2705
      %v2748 = vadd.f32 %v2407, %v2710
      %v2749 = vadd.f32 %v2408, %v2713
      %s2750 = scalar_lea.vmem %s2, 16
      %v2751 = vld [vmem:[%s2750] sm:$0x3]
      %vm2752 = vcmask 1044480
      %v2753 = vrot.slane %v424, 3
      %v2754 = vrot.slane %v425, 3
      %v2755 = vsel %vm2752, %v2753, %v2754
      %v2756 = vrot.slane %v426, 3
      %v2757 = vsel %vm2752, %v2754, %v2756
      %v2758 = vrot.slane %v427, 3
      %v2759 = vsel %vm2752, %v2756, %v2758
      %v2760 = vrot.slane %v428, 3
      %v2761 = vsel %vm2752, %v2758, %v2760
      %v2762 = vrot.slane %v429, 3
      %v2763 = vsel %vm2752, %v2760, %v2762
      %v2764 = vrot.slane %v430, 3
      %v2765 = vsel %vm2752, %v2762, %v2764
      %v2766 = vrot.slane %v431, 3
      %v2767 = vsel %vm2752, %v2764, %v2766
      %v2768 = vrot.slane %v432, 3
      %v2769 = vsel %vm2752, %v2766, %v2768
      %v2770 = vrot.slane %v433, 3
      %v2771 = vsel %vm2752, %v2768, %v2770
      %v2772 = vrot.slane %v434, 3
      %v2773 = vsel %vm2752, %v2770, %v2772
      %v2774 = vrot.slane %v435, 3
      %v2775 = vsel %vm2752, %v2772, %v2774
      %v2776 = vrot.slane %v436, 3
      %v2777 = vsel %vm2752, %v2774, %v2776
      %v2778 = vrot.slane %v457, 3
      %v2779 = vsel %vm2752, %v2776, %v2778
      %v2780 = vrot.slane %v458, 3
      %v2781 = vsel %vm2752, %v2778, %v2780
      %v2782 = vrot.slane %v459, 3
      %v2783 = vsel %vm2752, %v2780, %v2782
      %v2784 = vrot.slane %v460, 3
      %v2785 = vsel %vm2752, %v2782, %v2784
      %v2786 = vrot.slane %v461, 3
      %v2787 = vsel %vm2752, %v2784, %v2786
      %v2789 = vsel %vm606, %v2755, 0
      %v2792 = vsel %vm606, %v2757, 0
      %v2795 = vsel %vm606, %v2759, 0
      %v2798 = vsel %vm606, %v2761, 0
      %v2801 = vsel %vm606, %v2763, 0
      %v2804 = vsel %vm606, %v2765, 0
      %v2807 = vsel %vm606, %v2767, 0
      %v2810 = vsel %vm606, %v2769, 0
      %v2813 = vsel %vm606, %v2771, 0
      %v2816 = vsel %vm606, %v2773, 0
      %v2819 = vsel %vm606, %v2775, 0
      %v2822 = vsel %vm606, %v2777, 0
      %v2825 = vsel %vm606, %v2779, 0
      %v2828 = vsel %vm606, %v2781, 0
      %v2831 = vsel %vm606, %v2783, 0
      %v2834 = vsel %vm606, %v2785, 0
      %v2837 = vsel %vm606, %v2787, 0
      %v2840 = vand.u32 %v2751, %v661
      %2842 = vmatprep.subr.bf16.mxu0 0
      %2843 = vmatpush1.bf16.msra.mxu0 %v2840
      %2844 = vmatprep.subr.bf16.mxu0 0
      %2845 = vmatpush1.bf16.msra.mxu0 0
      %2846 = vmatprep.subr.bf16.mxu0 0
      %2847 = vmatpush1.bf16.msra.mxu0 0
      %2848 = vmatprep.subr.bf16.mxu0 0
      %2849 = vmatpush1.bf16.msra.mxu0 0
      %2850 = vmatprep.subr.bf16.mxu0 0
      %2851 = vmatpush1.bf16.msra.mxu0 0
      %2852 = vmatprep.subr.bf16.mxu0 0
      %2853 = vmatpush1.bf16.msra.mxu0 0
      %2854 = vmatprep.subr.bf16.mxu0 0
      %2855 = vmatpush1.bf16.msra.mxu0 0
      %2856 = vmatprep.subr.bf16.mxu0 0
      %2857 = vmatpush1.bf16.msra.mxu0 0
      %2858 = vmatprep.subr.bf16.mxu0 0
      %2859 = vmatpush1.bf16.msra.mxu0 0
      %2860 = vmatprep.subr.bf16.mxu0 0
      %2861 = vmatpush1.bf16.msra.mxu0 0
      %2862 = vmatprep.subr.bf16.mxu0 0
      %2863 = vmatpush1.bf16.msra.mxu0 0
      %2864 = vmatprep.subr.bf16.mxu0 0
      %2865 = vmatpush1.bf16.msra.mxu0 0
      %2866 = vmatprep.subr.bf16.mxu0 0
      %2867 = vmatpush1.bf16.msra.mxu0 0
      %2868 = vmatprep.subr.bf16.mxu0 0
      %2869 = vmatpush1.bf16.msra.mxu0 0
      %2870 = vmatprep.subr.bf16.mxu0 0
      %2871 = vmatpush1.bf16.msra.mxu0 0
      %2872 = vmatprep.subr.bf16.mxu0 0
      %2873 = vmatpush1.bf16.msra.mxu0 0
      %2874 = vmatprep.mubr.bf16.mxu0 0
      %2875 = vmatmul.mubr.bf16.gmra.mrb[0].mxu0 %v2789
      %v2876 = vpop.f32.mrb[0].mxu0
      %v2877 = vadd.f32 0.0, %v2876
      %v2878 = vpop.f32.mrb[0].mxu0
      %v2879 = vpop.f32.mrb[0].mxu0
      %v2880 = vadd.f32 0.0, %v2879
      %v2881 = vpop.f32.mrb[0].mxu0
      %2882 = vmatprep.mubr.bf16.mxu0 0
      %2883 = vmatmul.mubr.bf16.gmra.mrb[0].mxu0 %v2792
      %v2884 = vpop.f32.mrb[0].mxu0
      %v2885 = vadd.f32 0.0, %v2884
      %v2886 = vpop.f32.mrb[0].mxu0
      %v2887 = vpop.f32.mrb[0].mxu0
      %v2888 = vadd.f32 0.0, %v2887
      %v2889 = vpop.f32.mrb[0].mxu0
      %2890 = vmatprep.mubr.bf16.mxu0 0
      %2891 = vmatmul.mubr.bf16.gmra.mrb[0].mxu0 %v2795
      %v2892 = vpop.f32.mrb[0].mxu0
      %v2893 = vadd.f32 0.0, %v2892
      %v2894 = vpop.f32.mrb[0].mxu0
      %v2895 = vpop.f32.mrb[0].mxu0
      %v2896 = vadd.f32 0.0, %v2895
      %v2897 = vpop.f32.mrb[0].mxu0
      %2898 = vmatprep.mubr.bf16.mxu0 0
      %2899 = vmatmul.mubr.bf16.gmra.mrb[0].mxu0 %v2798
      %v2900 = vpop.f32.mrb[0].mxu0
      %v2901 = vadd.f32 0.0, %v2900
      %v2902 = vpop.f32.mrb[0].mxu0
      %v2903 = vpop.f32.mrb[0].mxu0
      %v2904 = vadd.f32 0.0, %v2903
      %v2905 = vpop.f32.mrb[0].mxu0
      %2906 = vmatprep.mubr.bf16.mxu0 0
      %2907 = vmatmul.mubr.bf16.gmra.mrb[0].mxu0 %v2801
      %v2908 = vpop.f32.mrb[0].mxu0
      %v2909 = vadd.f32 0.0, %v2908
      %v2910 = vpop.f32.mrb[0].mxu0
      %v2911 = vpop.f32.mrb[0].mxu0
      %v2912 = vadd.f32 0.0, %v2911
      %v2913 = vpop.f32.mrb[0].mxu0
      %2914 = vmatprep.mubr.bf16.mxu0 0
      %2915 = vmatmul.mubr.bf16.gmra.mrb[0].mxu0 %v2804
      %v2916 = vpop.f32.mrb[0].mxu0
      %v2917 = vadd.f32 0.0, %v2916
      %v2918 = vpop.f32.mrb[0].mxu0
      %v2919 = vpop.f32.mrb[0].mxu0
      %v2920 = vadd.f32 0.0, %v2919
      %v2921 = vpop.f32.mrb[0].mxu0
      %2922 = vmatprep.mubr.bf16.mxu0 0
      %2923 = vmatmul.mubr.bf16.gmra.mrb[0].mxu0 %v2807
      %v2924 = vpop.f32.mrb[0].mxu0
      %v2925 = vadd.f32 0.0, %v2924
      %v2926 = vpop.f32.mrb[0].mxu0
      %v2927 = vpop.f32.mrb[0].mxu0
      %v2928 = vadd.f32 0.0, %v2927
      %v2929 = vpop.f32.mrb[0].mxu0
      %2930 = vmatprep.mubr.bf16.mxu0 0
      %2931 = vmatmul.mubr.bf16.gmra.mrb[0].mxu0 %v2810
      %v2932 = vpop.f32.mrb[0].mxu0
      %v2933 = vadd.f32 0.0, %v2932
      %v2934 = vpop.f32.mrb[0].mxu0
      %v2935 = vpop.f32.mrb[0].mxu0
      %v2936 = vadd.f32 0.0, %v2935
      %v2937 = vpop.f32.mrb[0].mxu0
      %2938 = vmatprep.mubr.bf16.mxu0 0
      %2939 = vmatmul.mubr.bf16.gmra.mrb[0].mxu0 %v2813
      %v2940 = vpop.f32.mrb[0].mxu0
      %v2941 = vadd.f32 0.0, %v2940
      %v2942 = vpop.f32.mrb[0].mxu0
      %v2943 = vpop.f32.mrb[0].mxu0
      %v2944 = vadd.f32 0.0, %v2943
      %v2945 = vpop.f32.mrb[0].mxu0
      %2946 = vmatprep.mubr.bf16.mxu0 0
      %2947 = vmatmul.mubr.bf16.gmra.mrb[0].mxu0 %v2816
      %v2948 = vpop.f32.mrb[0].mxu0
      %v2949 = vadd.f32 0.0, %v2948
      %v2950 = vpop.f32.mrb[0].mxu0
      %v2951 = vpop.f32.mrb[0].mxu0
      %v2952 = vadd.f32 0.0, %v2951
      %v2953 = vpop.f32.mrb[0].mxu0
      %2954 = vmatprep.mubr.bf16.mxu0 0
      %2955 = vmatmul.mubr.bf16.gmra.mrb[0].mxu0 %v2819
      %v2956 = vpop.f32.mrb[0].mxu0
      %v2957 = vadd.f32 0.0, %v2956
      %v2958 = vpop.f32.mrb[0].mxu0
      %v2959 = vpop.f32.mrb[0].mxu0
      %v2960 = vadd.f32 0.0, %v2959
      %v2961 = vpop.f32.mrb[0].mxu0
      %2962 = vmatprep.mubr.bf16.mxu0 0
      %2963 = vmatmul.mubr.bf16.gmra.mrb[0].mxu0 %v2822
      %v2964 = vpop.f32.mrb[0].mxu0
      %v2965 = vadd.f32 0.0, %v2964
      %v2966 = vpop.f32.mrb[0].mxu0
      %v2967 = vpop.f32.mrb[0].mxu0
      %v2968 = vadd.f32 0.0, %v2967
      %v2969 = vpop.f32.mrb[0].mxu0
      %2970 = vmatprep.mubr.bf16.mxu0 0
      %2971 = vmatmul.mubr.bf16.gmra.mrb[0].mxu0 %v2825
      %v2972 = vpop.f32.mrb[0].mxu0
      %v2973 = vadd.f32 0.0, %v2972
      %v2974 = vpop.f32.mrb[0].mxu0
      %v2975 = vpop.f32.mrb[0].mxu0
      %v2976 = vadd.f32 0.0, %v2975
      %v2977 = vpop.f32.mrb[0].mxu0
      %2978 = vmatprep.mubr.bf16.mxu0 0
      %2979 = vmatmul.mubr.bf16.gmra.mrb[0].mxu0 %v2828
      %v2980 = vpop.f32.mrb[0].mxu0
      %v2981 = vadd.f32 0.0, %v2980
      %v2982 = vpop.f32.mrb[0].mxu0
      %v2983 = vpop.f32.mrb[0].mxu0
      %v2984 = vadd.f32 0.0, %v2983
      %v2985 = vpop.f32.mrb[0].mxu0
      %2986 = vmatprep.mubr.bf16.mxu0 0
      %2987 = vmatmul.mubr.bf16.gmra.mrb[0].mxu0 %v2831
      %v2988 = vpop.f32.mrb[0].mxu0
      %v2989 = vadd.f32 0.0, %v2988
      %v2990 = vpop.f32.mrb[0].mxu0
      %v2991 = vpop.f32.mrb[0].mxu0
      %v2992 = vadd.f32 0.0, %v2991
      %v2993 = vpop.f32.mrb[0].mxu0
      %2994 = vmatprep.mubr.bf16.mxu0 0
      %2995 = vmatmul.mubr.bf16.gmra.mrb[0].mxu0 %v2834
      %v2996 = vpop.f32.mrb[0].mxu0
      %v2997 = vadd.f32 0.0, %v2996
      %v2998 = vpop.f32.mrb[0].mxu0
      %v2999 = vpop.f32.mrb[0].mxu0
      %v3000 = vadd.f32 0.0, %v2999
      %v3001 = vpop.f32.mrb[0].mxu0
      %3002 = vmatprep.mubr.bf16.mxu0 0
      %3003 = vmatmul.mubr.bf16.gmra.mrb[0].mxu0 %v2837
      %v3004 = vpop.f32.mrb[0].mxu0
      %v3005 = vadd.f32 0.0, %v3004
      %v3006 = vpop.f32.mrb[0].mxu0
      %v3007 = vpop.f32.mrb[0].mxu0
      %v3008 = vadd.f32 0.0, %v3007
      %v3009 = vpop.f32.mrb[0].mxu0
      %3010 = vdwg.mxu0
      %v3011 = vadd.f32 %v2716, %v2877
      %v3012 = vadd.f32 %v2717, %v2880
      %v3013 = vadd.f32 %v2718, %v2885
      %v3014 = vadd.f32 %v2719, %v2888
      %v3015 = vadd.f32 %v2720, %v2893
      %v3016 = vadd.f32 %v2721, %v2896
      %v3017 = vadd.f32 %v2722, %v2901
      %v3018 = vadd.f32 %v2723, %v2904
      %v3019 = vadd.f32 %v2724, %v2909
      %v3020 = vadd.f32 %v2725, %v2912
      %v3021 = vadd.f32 %v2726, %v2917
      %v3022 = vadd.f32 %v2727, %v2920
      %v3023 = vadd.f32 %v2728, %v2925
      %v3024 = vadd.f32 %v2729, %v2928
      %v3025 = vadd.f32 %v2730, %v2933
      %v3026 = vadd.f32 %v2731, %v2936
      %v3027 = vadd.f32 %v2732, %v2941
      %v3028 = vadd.f32 %v2733, %v2944
      %v3029 = vadd.f32 %v2734, %v2949
      %v3030 = vadd.f32 %v2735, %v2952
      %v3031 = vadd.f32 %v2736, %v2957
      %v3032 = vadd.f32 %v2737, %v2960
      %v3033 = vadd.f32 %v2738, %v2965
      %v3034 = vadd.f32 %v2739, %v2968
      %v3035 = vadd.f32 %v2740, %v2973
      %v3036 = vadd.f32 %v2741, %v2976
      %v3037 = vadd.f32 %v2742, %v2981
      %v3038 = vadd.f32 %v2743, %v2984
      %v3039 = vadd.f32 %v2744, %v2989
      %v3040 = vadd.f32 %v2745, %v2992
      %v3041 = vadd.f32 %v2746, %v2997
      %v3042 = vadd.f32 %v2747, %v3000
      %v3043 = vadd.f32 %v2748, %v3005
      %v3044 = vadd.f32 %v2749, %v3008
      %v3045 = vld [vmem:[%s3] sm:$0x1]
      %v3047 = vlaneseq
      %v3048 = vshrl.u32 %v3047, 7
      %v3049 = vsub.s32 0, %v3048
      %v3050 = vrot.slane %v3045, %v3049
      %v3052 = vmul.f32 %v3011, %v3050
      %v3053 = vmul.f32 %v3012, %v3050
      %v3054 = vmul.f32 %v3013, %v3050
      %v3055 = vmul.f32 %v3014, %v3050
      %v3056 = vmul.f32 %v3015, %v3050
      %v3057 = vmul.f32 %v3016, %v3050
      %v3058 = vmul.f32 %v3017, %v3050
      %v3059 = vmul.f32 %v3018, %v3050
      %v3060 = vmul.f32 %v3019, %v3050
      %v3061 = vmul.f32 %v3020, %v3050
      %v3062 = vmul.f32 %v3021, %v3050
      %v3063 = vmul.f32 %v3022, %v3050
      %v3064 = vmul.f32 %v3023, %v3050
      %v3065 = vmul.f32 %v3024, %v3050
      %v3066 = vmul.f32 %v3025, %v3050
      %v3067 = vmul.f32 %v3026, %v3050
      %v3068 = vmul.f32 %v3027, %v3050
      %v3069 = vmul.f32 %v3028, %v3050
      %v3070 = vmul.f32 %v3029, %v3050
      %v3071 = vmul.f32 %v3030, %v3050
      %v3072 = vmul.f32 %v3031, %v3050
      %v3073 = vmul.f32 %v3032, %v3050
      %v3074 = vmul.f32 %v3033, %v3050
      %v3075 = vmul.f32 %v3034, %v3050
      %v3076 = vmul.f32 %v3035, %v3050
      %v3077 = vmul.f32 %v3036, %v3050
      %v3078 = vmul.f32 %v3037, %v3050
      %v3079 = vmul.f32 %v3038, %v3050
      %v3080 = vmul.f32 %v3039, %v3050
      %v3081 = vmul.f32 %v3040, %v3050
      %v3082 = vmul.f32 %v3041, %v3050
      %v3083 = vmul.f32 %v3042, %v3050
      %v3084 = vmul.f32 %v3043, %v3050
      %v3085 = vmul.f32 %v3044, %v3050
      %v3086 = vld [vmem:[%s4] sm:$0x1]
      %v3088 = vlaneseq
      %v3089 = vshrl.u32 %v3088, 7
      %v3090 = vsub.s32 0, %v3089
      %v3091 = vrot.slane %v3086, %v3090
      %v3093 = vadd.f32 %v3052, %v3091
      %v3094 = vadd.f32 %v3053, %v3091
      %v3095 = vadd.f32 %v3054, %v3091
      %v3096 = vadd.f32 %v3055, %v3091
      %v3097 = vadd.f32 %v3056, %v3091
      %v3098 = vadd.f32 %v3057, %v3091
      %v3099 = vadd.f32 %v3058, %v3091
      %v3100 = vadd.f32 %v3059, %v3091
      %v3101 = vadd.f32 %v3060, %v3091
      %v3102 = vadd.f32 %v3061, %v3091
      %v3103 = vadd.f32 %v3062, %v3091
      %v3104 = vadd.f32 %v3063, %v3091
      %v3105 = vadd.f32 %v3064, %v3091
      %v3106 = vadd.f32 %v3065, %v3091
      %v3107 = vadd.f32 %v3066, %v3091
      %v3108 = vadd.f32 %v3067, %v3091
      %v3109 = vadd.f32 %v3068, %v3091
      %v3110 = vadd.f32 %v3069, %v3091
      %v3111 = vadd.f32 %v3070, %v3091
      %v3112 = vadd.f32 %v3071, %v3091
      %v3113 = vadd.f32 %v3072, %v3091
      %v3114 = vadd.f32 %v3073, %v3091
      %v3115 = vadd.f32 %v3074, %v3091
      %v3116 = vadd.f32 %v3075, %v3091
      %v3117 = vadd.f32 %v3076, %v3091
      %v3118 = vadd.f32 %v3077, %v3091
      %v3119 = vadd.f32 %v3078, %v3091
      %v3120 = vadd.f32 %v3079, %v3091
      %v3121 = vadd.f32 %v3080, %v3091
      %v3122 = vadd.f32 %v3081, %v3091
      %v3123 = vadd.f32 %v3082, %v3091
      %v3124 = vadd.f32 %v3083, %v3091
      %v3125 = vadd.f32 %v3084, %v3091
      %v3126 = vadd.f32 %v3085, %v3091
      %v3127 = vmax.f32 %v3093, 0.0
      %v3128 = vmax.f32 %v3094, 0.0
      %v3129 = vmax.f32 %v3095, 0.0
      %v3130 = vmax.f32 %v3096, 0.0
      %v3131 = vmax.f32 %v3097, 0.0
      %v3132 = vmax.f32 %v3098, 0.0
      %v3133 = vmax.f32 %v3099, 0.0
      %v3134 = vmax.f32 %v3100, 0.0
      %v3135 = vmax.f32 %v3101, 0.0
      %v3136 = vmax.f32 %v3102, 0.0
      %v3137 = vmax.f32 %v3103, 0.0
      %v3138 = vmax.f32 %v3104, 0.0
      %v3139 = vmax.f32 %v3105, 0.0
      %v3140 = vmax.f32 %v3106, 0.0
      %v3141 = vmax.f32 %v3107, 0.0
      %v3142 = vmax.f32 %v3108, 0.0
      %v3143 = vmax.f32 %v3109, 0.0
      %v3144 = vmax.f32 %v3110, 0.0
      %v3145 = vmax.f32 %v3111, 0.0
      %v3146 = vmax.f32 %v3112, 0.0
      %v3147 = vmax.f32 %v3113, 0.0
      %v3148 = vmax.f32 %v3114, 0.0
      %v3149 = vmax.f32 %v3115, 0.0
      %v3150 = vmax.f32 %v3116, 0.0
      %v3151 = vmax.f32 %v3117, 0.0
      %v3152 = vmax.f32 %v3118, 0.0
      %v3153 = vmax.f32 %v3119, 0.0
      %v3154 = vmax.f32 %v3120, 0.0
      %v3155 = vmax.f32 %v3121, 0.0
      %v3156 = vmax.f32 %v3122, 0.0
      %v3157 = vmax.f32 %v3123, 0.0
      %v3158 = vmax.f32 %v3124, 0.0
      %v3159 = vmax.f32 %v3125, 0.0
      %v3160 = vmax.f32 %v3126, 0.0
      %v3161 = vpack.c.bf16 %v3128, %v3127
      %v3162 = vpack.c.bf16 %v3130, %v3129
      %v3163 = vpack.c.bf16 %v3132, %v3131
      %v3164 = vpack.c.bf16 %v3134, %v3133
      %v3165 = vpack.c.bf16 %v3136, %v3135
      %v3166 = vpack.c.bf16 %v3138, %v3137
      %v3167 = vpack.c.bf16 %v3140, %v3139
      %v3168 = vpack.c.bf16 %v3142, %v3141
      %v3169 = vpack.c.bf16 %v3144, %v3143
      %v3170 = vpack.c.bf16 %v3146, %v3145
      %v3171 = vpack.c.bf16 %v3148, %v3147
      %v3172 = vpack.c.bf16 %v3150, %v3149
      %v3173 = vpack.c.bf16 %v3152, %v3151
      %v3174 = vpack.c.bf16 %v3154, %v3153
      %v3175 = vpack.c.bf16 %v3156, %v3155
      %v3176 = vpack.c.bf16 %v3158, %v3157
      %v3177 = vpack.c.bf16 %v3160, %v3159
      %v3195 = vunpack.c.l.b16 %v3161
      %v3196 = vunpack.c.h.b16 %v3161
      %v3197 = vunpack.c.l.b16 %v3162
      %v3198 = vunpack.c.h.b16 %v3162
      %v3199 = vunpack.c.l.b16 %v3163
      %v3200 = vunpack.c.h.b16 %v3163
      %v3201 = vunpack.c.l.b16 %v3164
      %v3202 = vunpack.c.h.b16 %v3164
      %v3203 = vunpack.c.l.b16 %v3165
      %v3204 = vunpack.c.h.b16 %v3165
      %v3205 = vunpack.c.l.b16 %v3166
      %v3206 = vunpack.c.h.b16 %v3166
      %v3207 = vunpack.c.l.b16 %v3167
      %v3208 = vunpack.c.h.b16 %v3167
      %v3209 = vunpack.c.l.b16 %v3168
      %v3210 = vunpack.c.h.b16 %v3168
      %v3211 = vunpack.c.l.b16 %v3169
      %v3212 = vunpack.c.h.b16 %v3169
      %v3213 = vunpack.c.l.b16 %v3170
      %v3214 = vunpack.c.h.b16 %v3170
      %v3215 = vunpack.c.l.b16 %v3171
      %v3216 = vunpack.c.h.b16 %v3171
      %v3217 = vunpack.c.l.b16 %v3172
      %v3218 = vunpack.c.h.b16 %v3172
      %v3219 = vunpack.c.l.b16 %v3173
      %v3220 = vunpack.c.h.b16 %v3173
      %v3221 = vunpack.c.l.b16 %v3174
      %v3222 = vunpack.c.h.b16 %v3174
      %v3223 = vunpack.c.l.b16 %v3175
      %v3224 = vunpack.c.h.b16 %v3175
      %v3225 = vunpack.c.l.b16 %v3176
      %v3226 = vunpack.c.h.b16 %v3176
      %v3227 = vunpack.c.l.b16 %v3177
      %v3228 = vunpack.c.h.b16 %v3177
      %v3229 = vpack.c.b16 %v3195, %v3195
      %v3230 = vpack.c.b16 %v3196, %v3196
      %v3231 = vpack.c.b16 %v3197, %v3197
      %v3232 = vpack.c.b16 %v3198, %v3198
      %v3233 = vpack.c.b16 %v3199, %v3199
      %v3234 = vpack.c.b16 %v3200, %v3200
      %v3235 = vpack.c.b16 %v3201, %v3201
      %v3236 = vpack.c.b16 %v3202, %v3202
      %v3237 = vpack.c.b16 %v3203, %v3203
      %v3238 = vpack.c.b16 %v3204, %v3204
      %v3239 = vpack.c.b16 %v3205, %v3205
      %v3240 = vpack.c.b16 %v3206, %v3206
      %v3241 = vpack.c.b16 %v3207, %v3207
      %v3242 = vpack.c.b16 %v3208, %v3208
      %v3243 = vpack.c.b16 %v3209, %v3209
      %v3244 = vpack.c.b16 %v3210, %v3210
      %v3245 = vpack.c.b16 %v3211, %v3211
      %v3246 = vpack.c.b16 %v3212, %v3212
      %v3247 = vpack.c.b16 %v3213, %v3213
      %v3248 = vpack.c.b16 %v3214, %v3214
      %v3249 = vpack.c.b16 %v3215, %v3215
      %v3250 = vpack.c.b16 %v3216, %v3216
      %v3251 = vpack.c.b16 %v3217, %v3217
      %v3252 = vpack.c.b16 %v3218, %v3218
      %v3253 = vpack.c.b16 %v3219, %v3219
      %v3254 = vpack.c.b16 %v3220, %v3220
      %v3255 = vpack.c.b16 %v3221, %v3221
      %v3256 = vpack.c.b16 %v3222, %v3222
      %v3257 = vpack.c.b16 %v3223, %v3223
      %v3258 = vpack.c.b16 %v3224, %v3224
      %v3259 = vpack.c.b16 %v3225, %v3225
      %v3260 = vpack.c.b16 %v3226, %v3226
      %v3261 = vpack.c.b16 %v3227, %v3227
      %v3262 = vpack.c.b16 %v3228, %v3228
      %vm3297 = vcmask 519168
      %3298 = vst.msk [vmem:[%s305] sm:$0xf] %vm3297, %v3229
      %3299 = vst.msk [vmem:[%s305 + $0x4] sm:$0xf] %vm3297, %v3230
      %3300 = vst.msk [vmem:[%s305 + $0x8] sm:$0xf] %vm3297, %v3231
      %3301 = vst.msk [vmem:[%s305 + $0xc] sm:$0xf] %vm3297, %v3232
      %3302 = vst.msk [vmem:[%s305 + $0x10] sm:$0xf] %vm3297, %v3233
      %3303 = vst.msk [vmem:[%s305 + $0x14] sm:$0xf] %vm3297, %v3234
      %3304 = vst.msk [vmem:[%s305 + $0x18] sm:$0xf] %vm3297, %v3235
      %3305 = vst.msk [vmem:[%s305 + $0x1c] sm:$0xf] %vm3297, %v3236
      %3306 = vst.msk [vmem:[%s305 + $0x20] sm:$0xf] %vm3297, %v3237
      %3307 = vst.msk [vmem:[%s305 + $0x24] sm:$0xf] %vm3297, %v3238
      %3308 = vst.msk [vmem:[%s305 + $0x28] sm:$0xf] %vm3297, %v3239
      %3309 = vst.msk [vmem:[%s305 + $0x2c] sm:$0xf] %vm3297, %v3240
      %3310 = vst.msk [vmem:[%s305 + $0x30] sm:$0xf] %vm3297, %v3241
      %3311 = vst.msk [vmem:[%s305 + $0x34] sm:$0xf] %vm3297, %v3242
      %3312 = vst.msk [vmem:[%s305 + $0x38] sm:$0xf] %vm3297, %v3243
      %3313 = vst.msk [vmem:[%s305 + $0x3c] sm:$0xf] %vm3297, %v3244
      %3314 = vst.msk [vmem:[%s305 + $0x40] sm:$0xf] %vm3297, %v3245
      %3315 = vst.msk [vmem:[%s305 + $0x44] sm:$0xf] %vm3297, %v3246
      %3316 = vst.msk [vmem:[%s305 + $0x48] sm:$0xf] %vm3297, %v3247
      %3317 = vst.msk [vmem:[%s305 + $0x4c] sm:$0xf] %vm3297, %v3248
      %3318 = vst.msk [vmem:[%s305 + $0x50] sm:$0xf] %vm3297, %v3249
      %3319 = vst.msk [vmem:[%s305 + $0x54] sm:$0xf] %vm3297, %v3250
      %3320 = vst.msk [vmem:[%s305 + $0x58] sm:$0xf] %vm3297, %v3251
      %3321 = vst.msk [vmem:[%s305 + $0x5c] sm:$0xf] %vm3297, %v3252
      %3322 = vst.msk [vmem:[%s305 + $0x60] sm:$0xf] %vm3297, %v3253
      %3323 = vst.msk [vmem:[%s305 + $0x64] sm:$0xf] %vm3297, %v3254
      %3324 = vst.msk [vmem:[%s305 + $0x68] sm:$0xf] %vm3297, %v3255
      %3325 = vst.msk [vmem:[%s305 + $0x6c] sm:$0xf] %vm3297, %v3256
      %3326 = vst.msk [vmem:[%s305 + $0x70] sm:$0xf] %vm3297, %v3257
      %3327 = vst.msk [vmem:[%s305 + $0x74] sm:$0xf] %vm3297, %v3258
      %3328 = vst.msk [vmem:[%s305 + $0x78] sm:$0xf] %vm3297, %v3259
      %3329 = vst.msk [vmem:[%s305 + $0x7c] sm:$0xf] %vm3297, %v3260
      %3330 = vst.msk [vmem:[%s305 + $0x80] sm:$0xf] %vm3297, %v3261
      %3331 = vst.msk [vmem:[%s305 + $0x84] sm:$0xf] %vm3297, %v3262
      %s3332 = smul.u32 34, %s21
      %p3333 = scmp.lt.s32.totalorder %s20, 1
      %s3334 = scalar_select %p3333, %s20, 1
      %p3335 = scmp.lt.s32.totalorder %s3332, 135
      %s3336 = scalar_select %p3335, %s3332, 135
      %s3337 = smul.addr %s3334, 136
      %s3338 = sadd.s32 %s3336, %s3337
      %s3339 = smul.addr %s3338, 4
      %s3340 = scalar_lea.vmem %s5, %s3339
      // Predicated region
      $region41: #{tpu_custom_call.1} parent=39 // pred_check
        %p3341 = pneg %p169
      $region42: #{tpu_custom_call.1} parent=39 // pred_check_branch
        %3343 = sbr.rel (%p3341) target = $region44
      $region43: #{tpu_custom_call.1} parent=39 // pred_region
        %s3344 = smul.u32 34, %s21
      $region44: #{tpu_custom_call.1} parent=39 // pred_fallthru
        _
    $region40: #{tpu_custom_call.1} parent=5 // pred_fallthru
      _
    %p3345 = scmp.le.s32.totalorder 2, %s11
    // Predicated region
    $region45: #{tpu_custom_call.1} parent=5 // pred_check
      %p3346 = pneg %p3345
    $region46: #{tpu_custom_call.1} parent=5 // pred_check_branch
      %3348 = sbr.rel (%p3346) target = $region48
    $region47: #{tpu_custom_call.1} parent=5 // pred_region
      %s3349 = ssub.s32 %s11, 2
      // Predicated region
      $region49: #{tpu_custom_call.1} parent=47 // pred_check
        %p3350 = pneg %p175
      $region50: #{tpu_custom_call.1} parent=47 // pred_check_branch
        %3352 = sbr.rel (%p3350) target = $region52
      $region51: #{tpu_custom_call.1} parent=47 // pred_region
        %s3353 = smul.u32 34, %s23
        %p3354 = scmp.lt.s32.totalorder %s22, 1
        %s3355 = scalar_select %p3354, %s22, 1
        %p3356 = scmp.lt.s32.totalorder %s3353, 135
        %s3357 = scalar_select %p3356, %s3353, 135
        %s3358 = smul.addr %s3355, 136
        %s3359 = sadd.s32 %s3357, %s3358
        %s3360 = smul.addr %s3359, 4
        %s3361 = scalar_lea.vmem %s5, %s3360
      $region52: #{tpu_custom_call.1} parent=47 // pred_fallthru
        _
    $region48: #{tpu_custom_call.1} parent=5 // pred_fallthru
      _
  $region6: #{tpu_custom_call.1} parent=0 // loop_footer
    %s15 = sadd.s32 1, %s11
  $region7: #{tpu_custom_call.1} parent=0 // loop_footer_branch
    %10 = sbr.rel target = $region3
  $region8: #{tpu_custom_call.1} parent=0 // loop_exit
    _

</llo_original>
